<compile_context>
chip_gen: v5e
topology: v5e:2x2
jax: 0.10.0
libtpu: 0.0.40
codegen_flags: <defaults>
</compile_context>

<pallas_src>
import functools

import jax
import jax.numpy as jnp
from jax.experimental import pallas as pl
from jax.experimental.pallas import tpu as pltpu

MAX_PART_NUM = 40


def _cross_attention_kernel(x_ref, wq_ref, wk_ref, wv_ref, wp_ref, bp_ref,
                            o_ref, *, num_heads):
    # x_ref:  (bb, N, C)   batch block of the input
    # wq_ref: (H, C, D)    per-head Wq.T slabs, softmax scale pre-folded
    # wk_ref: (H, C, D)    per-head Wk.T slabs
    # wv_ref: (H, C, D)    per-head Wv.T slabs
    # wp_ref: (H, D, C)    per-head rows of Wp.T
    # bp_ref: (1, C)       projection bias (f32)
    # o_ref:  (bb, M, C)   output block, M = MAX_PART_NUM
    bb, N, C = x_ref.shape
    M = o_ref.shape[1]
    H = num_heads
    D = C // H
    cdt = wq_ref.dtype            # MXU operand dtype (bf16 by default)

    x = x_ref[...].astype(cdt)    # (bb, N, C)
    # N is sublane-aligned (or bb == 1), so this merge is a free reshape.
    x2 = x.reshape(bb * N, C)

    acc = jnp.zeros((bb, M, C), jnp.float32)   # register/VMEM value, no scratch

    for h in range(H):
        # Per-head projections straight from (C, D) weight slabs: the head
        # split lives in the weights, so q/k/v never need 8-lane slices of a
        # C-wide tensor (no XLU rotates / relayouts per head).
        q_h = jnp.dot(x2, wq_ref[h], preferred_element_type=jnp.float32)
        k_h = jnp.dot(x2, wk_ref[h], preferred_element_type=jnp.float32)
        v_h = jnp.dot(x2, wv_ref[h], preferred_element_type=jnp.float32)
        q3 = q_h.reshape(bb, N, D)[:, :M, :]     # (bb, M, D), scale pre-folded
        k3 = k_h.reshape(bb, N, D)               # (bb, N, D)
        v3 = v_h.reshape(bb, N, D)               # (bb, N, D)

        s = jnp.einsum('bqd,bkd->bqk', q3.astype(cdt), k3.astype(cdt),
                       preferred_element_type=jnp.float32)        # (bb, M, N)
        s = s - jnp.max(s, axis=-1, keepdims=True)
        p = jnp.exp(s)
        p = p / jnp.sum(p, axis=-1, keepdims=True)   # exact softmax; attn_drop = id
        o_h = jnp.einsum('bqk,bkd->bqd', p.astype(cdt), v3.astype(cdt),
                         preferred_element_type=jnp.float32)      # (bb, M, D)

        # Output projection decomposed over heads:
        #   concat_h(o_h) @ Wp.T == sum_h o_h @ Wp.T[h*D:(h+1)*D, :]
        # so head outputs are never assembled along lanes: no o_acc scratch,
        # no masked 8-lane stores -- just a full-width accumulate.
        wp_h = jnp.broadcast_to(wp_ref[h].astype(cdt), (bb, D, C))
        acc = acc + jnp.einsum('bqd,bdc->bqc', o_h.astype(cdt), wp_h,
                               preferred_element_type=jnp.float32)

    # proj bias; proj_drop is identity (p=0.0)
    o_ref[...] = (acc + bp_ref[...]).astype(o_ref.dtype)


def cross_attention(x, wq, wk, wv, wp, bp, *, num_heads=8, qk_scale=None,
                    block_b=None, compute_dtype=jnp.bfloat16):
    """x: (B, N, C) float32, N >= MAX_PART_NUM. Returns (B, MAX_PART_NUM, C).

    block_b: batch rows per grid step. The default gives >= 2 grid steps
    (DMA/compute overlap, both v7x TensorCores busy) while capping the x block
    at ~2 MiB so double-buffered blocks fit v5e's 16 MiB scoped-VMEM default
    and v7x's 64 MiB physical VMEM. compute_dtype: MXU operand dtype
    (bf16 default; f32 accumulation either way).

    Note: at tiny B the fixed pallas_call overhead dominates -- batch many
    attention instances into one call when deploying at these shapes.
    """
    B, N, C = x.shape
    assert N >= MAX_PART_NUM
    assert C % num_heads == 0
    H = num_heads
    D = C // H
    scale = qk_scale if qk_scale is not None else D ** (-0.5)

    if block_b is None:
        if B == 1 or N % 8 != 0:
            block_b = 1
        else:
            cap = max(1, (2 << 20) // (N * C * x.dtype.itemsize))
            block_b = 1
            for cand in range(min(B // 2, cap), 0, -1):
                if B % cand == 0:
                    block_b = cand
                    break
    assert B % block_b == 0
    # (bb*N, C) flatten inside the kernel needs sublane-aligned N when bb > 1.
    assert block_b == 1 or N % 8 == 0
    nb = B // block_b

    # One-time wrapper-side weight prep: pre-transpose, fold the softmax scale
    # into Wq, split per head, and pre-cast MXU operands to compute_dtype.
    wq_heads = (wq.T * scale).reshape(C, H, D).transpose(1, 0, 2).astype(compute_dtype)
    wk_heads = wk.T.reshape(C, H, D).transpose(1, 0, 2).astype(compute_dtype)
    wv_heads = wv.T.reshape(C, H, D).transpose(1, 0, 2).astype(compute_dtype)
    wp_heads = wp.T.reshape(H, D, C).astype(compute_dtype)
    bp2 = bp.reshape(1, C).astype(jnp.float32)

    kernel = functools.partial(_cross_attention_kernel, num_heads=num_heads)

    w_item = jnp.dtype(compute_dtype).itemsize
    cost = pl.CostEstimate(
        flops=(6 * B * N * C * C                      # q/k/v projections
               + 4 * B * MAX_PART_NUM * N * C         # scores + PV (all heads)
               + 2 * B * MAX_PART_NUM * C * C),       # output projection
        transcendentals=B * H * MAX_PART_NUM * N,     # softmax exp
        bytes_accessed=(B * N * C * x.dtype.itemsize
                        + B * MAX_PART_NUM * C * x.dtype.itemsize
                        + 4 * C * C * w_item + C * 4),
    )

    return pl.pallas_call(
        kernel,
        out_shape=jax.ShapeDtypeStruct((B, MAX_PART_NUM, C), x.dtype),
        grid_spec=pltpu.PrefetchScalarGridSpec(
            num_scalar_prefetch=0,
            grid=(nb,),
            in_specs=[
                pl.BlockSpec((block_b, N, C), lambda i: (i, 0, 0)),   # x
                pl.BlockSpec((H, C, D), lambda i: (0, 0, 0)),         # Wq (scaled)
                pl.BlockSpec((H, C, D), lambda i: (0, 0, 0)),         # Wk
                pl.BlockSpec((H, C, D), lambda i: (0, 0, 0)),         # Wv
                pl.BlockSpec((H, D, C), lambda i: (0, 0, 0)),         # Wp
                pl.BlockSpec((1, C), lambda i: (0, 0)),               # bias
            ],
            out_specs=pl.BlockSpec((block_b, MAX_PART_NUM, C),
                                   lambda i: (i, 0, 0)),
        ),
        compiler_params=pltpu.CompilerParams(
            dimension_semantics=("parallel",),
            vmem_limit_bytes=32 * 1024 * 1024),
        cost_estimate=cost,
    )(x, wq_heads, wk_heads, wv_heads, wp_heads, bp2)


def _reference(x, wq, wk, wv, wp, bp, *, num_heads=8, qk_scale=None):
    B, N, C = x.shape
    D = C // num_heads
    scale = qk_scale if qk_scale is not None else D ** (-0.5)
    hp = jax.lax.Precision.HIGHEST
    q = jnp.matmul(x[:, :MAX_PART_NUM], wq.T, precision=hp).reshape(
        B, MAX_PART_NUM, num_heads, D).transpose(0, 2, 1, 3)
    k = jnp.matmul(x, wk.T, precision=hp).reshape(
        B, N, num_heads, D).transpose(0, 2, 1, 3)
    v = jnp.matmul(x, wv.T, precision=hp).reshape(
        B, N, num_heads, D).transpose(0, 2, 1, 3)
    attn = jnp.einsum("bhqd,bhkd->bhqk", q, k, precision=hp) * scale
    attn = jax.nn.softmax(attn, axis=-1)
    o = jnp.einsum("bhqk,bhkd->bhqd", attn, v, precision=hp).transpose(
        0, 2, 1, 3).reshape(B, MAX_PART_NUM, C)
    return jnp.matmul(o, wp.T, precision=hp) + bp


if __name__ == "__main__":
    B, N, C = 2, 48, 64          # N >= MAX_PART_NUM(=40); C divisible by num_heads
    num_heads = 8

    key = jax.random.PRNGKey(0)
    kx, kq, kk, kv, kp, kb = jax.random.split(key, 6)
    x = jax.random.normal(kx, (B, N, C), dtype=jnp.float32)
    # Deterministic synthetic parameters (wq/wk/wv have no bias: qkv_bias=False)
    wq = jax.random.normal(kq, (C, C), dtype=jnp.float32) * 0.05
    wk = jax.random.normal(kk, (C, C), dtype=jnp.float32) * 0.05
    wv = jax.random.normal(kv, (C, C), dtype=jnp.float32) * 0.05
    wp = jax.random.normal(kp, (C, C), dtype=jnp.float32) * 0.05
    bp = jax.random.normal(kb, (C,), dtype=jnp.float32) * 0.01

    ref = _reference(x, wq, wk, wv, wp, bp, num_heads=num_heads)

    # Default optimized path: bf16 MXU operands, f32 accumulation.
    out = cross_attention(x, wq, wk, wv, wp, bp, num_heads=num_heads)
    out = jax.block_until_ready(out)
    assert out.shape == (B, MAX_PART_NUM, C)
    assert jnp.allclose(out, ref, atol=5e-3, rtol=5e-3)

    # Strict-parity path: f32 MXU operands (same kernel, casts become no-ops).
    out_f32 = cross_attention(x, wq, wk, wv, wp, bp, num_heads=num_heads,
                              compute_dtype=jnp.float32)
    out_f32 = jax.block_until_ready(out_f32)
    assert jnp.allclose(out_f32, ref, atol=2e-3, rtol=2e-3)

    print("KERNEL_OK")
</pallas_src>

<mosaic_0001>
module attributes {stable_mosaic.version = 11 : i64} {
  func.func @_cross_attention_kernel(%arg0: i32, %arg1: memref<1x48x64xf32, #tpu.memory_space<vmem>>, %arg2: memref<8x64x8xbf16, #tpu.memory_space<vmem>>, %arg3: memref<8x64x8xbf16, #tpu.memory_space<vmem>>, %arg4: memref<8x64x8xbf16, #tpu.memory_space<vmem>>, %arg5: memref<8x8x64xbf16, #tpu.memory_space<vmem>>, %arg6: memref<1x64xf32, #tpu.memory_space<vmem>>, %arg7: memref<1x40x64xf32, #tpu.memory_space<vmem>>) attributes {dimension_semantics = [#tpu.dimension_semantics<parallel>], iteration_bounds = array<i64: 2>, scalar_prefetch = 0 : i64, scratch_operands = 0 : i64, tpu.core_type = #tpu.core_type<tc>, window_params = [{transform_indices = @transform_0, window_bounds = array<i64: 1, 48, 64>}, {pipeline_mode = #tpu.pipeline_mode<synchronous>, transform_indices = @transform_1, window_bounds = array<i64: 8, 64, 8>}, {pipeline_mode = #tpu.pipeline_mode<synchronous>, transform_indices = @transform_2, window_bounds = array<i64: 8, 64, 8>}, {pipeline_mode = #tpu.pipeline_mode<synchronous>, transform_indices = @transform_3, window_bounds = array<i64: 8, 64, 8>}, {pipeline_mode = #tpu.pipeline_mode<synchronous>, transform_indices = @transform_4, window_bounds = array<i64: 8, 8, 64>}, {pipeline_mode = #tpu.pipeline_mode<synchronous>, transform_indices = @transform_5, window_bounds = array<i64: 1, 64>}, {transform_indices = @transform_6, window_bounds = array<i64: 1, 40, 64>}]} {
    %c0 = arith.constant 0 : index
    %c0_0 = arith.constant 0 : index
    %c0_1 = arith.constant 0 : index
    %0 = vector.load %arg1[%c0, %c0_0, %c0_1] : memref<1x48x64xf32, #tpu.memory_space<vmem>>, vector<1x48x64xf32>
    %1 = arith.truncf %0 : vector<1x48x64xf32> to vector<1x48x64xbf16>
    %2 = vector.shape_cast %1 : vector<1x48x64xbf16> to vector<48x64xbf16>
    %cst = arith.constant 0.000000e+00 : f32
    %3 = vector.broadcast %cst : f32 to vector<1x40x64xf32>
    %c0_2 = arith.constant 0 : index
    %c0_3 = arith.constant 0 : index
    %c0_4 = arith.constant 0 : index
    %4 = vector.load %arg2[%c0_2, %c0_3, %c0_4] : memref<8x64x8xbf16, #tpu.memory_space<vmem>>, vector<1x64x8xbf16>
    %5 = vector.shape_cast %4 : vector<1x64x8xbf16> to vector<64x8xbf16>
    %cst_5 = arith.constant dense<0.000000e+00> : vector<48x8xf32>
    %6 = tpu.matmul %2, %5, %cst_5 {dimension_numbers = #tpu.dot_dimension_numbers<[1], [0], [0], [1], [0, 0, 1, 1], [], []>} : vector<48x64xbf16>, vector<64x8xbf16>, vector<48x8xf32> -> vector<48x8xf32>
    %c0_6 = arith.constant 0 : index
    %c0_7 = arith.constant 0 : index
    %c0_8 = arith.constant 0 : index
    %7 = vector.load %arg3[%c0_6, %c0_7, %c0_8] : memref<8x64x8xbf16, #tpu.memory_space<vmem>>, vector<1x64x8xbf16>
    %8 = vector.shape_cast %7 : vector<1x64x8xbf16> to vector<64x8xbf16>
    %cst_9 = arith.constant dense<0.000000e+00> : vector<48x8xf32>
    %9 = tpu.matmul %2, %8, %cst_9 {dimension_numbers = #tpu.dot_dimension_numbers<[1], [0], [0], [1], [0, 0, 1, 1], [], []>} : vector<48x64xbf16>, vector<64x8xbf16>, vector<48x8xf32> -> vector<48x8xf32>
    %c0_10 = arith.constant 0 : index
    %c0_11 = arith.constant 0 : index
    %c0_12 = arith.constant 0 : index
    %10 = vector.load %arg4[%c0_10, %c0_11, %c0_12] : memref<8x64x8xbf16, #tpu.memory_space<vmem>>, vector<1x64x8xbf16>
    %11 = vector.shape_cast %10 : vector<1x64x8xbf16> to vector<64x8xbf16>
    %cst_13 = arith.constant dense<0.000000e+00> : vector<48x8xf32>
    %12 = tpu.matmul %2, %11, %cst_13 {dimension_numbers = #tpu.dot_dimension_numbers<[1], [0], [0], [1], [0, 0, 1, 1], [], []>} : vector<48x64xbf16>, vector<64x8xbf16>, vector<48x8xf32> -> vector<48x8xf32>
    %13 = vector.shape_cast %6 : vector<48x8xf32> to vector<1x48x8xf32>
    %14 = vector.extract_strided_slice %13 {offsets = [0, 0, 0], sizes = [1, 40, 8], strides = [1, 1, 1]} : vector<1x48x8xf32> to vector<1x40x8xf32>
    %15 = vector.shape_cast %9 : vector<48x8xf32> to vector<1x48x8xf32>
    %16 = vector.shape_cast %12 : vector<48x8xf32> to vector<1x48x8xf32>
    %17 = arith.truncf %14 : vector<1x40x8xf32> to vector<1x40x8xbf16>
    %18 = arith.truncf %15 : vector<1x48x8xf32> to vector<1x48x8xbf16>
    "tpu.trace_start"() <{level = 10 : i32, message = "bqd,bkd->bqk"}> : () -> ()
    %cst_14 = arith.constant dense<0.000000e+00> : vector<1x40x48xf32>
    %19 = tpu.matmul %17, %18, %cst_14 {dimension_numbers = #tpu.dot_dimension_numbers<[2], [2], [1], [1], [0, 0, 0, 1, 1, 1], [0], [0]>} : vector<1x40x8xbf16>, vector<1x48x8xbf16>, vector<1x40x48xf32> -> vector<1x40x48xf32>
    "tpu.trace_stop"() : () -> ()
    %cst_15 = arith.constant dense<0xFF800000> : vector<1x40xf32>
    %20 = vector.multi_reduction <maximumf>, %19, %cst_15 [2] : vector<1x40x48xf32> to vector<1x40xf32>
    %21 = vector.shape_cast %20 : vector<1x40xf32> to vector<1x40x1xf32>
    %22 = vector.broadcast %21 : vector<1x40x1xf32> to vector<1x40x48xf32>
    %23 = arith.subf %19, %22 : vector<1x40x48xf32>
    %24 = math.exp %23 : vector<1x40x48xf32>
    %cst_16 = arith.constant dense<0.000000e+00> : vector<1x40xf32>
    %25 = vector.multi_reduction <add>, %24, %cst_16 [2] : vector<1x40x48xf32> to vector<1x40xf32>
    %26 = vector.shape_cast %25 : vector<1x40xf32> to vector<1x40x1xf32>
    %27 = vector.broadcast %26 : vector<1x40x1xf32> to vector<1x40x48xf32>
    %28 = arith.divf %24, %27 : vector<1x40x48xf32>
    %29 = arith.truncf %28 : vector<1x40x48xf32> to vector<1x40x48xbf16>
    %30 = arith.truncf %16 : vector<1x48x8xf32> to vector<1x48x8xbf16>
    "tpu.trace_start"() <{level = 10 : i32, message = "bqk,bkd->bqd"}> : () -> ()
    %cst_17 = arith.constant dense<0.000000e+00> : vector<1x40x8xf32>
    %31 = tpu.matmul %29, %30, %cst_17 {dimension_numbers = #tpu.dot_dimension_numbers<[2], [1], [1], [2], [0, 0, 0, 1, 1, 2], [0], [0]>} : vector<1x40x48xbf16>, vector<1x48x8xbf16>, vector<1x40x8xf32> -> vector<1x40x8xf32>
    "tpu.trace_stop"() : () -> ()
    %c0_18 = arith.constant 0 : index
    %c0_19 = arith.constant 0 : index
    %c0_20 = arith.constant 0 : index
    %32 = vector.load %arg5[%c0_18, %c0_19, %c0_20] : memref<8x8x64xbf16, #tpu.memory_space<vmem>>, vector<1x8x64xbf16>
    %33 = vector.shape_cast %32 : vector<1x8x64xbf16> to vector<8x64xbf16>
    %34 = vector.shape_cast %33 : vector<8x64xbf16> to vector<1x8x64xbf16>
    %35 = arith.truncf %31 : vector<1x40x8xf32> to vector<1x40x8xbf16>
    "tpu.trace_start"() <{level = 10 : i32, message = "bqd,bdc->bqc"}> : () -> ()
    %cst_21 = arith.constant dense<0.000000e+00> : vector<1x40x64xf32>
    %36 = tpu.matmul %35, %34, %cst_21 {dimension_numbers = #tpu.dot_dimension_numbers<[2], [1], [1], [2], [0, 0, 0, 1, 1, 2], [0], [0]>} : vector<1x40x8xbf16>, vector<1x8x64xbf16>, vector<1x40x64xf32> -> vector<1x40x64xf32>
    "tpu.trace_stop"() : () -> ()
    %37 = arith.addf %3, %36 : vector<1x40x64xf32>
    %c1 = arith.constant 1 : index
    %c0_22 = arith.constant 0 : index
    %c0_23 = arith.constant 0 : index
    %38 = vector.load %arg2[%c1, %c0_22, %c0_23] : memref<8x64x8xbf16, #tpu.memory_space<vmem>>, vector<1x64x8xbf16>
    %39 = vector.shape_cast %38 : vector<1x64x8xbf16> to vector<64x8xbf16>
    %cst_24 = arith.constant dense<0.000000e+00> : vector<48x8xf32>
    %40 = tpu.matmul %2, %39, %cst_24 {dimension_numbers = #tpu.dot_dimension_numbers<[1], [0], [0], [1], [0, 0, 1, 1], [], []>} : vector<48x64xbf16>, vector<64x8xbf16>, vector<48x8xf32> -> vector<48x8xf32>
    %c1_25 = arith.constant 1 : index
    %c0_26 = arith.constant 0 : index
    %c0_27 = arith.constant 0 : index
    %41 = vector.load %arg3[%c1_25, %c0_26, %c0_27] : memref<8x64x8xbf16, #tpu.memory_space<vmem>>, vector<1x64x8xbf16>
    %42 = vector.shape_cast %41 : vector<1x64x8xbf16> to vector<64x8xbf16>
    %cst_28 = arith.constant dense<0.000000e+00> : vector<48x8xf32>
    %43 = tpu.matmul %2, %42, %cst_28 {dimension_numbers = #tpu.dot_dimension_numbers<[1], [0], [0], [1], [0, 0, 1, 1], [], []>} : vector<48x64xbf16>, vector<64x8xbf16>, vector<48x8xf32> -> vector<48x8xf32>
    %c1_29 = arith.constant 1 : index
    %c0_30 = arith.constant 0 : index
    %c0_31 = arith.constant 0 : index
    %44 = vector.load %arg4[%c1_29, %c0_30, %c0_31] : memref<8x64x8xbf16, #tpu.memory_space<vmem>>, vector<1x64x8xbf16>
    %45 = vector.shape_cast %44 : vector<1x64x8xbf16> to vector<64x8xbf16>
    %cst_32 = arith.constant dense<0.000000e+00> : vector<48x8xf32>
    %46 = tpu.matmul %2, %45, %cst_32 {dimension_numbers = #tpu.dot_dimension_numbers<[1], [0], [0], [1], [0, 0, 1, 1], [], []>} : vector<48x64xbf16>, vector<64x8xbf16>, vector<48x8xf32> -> vector<48x8xf32>
    %47 = vector.shape_cast %40 : vector<48x8xf32> to vector<1x48x8xf32>
    %48 = vector.extract_strided_slice %47 {offsets = [0, 0, 0], sizes = [1, 40, 8], strides = [1, 1, 1]} : vector<1x48x8xf32> to vector<1x40x8xf32>
    %49 = vector.shape_cast %43 : vector<48x8xf32> to vector<1x48x8xf32>
    %50 = vector.shape_cast %46 : vector<48x8xf32> to vector<1x48x8xf32>
    %51 = arith.truncf %48 : vector<1x40x8xf32> to vector<1x40x8xbf16>
    %52 = arith.truncf %49 : vector<1x48x8xf32> to vector<1x48x8xbf16>
    "tpu.trace_start"() <{level = 10 : i32, message = "bqd,bkd->bqk"}> : () -> ()
    %cst_33 = arith.constant dense<0.000000e+00> : vector<1x40x48xf32>
    %53 = tpu.matmul %51, %52, %cst_33 {dimension_numbers = #tpu.dot_dimension_numbers<[2], [2], [1], [1], [0, 0, 0, 1, 1, 1], [0], [0]>} : vector<1x40x8xbf16>, vector<1x48x8xbf16>, vector<1x40x48xf32> -> vector<1x40x48xf32>
    "tpu.trace_stop"() : () -> ()
    %cst_34 = arith.constant dense<0xFF800000> : vector<1x40xf32>
    %54 = vector.multi_reduction <maximumf>, %53, %cst_34 [2] : vector<1x40x48xf32> to vector<1x40xf32>
    %55 = vector.shape_cast %54 : vector<1x40xf32> to vector<1x40x1xf32>
    %56 = vector.broadcast %55 : vector<1x40x1xf32> to vector<1x40x48xf32>
    %57 = arith.subf %53, %56 : vector<1x40x48xf32>
    %58 = math.exp %57 : vector<1x40x48xf32>
    %cst_35 = arith.constant dense<0.000000e+00> : vector<1x40xf32>
    %59 = vector.multi_reduction <add>, %58, %cst_35 [2] : vector<1x40x48xf32> to vector<1x40xf32>
    %60 = vector.shape_cast %59 : vector<1x40xf32> to vector<1x40x1xf32>
    %61 = vector.broadcast %60 : vector<1x40x1xf32> to vector<1x40x48xf32>
    %62 = arith.divf %58, %61 : vector<1x40x48xf32>
    %63 = arith.truncf %62 : vector<1x40x48xf32> to vector<1x40x48xbf16>
    %64 = arith.truncf %50 : vector<1x48x8xf32> to vector<1x48x8xbf16>
    "tpu.trace_start"() <{level = 10 : i32, message = "bqk,bkd->bqd"}> : () -> ()
    %cst_36 = arith.constant dense<0.000000e+00> : vector<1x40x8xf32>
    %65 = tpu.matmul %63, %64, %cst_36 {dimension_numbers = #tpu.dot_dimension_numbers<[2], [1], [1], [2], [0, 0, 0, 1, 1, 2], [0], [0]>} : vector<1x40x48xbf16>, vector<1x48x8xbf16>, vector<1x40x8xf32> -> vector<1x40x8xf32>
    "tpu.trace_stop"() : () -> ()
    %c1_37 = arith.constant 1 : index
    %c0_38 = arith.constant 0 : index
    %c0_39 = arith.constant 0 : index
    %66 = vector.load %arg5[%c1_37, %c0_38, %c0_39] : memref<8x8x64xbf16, #tpu.memory_space<vmem>>, vector<1x8x64xbf16>
    %67 = vector.shape_cast %66 : vector<1x8x64xbf16> to vector<8x64xbf16>
    %68 = vector.shape_cast %67 : vector<8x64xbf16> to vector<1x8x64xbf16>
    %69 = arith.truncf %65 : vector<1x40x8xf32> to vector<1x40x8xbf16>
    "tpu.trace_start"() <{level = 10 : i32, message = "bqd,bdc->bqc"}> : () -> ()
    %cst_40 = arith.constant dense<0.000000e+00> : vector<1x40x64xf32>
    %70 = tpu.matmul %69, %68, %cst_40 {dimension_numbers = #tpu.dot_dimension_numbers<[2], [1], [1], [2], [0, 0, 0, 1, 1, 2], [0], [0]>} : vector<1x40x8xbf16>, vector<1x8x64xbf16>, vector<1x40x64xf32> -> vector<1x40x64xf32>
    "tpu.trace_stop"() : () -> ()
    %71 = arith.addf %37, %70 : vector<1x40x64xf32>
    %c2 = arith.constant 2 : index
    %c0_41 = arith.constant 0 : index
    %c0_42 = arith.constant 0 : index
    %72 = vector.load %arg2[%c2, %c0_41, %c0_42] : memref<8x64x8xbf16, #tpu.memory_space<vmem>>, vector<1x64x8xbf16>
    %73 = vector.shape_cast %72 : vector<1x64x8xbf16> to vector<64x8xbf16>
    %cst_43 = arith.constant dense<0.000000e+00> : vector<48x8xf32>
    %74 = tpu.matmul %2, %73, %cst_43 {dimension_numbers = #tpu.dot_dimension_numbers<[1], [0], [0], [1], [0, 0, 1, 1], [], []>} : vector<48x64xbf16>, vector<64x8xbf16>, vector<48x8xf32> -> vector<48x8xf32>
    %c2_44 = arith.constant 2 : index
    %c0_45 = arith.constant 0 : index
    %c0_46 = arith.constant 0 : index
    %75 = vector.load %arg3[%c2_44, %c0_45, %c0_46] : memref<8x64x8xbf16, #tpu.memory_space<vmem>>, vector<1x64x8xbf16>
    %76 = vector.shape_cast %75 : vector<1x64x8xbf16> to vector<64x8xbf16>
    %cst_47 = arith.constant dense<0.000000e+00> : vector<48x8xf32>
    %77 = tpu.matmul %2, %76, %cst_47 {dimension_numbers = #tpu.dot_dimension_numbers<[1], [0], [0], [1], [0, 0, 1, 1], [], []>} : vector<48x64xbf16>, vector<64x8xbf16>, vector<48x8xf32> -> vector<48x8xf32>
    %c2_48 = arith.constant 2 : index
    %c0_49 = arith.constant 0 : index
    %c0_50 = arith.constant 0 : index
    %78 = vector.load %arg4[%c2_48, %c0_49, %c0_50] : memref<8x64x8xbf16, #tpu.memory_space<vmem>>, vector<1x64x8xbf16>
    %79 = vector.shape_cast %78 : vector<1x64x8xbf16> to vector<64x8xbf16>
    %cst_51 = arith.constant dense<0.000000e+00> : vector<48x8xf32>
    %80 = tpu.matmul %2, %79, %cst_51 {dimension_numbers = #tpu.dot_dimension_numbers<[1], [0], [0], [1], [0, 0, 1, 1], [], []>} : vector<48x64xbf16>, vector<64x8xbf16>, vector<48x8xf32> -> vector<48x8xf32>
    %81 = vector.shape_cast %74 : vector<48x8xf32> to vector<1x48x8xf32>
    %82 = vector.extract_strided_slice %81 {offsets = [0, 0, 0], sizes = [1, 40, 8], strides = [1, 1, 1]} : vector<1x48x8xf32> to vector<1x40x8xf32>
    %83 = vector.shape_cast %77 : vector<48x8xf32> to vector<1x48x8xf32>
    %84 = vector.shape_cast %80 : vector<48x8xf32> to vector<1x48x8xf32>
    %85 = arith.truncf %82 : vector<1x40x8xf32> to vector<1x40x8xbf16>
    %86 = arith.truncf %83 : vector<1x48x8xf32> to vector<1x48x8xbf16>
    "tpu.trace_start"() <{level = 10 : i32, message = "bqd,bkd->bqk"}> : () -> ()
    %cst_52 = arith.constant dense<0.000000e+00> : vector<1x40x48xf32>
    %87 = tpu.matmul %85, %86, %cst_52 {dimension_numbers = #tpu.dot_dimension_numbers<[2], [2], [1], [1], [0, 0, 0, 1, 1, 1], [0], [0]>} : vector<1x40x8xbf16>, vector<1x48x8xbf16>, vector<1x40x48xf32> -> vector<1x40x48xf32>
    "tpu.trace_stop"() : () -> ()
    %cst_53 = arith.constant dense<0xFF800000> : vector<1x40xf32>
    %88 = vector.multi_reduction <maximumf>, %87, %cst_53 [2] : vector<1x40x48xf32> to vector<1x40xf32>
    %89 = vector.shape_cast %88 : vector<1x40xf32> to vector<1x40x1xf32>
    %90 = vector.broadcast %89 : vector<1x40x1xf32> to vector<1x40x48xf32>
    %91 = arith.subf %87, %90 : vector<1x40x48xf32>
    %92 = math.exp %91 : vector<1x40x48xf32>
    %cst_54 = arith.constant dense<0.000000e+00> : vector<1x40xf32>
    %93 = vector.multi_reduction <add>, %92, %cst_54 [2] : vector<1x40x48xf32> to vector<1x40xf32>
    %94 = vector.shape_cast %93 : vector<1x40xf32> to vector<1x40x1xf32>
    %95 = vector.broadcast %94 : vector<1x40x1xf32> to vector<1x40x48xf32>
    %96 = arith.divf %92, %95 : vector<1x40x48xf32>
    %97 = arith.truncf %96 : vector<1x40x48xf32> to vector<1x40x48xbf16>
    %98 = arith.truncf %84 : vector<1x48x8xf32> to vector<1x48x8xbf16>
    "tpu.trace_start"() <{level = 10 : i32, message = "bqk,bkd->bqd"}> : () -> ()
    %cst_55 = arith.constant dense<0.000000e+00> : vector<1x40x8xf32>
    %99 = tpu.matmul %97, %98, %cst_55 {dimension_numbers = #tpu.dot_dimension_numbers<[2], [1], [1], [2], [0, 0, 0, 1, 1, 2], [0], [0]>} : vector<1x40x48xbf16>, vector<1x48x8xbf16>, vector<1x40x8xf32> -> vector<1x40x8xf32>
    "tpu.trace_stop"() : () -> ()
    %c2_56 = arith.constant 2 : index
    %c0_57 = arith.constant 0 : index
    %c0_58 = arith.constant 0 : index
    %100 = vector.load %arg5[%c2_56, %c0_57, %c0_58] : memref<8x8x64xbf16, #tpu.memory_space<vmem>>, vector<1x8x64xbf16>
    %101 = vector.shape_cast %100 : vector<1x8x64xbf16> to vector<8x64xbf16>
    %102 = vector.shape_cast %101 : vector<8x64xbf16> to vector<1x8x64xbf16>
    %103 = arith.truncf %99 : vector<1x40x8xf32> to vector<1x40x8xbf16>
    "tpu.trace_start"() <{level = 10 : i32, message = "bqd,bdc->bqc"}> : () -> ()
    %cst_59 = arith.constant dense<0.000000e+00> : vector<1x40x64xf32>
    %104 = tpu.matmul %103, %102, %cst_59 {dimension_numbers = #tpu.dot_dimension_numbers<[2], [1], [1], [2], [0, 0, 0, 1, 1, 2], [0], [0]>} : vector<1x40x8xbf16>, vector<1x8x64xbf16>, vector<1x40x64xf32> -> vector<1x40x64xf32>
    "tpu.trace_stop"() : () -> ()
    %105 = arith.addf %71, %104 : vector<1x40x64xf32>
    %c3 = arith.constant 3 : index
    %c0_60 = arith.constant 0 : index
    %c0_61 = arith.constant 0 : index
    %106 = vector.load %arg2[%c3, %c0_60, %c0_61] : memref<8x64x8xbf16, #tpu.memory_space<vmem>>, vector<1x64x8xbf16>
    %107 = vector.shape_cast %106 : vector<1x64x8xbf16> to vector<64x8xbf16>
    %cst_62 = arith.constant dense<0.000000e+00> : vector<48x8xf32>
    %108 = tpu.matmul %2, %107, %cst_62 {dimension_numbers = #tpu.dot_dimension_numbers<[1], [0], [0], [1], [0, 0, 1, 1], [], []>} : vector<48x64xbf16>, vector<64x8xbf16>, vector<48x8xf32> -> vector<48x8xf32>
    %c3_63 = arith.constant 3 : index
    %c0_64 = arith.constant 0 : index
    %c0_65 = arith.constant 0 : index
    %109 = vector.load %arg3[%c3_63, %c0_64, %c0_65] : memref<8x64x8xbf16, #tpu.memory_space<vmem>>, vector<1x64x8xbf16>
    %110 = vector.shape_cast %109 : vector<1x64x8xbf16> to vector<64x8xbf16>
    %cst_66 = arith.constant dense<0.000000e+00> : vector<48x8xf32>
    %111 = tpu.matmul %2, %110, %cst_66 {dimension_numbers = #tpu.dot_dimension_numbers<[1], [0], [0], [1], [0, 0, 1, 1], [], []>} : vector<48x64xbf16>, vector<64x8xbf16>, vector<48x8xf32> -> vector<48x8xf32>
    %c3_67 = arith.constant 3 : index
    %c0_68 = arith.constant 0 : index
    %c0_69 = arith.constant 0 : index
    %112 = vector.load %arg4[%c3_67, %c0_68, %c0_69] : memref<8x64x8xbf16, #tpu.memory_space<vmem>>, vector<1x64x8xbf16>
    %113 = vector.shape_cast %112 : vector<1x64x8xbf16> to vector<64x8xbf16>
    %cst_70 = arith.constant dense<0.000000e+00> : vector<48x8xf32>
    %114 = tpu.matmul %2, %113, %cst_70 {dimension_numbers = #tpu.dot_dimension_numbers<[1], [0], [0], [1], [0, 0, 1, 1], [], []>} : vector<48x64xbf16>, vector<64x8xbf16>, vector<48x8xf32> -> vector<48x8xf32>
    %115 = vector.shape_cast %108 : vector<48x8xf32> to vector<1x48x8xf32>
    %116 = vector.extract_strided_slice %115 {offsets = [0, 0, 0], sizes = [1, 40, 8], strides = [1, 1, 1]} : vector<1x48x8xf32> to vector<1x40x8xf32>
    %117 = vector.shape_cast %111 : vector<48x8xf32> to vector<1x48x8xf32>
    %118 = vector.shape_cast %114 : vector<48x8xf32> to vector<1x48x8xf32>
    %119 = arith.truncf %116 : vector<1x40x8xf32> to vector<1x40x8xbf16>
    %120 = arith.truncf %117 : vector<1x48x8xf32> to vector<1x48x8xbf16>
    "tpu.trace_start"() <{level = 10 : i32, message = "bqd,bkd->bqk"}> : () -> ()
    %cst_71 = arith.constant dense<0.000000e+00> : vector<1x40x48xf32>
    %121 = tpu.matmul %119, %120, %cst_71 {dimension_numbers = #tpu.dot_dimension_numbers<[2], [2], [1], [1], [0, 0, 0, 1, 1, 1], [0], [0]>} : vector<1x40x8xbf16>, vector<1x48x8xbf16>, vector<1x40x48xf32> -> vector<1x40x48xf32>
    "tpu.trace_stop"() : () -> ()
    %cst_72 = arith.constant dense<0xFF800000> : vector<1x40xf32>
    %122 = vector.multi_reduction <maximumf>, %121, %cst_72 [2] : vector<1x40x48xf32> to vector<1x40xf32>
    %123 = vector.shape_cast %122 : vector<1x40xf32> to vector<1x40x1xf32>
    %124 = vector.broadcast %123 : vector<1x40x1xf32> to vector<1x40x48xf32>
    %125 = arith.subf %121, %124 : vector<1x40x48xf32>
    %126 = math.exp %125 : vector<1x40x48xf32>
    %cst_73 = arith.constant dense<0.000000e+00> : vector<1x40xf32>
    %127 = vector.multi_reduction <add>, %126, %cst_73 [2] : vector<1x40x48xf32> to vector<1x40xf32>
    %128 = vector.shape_cast %127 : vector<1x40xf32> to vector<1x40x1xf32>
    %129 = vector.broadcast %128 : vector<1x40x1xf32> to vector<1x40x48xf32>
    %130 = arith.divf %126, %129 : vector<1x40x48xf32>
    %131 = arith.truncf %130 : vector<1x40x48xf32> to vector<1x40x48xbf16>
    %132 = arith.truncf %118 : vector<1x48x8xf32> to vector<1x48x8xbf16>
    "tpu.trace_start"() <{level = 10 : i32, message = "bqk,bkd->bqd"}> : () -> ()
    %cst_74 = arith.constant dense<0.000000e+00> : vector<1x40x8xf32>
    %133 = tpu.matmul %131, %132, %cst_74 {dimension_numbers = #tpu.dot_dimension_numbers<[2], [1], [1], [2], [0, 0, 0, 1, 1, 2], [0], [0]>} : vector<1x40x48xbf16>, vector<1x48x8xbf16>, vector<1x40x8xf32> -> vector<1x40x8xf32>
    "tpu.trace_stop"() : () -> ()
    %c3_75 = arith.constant 3 : index
    %c0_76 = arith.constant 0 : index
    %c0_77 = arith.constant 0 : index
    %134 = vector.load %arg5[%c3_75, %c0_76, %c0_77] : memref<8x8x64xbf16, #tpu.memory_space<vmem>>, vector<1x8x64xbf16>
    %135 = vector.shape_cast %134 : vector<1x8x64xbf16> to vector<8x64xbf16>
    %136 = vector.shape_cast %135 : vector<8x64xbf16> to vector<1x8x64xbf16>
    %137 = arith.truncf %133 : vector<1x40x8xf32> to vector<1x40x8xbf16>
    "tpu.trace_start"() <{level = 10 : i32, message = "bqd,bdc->bqc"}> : () -> ()
    %cst_78 = arith.constant dense<0.000000e+00> : vector<1x40x64xf32>
    %138 = tpu.matmul %137, %136, %cst_78 {dimension_numbers = #tpu.dot_dimension_numbers<[2], [1], [1], [2], [0, 0, 0, 1, 1, 2], [0], [0]>} : vector<1x40x8xbf16>, vector<1x8x64xbf16>, vector<1x40x64xf32> -> vector<1x40x64xf32>
    "tpu.trace_stop"() : () -> ()
    %139 = arith.addf %105, %138 : vector<1x40x64xf32>
    %c4 = arith.constant 4 : index
    %c0_79 = arith.constant 0 : index
    %c0_80 = arith.constant 0 : index
    %140 = vector.load %arg2[%c4, %c0_79, %c0_80] : memref<8x64x8xbf16, #tpu.memory_space<vmem>>, vector<1x64x8xbf16>
    %141 = vector.shape_cast %140 : vector<1x64x8xbf16> to vector<64x8xbf16>
    %cst_81 = arith.constant dense<0.000000e+00> : vector<48x8xf32>
    %142 = tpu.matmul %2, %141, %cst_81 {dimension_numbers = #tpu.dot_dimension_numbers<[1], [0], [0], [1], [0, 0, 1, 1], [], []>} : vector<48x64xbf16>, vector<64x8xbf16>, vector<48x8xf32> -> vector<48x8xf32>
    %c4_82 = arith.constant 4 : index
    %c0_83 = arith.constant 0 : index
    %c0_84 = arith.constant 0 : index
    %143 = vector.load %arg3[%c4_82, %c0_83, %c0_84] : memref<8x64x8xbf16, #tpu.memory_space<vmem>>, vector<1x64x8xbf16>
    %144 = vector.shape_cast %143 : vector<1x64x8xbf16> to vector<64x8xbf16>
    %cst_85 = arith.constant dense<0.000000e+00> : vector<48x8xf32>
    %145 = tpu.matmul %2, %144, %cst_85 {dimension_numbers = #tpu.dot_dimension_numbers<[1], [0], [0], [1], [0, 0, 1, 1], [], []>} : vector<48x64xbf16>, vector<64x8xbf16>, vector<48x8xf32> -> vector<48x8xf32>
    %c4_86 = arith.constant 4 : index
    %c0_87 = arith.constant 0 : index
    %c0_88 = arith.constant 0 : index
    %146 = vector.load %arg4[%c4_86, %c0_87, %c0_88] : memref<8x64x8xbf16, #tpu.memory_space<vmem>>, vector<1x64x8xbf16>
    %147 = vector.shape_cast %146 : vector<1x64x8xbf16> to vector<64x8xbf16>
    %cst_89 = arith.constant dense<0.000000e+00> : vector<48x8xf32>
    %148 = tpu.matmul %2, %147, %cst_89 {dimension_numbers = #tpu.dot_dimension_numbers<[1], [0], [0], [1], [0, 0, 1, 1], [], []>} : vector<48x64xbf16>, vector<64x8xbf16>, vector<48x8xf32> -> vector<48x8xf32>
    %149 = vector.shape_cast %142 : vector<48x8xf32> to vector<1x48x8xf32>
    %150 = vector.extract_strided_slice %149 {offsets = [0, 0, 0], sizes = [1, 40, 8], strides = [1, 1, 1]} : vector<1x48x8xf32> to vector<1x40x8xf32>
    %151 = vector.shape_cast %145 : vector<48x8xf32> to vector<1x48x8xf32>
    %152 = vector.shape_cast %148 : vector<48x8xf32> to vector<1x48x8xf32>
    %153 = arith.truncf %150 : vector<1x40x8xf32> to vector<1x40x8xbf16>
    %154 = arith.truncf %151 : vector<1x48x8xf32> to vector<1x48x8xbf16>
    "tpu.trace_start"() <{level = 10 : i32, message = "bqd,bkd->bqk"}> : () -> ()
    %cst_90 = arith.constant dense<0.000000e+00> : vector<1x40x48xf32>
    %155 = tpu.matmul %153, %154, %cst_90 {dimension_numbers = #tpu.dot_dimension_numbers<[2], [2], [1], [1], [0, 0, 0, 1, 1, 1], [0], [0]>} : vector<1x40x8xbf16>, vector<1x48x8xbf16>, vector<1x40x48xf32> -> vector<1x40x48xf32>
    "tpu.trace_stop"() : () -> ()
    %cst_91 = arith.constant dense<0xFF800000> : vector<1x40xf32>
    %156 = vector.multi_reduction <maximumf>, %155, %cst_91 [2] : vector<1x40x48xf32> to vector<1x40xf32>
    %157 = vector.shape_cast %156 : vector<1x40xf32> to vector<1x40x1xf32>
    %158 = vector.broadcast %157 : vector<1x40x1xf32> to vector<1x40x48xf32>
    %159 = arith.subf %155, %158 : vector<1x40x48xf32>
    %160 = math.exp %159 : vector<1x40x48xf32>
    %cst_92 = arith.constant dense<0.000000e+00> : vector<1x40xf32>
    %161 = vector.multi_reduction <add>, %160, %cst_92 [2] : vector<1x40x48xf32> to vector<1x40xf32>
    %162 = vector.shape_cast %161 : vector<1x40xf32> to vector<1x40x1xf32>
    %163 = vector.broadcast %162 : vector<1x40x1xf32> to vector<1x40x48xf32>
    %164 = arith.divf %160, %163 : vector<1x40x48xf32>
    %165 = arith.truncf %164 : vector<1x40x48xf32> to vector<1x40x48xbf16>
    %166 = arith.truncf %152 : vector<1x48x8xf32> to vector<1x48x8xbf16>
    "tpu.trace_start"() <{level = 10 : i32, message = "bqk,bkd->bqd"}> : () -> ()
    %cst_93 = arith.constant dense<0.000000e+00> : vector<1x40x8xf32>
    %167 = tpu.matmul %165, %166, %cst_93 {dimension_numbers = #tpu.dot_dimension_numbers<[2], [1], [1], [2], [0, 0, 0, 1, 1, 2], [0], [0]>} : vector<1x40x48xbf16>, vector<1x48x8xbf16>, vector<1x40x8xf32> -> vector<1x40x8xf32>
    "tpu.trace_stop"() : () -> ()
    %c4_94 = arith.constant 4 : index
    %c0_95 = arith.constant 0 : index
    %c0_96 = arith.constant 0 : index
    %168 = vector.load %arg5[%c4_94, %c0_95, %c0_96] : memref<8x8x64xbf16, #tpu.memory_space<vmem>>, vector<1x8x64xbf16>
    %169 = vector.shape_cast %168 : vector<1x8x64xbf16> to vector<8x64xbf16>
    %170 = vector.shape_cast %169 : vector<8x64xbf16> to vector<1x8x64xbf16>
    %171 = arith.truncf %167 : vector<1x40x8xf32> to vector<1x40x8xbf16>
    "tpu.trace_start"() <{level = 10 : i32, message = "bqd,bdc->bqc"}> : () -> ()
    %cst_97 = arith.constant dense<0.000000e+00> : vector<1x40x64xf32>
    %172 = tpu.matmul %171, %170, %cst_97 {dimension_numbers = #tpu.dot_dimension_numbers<[2], [1], [1], [2], [0, 0, 0, 1, 1, 2], [0], [0]>} : vector<1x40x8xbf16>, vector<1x8x64xbf16>, vector<1x40x64xf32> -> vector<1x40x64xf32>
    "tpu.trace_stop"() : () -> ()
    %173 = arith.addf %139, %172 : vector<1x40x64xf32>
    %c5 = arith.constant 5 : index
    %c0_98 = arith.constant 0 : index
    %c0_99 = arith.constant 0 : index
    %174 = vector.load %arg2[%c5, %c0_98, %c0_99] : memref<8x64x8xbf16, #tpu.memory_space<vmem>>, vector<1x64x8xbf16>
    %175 = vector.shape_cast %174 : vector<1x64x8xbf16> to vector<64x8xbf16>
    %cst_100 = arith.constant dense<0.000000e+00> : vector<48x8xf32>
    %176 = tpu.matmul %2, %175, %cst_100 {dimension_numbers = #tpu.dot_dimension_numbers<[1], [0], [0], [1], [0, 0, 1, 1], [], []>} : vector<48x64xbf16>, vector<64x8xbf16>, vector<48x8xf32> -> vector<48x8xf32>
    %c5_101 = arith.constant 5 : index
    %c0_102 = arith.constant 0 : index
    %c0_103 = arith.constant 0 : index
    %177 = vector.load %arg3[%c5_101, %c0_102, %c0_103] : memref<8x64x8xbf16, #tpu.memory_space<vmem>>, vector<1x64x8xbf16>
    %178 = vector.shape_cast %177 : vector<1x64x8xbf16> to vector<64x8xbf16>
    %cst_104 = arith.constant dense<0.000000e+00> : vector<48x8xf32>
    %179 = tpu.matmul %2, %178, %cst_104 {dimension_numbers = #tpu.dot_dimension_numbers<[1], [0], [0], [1], [0, 0, 1, 1], [], []>} : vector<48x64xbf16>, vector<64x8xbf16>, vector<48x8xf32> -> vector<48x8xf32>
    %c5_105 = arith.constant 5 : index
    %c0_106 = arith.constant 0 : index
    %c0_107 = arith.constant 0 : index
    %180 = vector.load %arg4[%c5_105, %c0_106, %c0_107] : memref<8x64x8xbf16, #tpu.memory_space<vmem>>, vector<1x64x8xbf16>
    %181 = vector.shape_cast %180 : vector<1x64x8xbf16> to vector<64x8xbf16>
    %cst_108 = arith.constant dense<0.000000e+00> : vector<48x8xf32>
    %182 = tpu.matmul %2, %181, %cst_108 {dimension_numbers = #tpu.dot_dimension_numbers<[1], [0], [0], [1], [0, 0, 1, 1], [], []>} : vector<48x64xbf16>, vector<64x8xbf16>, vector<48x8xf32> -> vector<48x8xf32>
    %183 = vector.shape_cast %176 : vector<48x8xf32> to vector<1x48x8xf32>
    %184 = vector.extract_strided_slice %183 {offsets = [0, 0, 0], sizes = [1, 40, 8], strides = [1, 1, 1]} : vector<1x48x8xf32> to vector<1x40x8xf32>
    %185 = vector.shape_cast %179 : vector<48x8xf32> to vector<1x48x8xf32>
    %186 = vector.shape_cast %182 : vector<48x8xf32> to vector<1x48x8xf32>
    %187 = arith.truncf %184 : vector<1x40x8xf32> to vector<1x40x8xbf16>
    %188 = arith.truncf %185 : vector<1x48x8xf32> to vector<1x48x8xbf16>
    "tpu.trace_start"() <{level = 10 : i32, message = "bqd,bkd->bqk"}> : () -> ()
    %cst_109 = arith.constant dense<0.000000e+00> : vector<1x40x48xf32>
    %189 = tpu.matmul %187, %188, %cst_109 {dimension_numbers = #tpu.dot_dimension_numbers<[2], [2], [1], [1], [0, 0, 0, 1, 1, 1], [0], [0]>} : vector<1x40x8xbf16>, vector<1x48x8xbf16>, vector<1x40x48xf32> -> vector<1x40x48xf32>
    "tpu.trace_stop"() : () -> ()
    %cst_110 = arith.constant dense<0xFF800000> : vector<1x40xf32>
    %190 = vector.multi_reduction <maximumf>, %189, %cst_110 [2] : vector<1x40x48xf32> to vector<1x40xf32>
    %191 = vector.shape_cast %190 : vector<1x40xf32> to vector<1x40x1xf32>
    %192 = vector.broadcast %191 : vector<1x40x1xf32> to vector<1x40x48xf32>
    %193 = arith.subf %189, %192 : vector<1x40x48xf32>
    %194 = math.exp %193 : vector<1x40x48xf32>
    %cst_111 = arith.constant dense<0.000000e+00> : vector<1x40xf32>
    %195 = vector.multi_reduction <add>, %194, %cst_111 [2] : vector<1x40x48xf32> to vector<1x40xf32>
    %196 = vector.shape_cast %195 : vector<1x40xf32> to vector<1x40x1xf32>
    %197 = vector.broadcast %196 : vector<1x40x1xf32> to vector<1x40x48xf32>
    %198 = arith.divf %194, %197 : vector<1x40x48xf32>
    %199 = arith.truncf %198 : vector<1x40x48xf32> to vector<1x40x48xbf16>
    %200 = arith.truncf %186 : vector<1x48x8xf32> to vector<1x48x8xbf16>
    "tpu.trace_start"() <{level = 10 : i32, message = "bqk,bkd->bqd"}> : () -> ()
    %cst_112 = arith.constant dense<0.000000e+00> : vector<1x40x8xf32>
    %201 = tpu.matmul %199, %200, %cst_112 {dimension_numbers = #tpu.dot_dimension_numbers<[2], [1], [1], [2], [0, 0, 0, 1, 1, 2], [0], [0]>} : vector<1x40x48xbf16>, vector<1x48x8xbf16>, vector<1x40x8xf32> -> vector<1x40x8xf32>
    "tpu.trace_stop"() : () -> ()
    %c5_113 = arith.constant 5 : index
    %c0_114 = arith.constant 0 : index
    %c0_115 = arith.constant 0 : index
    %202 = vector.load %arg5[%c5_113, %c0_114, %c0_115] : memref<8x8x64xbf16, #tpu.memory_space<vmem>>, vector<1x8x64xbf16>
    %203 = vector.shape_cast %202 : vector<1x8x64xbf16> to vector<8x64xbf16>
    %204 = vector.shape_cast %203 : vector<8x64xbf16> to vector<1x8x64xbf16>
    %205 = arith.truncf %201 : vector<1x40x8xf32> to vector<1x40x8xbf16>
    "tpu.trace_start"() <{level = 10 : i32, message = "bqd,bdc->bqc"}> : () -> ()
    %cst_116 = arith.constant dense<0.000000e+00> : vector<1x40x64xf32>
    %206 = tpu.matmul %205, %204, %cst_116 {dimension_numbers = #tpu.dot_dimension_numbers<[2], [1], [1], [2], [0, 0, 0, 1, 1, 2], [0], [0]>} : vector<1x40x8xbf16>, vector<1x8x64xbf16>, vector<1x40x64xf32> -> vector<1x40x64xf32>
    "tpu.trace_stop"() : () -> ()
    %207 = arith.addf %173, %206 : vector<1x40x64xf32>
    %c6 = arith.constant 6 : index
    %c0_117 = arith.constant 0 : index
    %c0_118 = arith.constant 0 : index
    %208 = vector.load %arg2[%c6, %c0_117, %c0_118] : memref<8x64x8xbf16, #tpu.memory_space<vmem>>, vector<1x64x8xbf16>
    %209 = vector.shape_cast %208 : vector<1x64x8xbf16> to vector<64x8xbf16>
    %cst_119 = arith.constant dense<0.000000e+00> : vector<48x8xf32>
    %210 = tpu.matmul %2, %209, %cst_119 {dimension_numbers = #tpu.dot_dimension_numbers<[1], [0], [0], [1], [0, 0, 1, 1], [], []>} : vector<48x64xbf16>, vector<64x8xbf16>, vector<48x8xf32> -> vector<48x8xf32>
    %c6_120 = arith.constant 6 : index
    %c0_121 = arith.constant 0 : index
    %c0_122 = arith.constant 0 : index
    %211 = vector.load %arg3[%c6_120, %c0_121, %c0_122] : memref<8x64x8xbf16, #tpu.memory_space<vmem>>, vector<1x64x8xbf16>
    %212 = vector.shape_cast %211 : vector<1x64x8xbf16> to vector<64x8xbf16>
    %cst_123 = arith.constant dense<0.000000e+00> : vector<48x8xf32>
    %213 = tpu.matmul %2, %212, %cst_123 {dimension_numbers = #tpu.dot_dimension_numbers<[1], [0], [0], [1], [0, 0, 1, 1], [], []>} : vector<48x64xbf16>, vector<64x8xbf16>, vector<48x8xf32> -> vector<48x8xf32>
    %c6_124 = arith.constant 6 : index
    %c0_125 = arith.constant 0 : index
    %c0_126 = arith.constant 0 : index
    %214 = vector.load %arg4[%c6_124, %c0_125, %c0_126] : memref<8x64x8xbf16, #tpu.memory_space<vmem>>, vector<1x64x8xbf16>
    %215 = vector.shape_cast %214 : vector<1x64x8xbf16> to vector<64x8xbf16>
    %cst_127 = arith.constant dense<0.000000e+00> : vector<48x8xf32>
    %216 = tpu.matmul %2, %215, %cst_127 {dimension_numbers = #tpu.dot_dimension_numbers<[1], [0], [0], [1], [0, 0, 1, 1], [], []>} : vector<48x64xbf16>, vector<64x8xbf16>, vector<48x8xf32> -> vector<48x8xf32>
    %217 = vector.shape_cast %210 : vector<48x8xf32> to vector<1x48x8xf32>
    %218 = vector.extract_strided_slice %217 {offsets = [0, 0, 0], sizes = [1, 40, 8], strides = [1, 1, 1]} : vector<1x48x8xf32> to vector<1x40x8xf32>
    %219 = vector.shape_cast %213 : vector<48x8xf32> to vector<1x48x8xf32>
    %220 = vector.shape_cast %216 : vector<48x8xf32> to vector<1x48x8xf32>
    %221 = arith.truncf %218 : vector<1x40x8xf32> to vector<1x40x8xbf16>
    %222 = arith.truncf %219 : vector<1x48x8xf32> to vector<1x48x8xbf16>
    "tpu.trace_start"() <{level = 10 : i32, message = "bqd,bkd->bqk"}> : () -> ()
    %cst_128 = arith.constant dense<0.000000e+00> : vector<1x40x48xf32>
    %223 = tpu.matmul %221, %222, %cst_128 {dimension_numbers = #tpu.dot_dimension_numbers<[2], [2], [1], [1], [0, 0, 0, 1, 1, 1], [0], [0]>} : vector<1x40x8xbf16>, vector<1x48x8xbf16>, vector<1x40x48xf32> -> vector<1x40x48xf32>
    "tpu.trace_stop"() : () -> ()
    %cst_129 = arith.constant dense<0xFF800000> : vector<1x40xf32>
    %224 = vector.multi_reduction <maximumf>, %223, %cst_129 [2] : vector<1x40x48xf32> to vector<1x40xf32>
    %225 = vector.shape_cast %224 : vector<1x40xf32> to vector<1x40x1xf32>
    %226 = vector.broadcast %225 : vector<1x40x1xf32> to vector<1x40x48xf32>
    %227 = arith.subf %223, %226 : vector<1x40x48xf32>
    %228 = math.exp %227 : vector<1x40x48xf32>
    %cst_130 = arith.constant dense<0.000000e+00> : vector<1x40xf32>
    %229 = vector.multi_reduction <add>, %228, %cst_130 [2] : vector<1x40x48xf32> to vector<1x40xf32>
    %230 = vector.shape_cast %229 : vector<1x40xf32> to vector<1x40x1xf32>
    %231 = vector.broadcast %230 : vector<1x40x1xf32> to vector<1x40x48xf32>
    %232 = arith.divf %228, %231 : vector<1x40x48xf32>
    %233 = arith.truncf %232 : vector<1x40x48xf32> to vector<1x40x48xbf16>
    %234 = arith.truncf %220 : vector<1x48x8xf32> to vector<1x48x8xbf16>
    "tpu.trace_start"() <{level = 10 : i32, message = "bqk,bkd->bqd"}> : () -> ()
    %cst_131 = arith.constant dense<0.000000e+00> : vector<1x40x8xf32>
    %235 = tpu.matmul %233, %234, %cst_131 {dimension_numbers = #tpu.dot_dimension_numbers<[2], [1], [1], [2], [0, 0, 0, 1, 1, 2], [0], [0]>} : vector<1x40x48xbf16>, vector<1x48x8xbf16>, vector<1x40x8xf32> -> vector<1x40x8xf32>
    "tpu.trace_stop"() : () -> ()
    %c6_132 = arith.constant 6 : index
    %c0_133 = arith.constant 0 : index
    %c0_134 = arith.constant 0 : index
    %236 = vector.load %arg5[%c6_132, %c0_133, %c0_134] : memref<8x8x64xbf16, #tpu.memory_space<vmem>>, vector<1x8x64xbf16>
    %237 = vector.shape_cast %236 : vector<1x8x64xbf16> to vector<8x64xbf16>
    %238 = vector.shape_cast %237 : vector<8x64xbf16> to vector<1x8x64xbf16>
    %239 = arith.truncf %235 : vector<1x40x8xf32> to vector<1x40x8xbf16>
    "tpu.trace_start"() <{level = 10 : i32, message = "bqd,bdc->bqc"}> : () -> ()
    %cst_135 = arith.constant dense<0.000000e+00> : vector<1x40x64xf32>
    %240 = tpu.matmul %239, %238, %cst_135 {dimension_numbers = #tpu.dot_dimension_numbers<[2], [1], [1], [2], [0, 0, 0, 1, 1, 2], [0], [0]>} : vector<1x40x8xbf16>, vector<1x8x64xbf16>, vector<1x40x64xf32> -> vector<1x40x64xf32>
    "tpu.trace_stop"() : () -> ()
    %241 = arith.addf %207, %240 : vector<1x40x64xf32>
    %c7 = arith.constant 7 : index
    %c0_136 = arith.constant 0 : index
    %c0_137 = arith.constant 0 : index
    %242 = vector.load %arg2[%c7, %c0_136, %c0_137] : memref<8x64x8xbf16, #tpu.memory_space<vmem>>, vector<1x64x8xbf16>
    %243 = vector.shape_cast %242 : vector<1x64x8xbf16> to vector<64x8xbf16>
    %cst_138 = arith.constant dense<0.000000e+00> : vector<48x8xf32>
    %244 = tpu.matmul %2, %243, %cst_138 {dimension_numbers = #tpu.dot_dimension_numbers<[1], [0], [0], [1], [0, 0, 1, 1], [], []>} : vector<48x64xbf16>, vector<64x8xbf16>, vector<48x8xf32> -> vector<48x8xf32>
    %c7_139 = arith.constant 7 : index
    %c0_140 = arith.constant 0 : index
    %c0_141 = arith.constant 0 : index
    %245 = vector.load %arg3[%c7_139, %c0_140, %c0_141] : memref<8x64x8xbf16, #tpu.memory_space<vmem>>, vector<1x64x8xbf16>
    %246 = vector.shape_cast %245 : vector<1x64x8xbf16> to vector<64x8xbf16>
    %cst_142 = arith.constant dense<0.000000e+00> : vector<48x8xf32>
    %247 = tpu.matmul %2, %246, %cst_142 {dimension_numbers = #tpu.dot_dimension_numbers<[1], [0], [0], [1], [0, 0, 1, 1], [], []>} : vector<48x64xbf16>, vector<64x8xbf16>, vector<48x8xf32> -> vector<48x8xf32>
    %c7_143 = arith.constant 7 : index
    %c0_144 = arith.constant 0 : index
    %c0_145 = arith.constant 0 : index
    %248 = vector.load %arg4[%c7_143, %c0_144, %c0_145] : memref<8x64x8xbf16, #tpu.memory_space<vmem>>, vector<1x64x8xbf16>
    %249 = vector.shape_cast %248 : vector<1x64x8xbf16> to vector<64x8xbf16>
    %cst_146 = arith.constant dense<0.000000e+00> : vector<48x8xf32>
    %250 = tpu.matmul %2, %249, %cst_146 {dimension_numbers = #tpu.dot_dimension_numbers<[1], [0], [0], [1], [0, 0, 1, 1], [], []>} : vector<48x64xbf16>, vector<64x8xbf16>, vector<48x8xf32> -> vector<48x8xf32>
    %251 = vector.shape_cast %244 : vector<48x8xf32> to vector<1x48x8xf32>
    %252 = vector.extract_strided_slice %251 {offsets = [0, 0, 0], sizes = [1, 40, 8], strides = [1, 1, 1]} : vector<1x48x8xf32> to vector<1x40x8xf32>
    %253 = vector.shape_cast %247 : vector<48x8xf32> to vector<1x48x8xf32>
    %254 = vector.shape_cast %250 : vector<48x8xf32> to vector<1x48x8xf32>
    %255 = arith.truncf %252 : vector<1x40x8xf32> to vector<1x40x8xbf16>
    %256 = arith.truncf %253 : vector<1x48x8xf32> to vector<1x48x8xbf16>
    "tpu.trace_start"() <{level = 10 : i32, message = "bqd,bkd->bqk"}> : () -> ()
    %cst_147 = arith.constant dense<0.000000e+00> : vector<1x40x48xf32>
    %257 = tpu.matmul %255, %256, %cst_147 {dimension_numbers = #tpu.dot_dimension_numbers<[2], [2], [1], [1], [0, 0, 0, 1, 1, 1], [0], [0]>} : vector<1x40x8xbf16>, vector<1x48x8xbf16>, vector<1x40x48xf32> -> vector<1x40x48xf32>
    "tpu.trace_stop"() : () -> ()
    %cst_148 = arith.constant dense<0xFF800000> : vector<1x40xf32>
    %258 = vector.multi_reduction <maximumf>, %257, %cst_148 [2] : vector<1x40x48xf32> to vector<1x40xf32>
    %259 = vector.shape_cast %258 : vector<1x40xf32> to vector<1x40x1xf32>
    %260 = vector.broadcast %259 : vector<1x40x1xf32> to vector<1x40x48xf32>
    %261 = arith.subf %257, %260 : vector<1x40x48xf32>
    %262 = math.exp %261 : vector<1x40x48xf32>
    %cst_149 = arith.constant dense<0.000000e+00> : vector<1x40xf32>
    %263 = vector.multi_reduction <add>, %262, %cst_149 [2] : vector<1x40x48xf32> to vector<1x40xf32>
    %264 = vector.shape_cast %263 : vector<1x40xf32> to vector<1x40x1xf32>
    %265 = vector.broadcast %264 : vector<1x40x1xf32> to vector<1x40x48xf32>
    %266 = arith.divf %262, %265 : vector<1x40x48xf32>
    %267 = arith.truncf %266 : vector<1x40x48xf32> to vector<1x40x48xbf16>
    %268 = arith.truncf %254 : vector<1x48x8xf32> to vector<1x48x8xbf16>
    "tpu.trace_start"() <{level = 10 : i32, message = "bqk,bkd->bqd"}> : () -> ()
    %cst_150 = arith.constant dense<0.000000e+00> : vector<1x40x8xf32>
    %269 = tpu.matmul %267, %268, %cst_150 {dimension_numbers = #tpu.dot_dimension_numbers<[2], [1], [1], [2], [0, 0, 0, 1, 1, 2], [0], [0]>} : vector<1x40x48xbf16>, vector<1x48x8xbf16>, vector<1x40x8xf32> -> vector<1x40x8xf32>
    "tpu.trace_stop"() : () -> ()
    %c7_151 = arith.constant 7 : index
    %c0_152 = arith.constant 0 : index
    %c0_153 = arith.constant 0 : index
    %270 = vector.load %arg5[%c7_151, %c0_152, %c0_153] : memref<8x8x64xbf16, #tpu.memory_space<vmem>>, vector<1x8x64xbf16>
    %271 = vector.shape_cast %270 : vector<1x8x64xbf16> to vector<8x64xbf16>
    %272 = vector.shape_cast %271 : vector<8x64xbf16> to vector<1x8x64xbf16>
    %273 = arith.truncf %269 : vector<1x40x8xf32> to vector<1x40x8xbf16>
    "tpu.trace_start"() <{level = 10 : i32, message = "bqd,bdc->bqc"}> : () -> ()
    %cst_154 = arith.constant dense<0.000000e+00> : vector<1x40x64xf32>
    %274 = tpu.matmul %273, %272, %cst_154 {dimension_numbers = #tpu.dot_dimension_numbers<[2], [1], [1], [2], [0, 0, 0, 1, 1, 2], [0], [0]>} : vector<1x40x8xbf16>, vector<1x8x64xbf16>, vector<1x40x64xf32> -> vector<1x40x64xf32>
    "tpu.trace_stop"() : () -> ()
    %275 = arith.addf %241, %274 : vector<1x40x64xf32>
    %c0_155 = arith.constant 0 : index
    %c0_156 = arith.constant 0 : index
    %276 = vector.load %arg6[%c0_155, %c0_156] : memref<1x64xf32, #tpu.memory_space<vmem>>, vector<1x64xf32>
    %277 = vector.shape_cast %276 : vector<1x64xf32> to vector<1x1x64xf32>
    %278 = vector.broadcast %277 : vector<1x1x64xf32> to vector<1x40x64xf32>
    %279 = arith.addf %275, %278 : vector<1x40x64xf32>
    %c0_157 = arith.constant 0 : index
    %c0_158 = arith.constant 0 : index
    %c0_159 = arith.constant 0 : index
    %280 = vector.load %arg7[%c0_157, %c0_158, %c0_159] : memref<1x40x64xf32, #tpu.memory_space<vmem>>, vector<1x40x64xf32>
    tpu.vector_store %arg7[%c0_157, %c0_158, %c0_159], %279 {strides = array<i32>} : memref<1x40x64xf32, #tpu.memory_space<vmem>>, vector<1x40x64xf32>,
    return
  }
  func.func @transform_0(%arg0: i32) -> (i32, i32, i32) {
    %c0_i32 = arith.constant 0 : i32
    %c0_i32_0 = arith.constant 0 : i32
    %c0_i32_1 = arith.constant 0 : i32
    return %arg0, %c0_i32, %c0_i32_0 : i32, i32, i32
  }
  func.func @transform_1(%arg0: i32) -> (i32, i32, i32) {
    %c0_i32 = arith.constant 0 : i32
    %c0_i32_0 = arith.constant 0 : i32
    %c0_i32_1 = arith.constant 0 : i32
    %c0_i32_2 = arith.constant 0 : i32
    return %c0_i32, %c0_i32_0, %c0_i32_1 : i32, i32, i32
  }
  func.func @transform_2(%arg0: i32) -> (i32, i32, i32) {
    %c0_i32 = arith.constant 0 : i32
    %c0_i32_0 = arith.constant 0 : i32
    %c0_i32_1 = arith.constant 0 : i32
    %c0_i32_2 = arith.constant 0 : i32
    return %c0_i32, %c0_i32_0, %c0_i32_1 : i32, i32, i32
  }
  func.func @transform_3(%arg0: i32) -> (i32, i32, i32) {
    %c0_i32 = arith.constant 0 : i32
    %c0_i32_0 = arith.constant 0 : i32
    %c0_i32_1 = arith.constant 0 : i32
    %c0_i32_2 = arith.constant 0 : i32
    return %c0_i32, %c0_i32_0, %c0_i32_1 : i32, i32, i32
  }
  func.func @transform_4(%arg0: i32) -> (i32, i32, i32) {
    %c0_i32 = arith.constant 0 : i32
    %c0_i32_0 = arith.constant 0 : i32
    %c0_i32_1 = arith.constant 0 : i32
    %c0_i32_2 = arith.constant 0 : i32
    return %c0_i32, %c0_i32_0, %c0_i32_1 : i32, i32, i32
  }
  func.func @transform_5(%arg0: i32) -> (i32, i32) {
    %c0_i32 = arith.constant 0 : i32
    %c0_i32_0 = arith.constant 0 : i32
    %c0_i32_1 = arith.constant 0 : i32
    return %c0_i32, %c0_i32_0 : i32, i32
  }
  func.func @transform_6(%arg0: i32) -> (i32, i32, i32) {
    %c0_i32 = arith.constant 0 : i32
    %c0_i32_0 = arith.constant 0 : i32
    %c0_i32_1 = arith.constant 0 : i32
    return %arg0, %c0_i32, %c0_i32_0 : i32, i32, i32
  }
}

</mosaic_0001>

<llo_original>
// kernel: tpu_custom_call.1
$region0: #{tpu_custom_call.1}
  #allocation0 [shape = 'u32[]', space=smem, size = 0x4, offset = 0x4, fixed_abs, tag = 'smem constant byte address 0x4 - core index']
  #allocation1 [shape = 'u32[72,128]{1,0:T(1,128)}', space=vmem, size = 0x9000, scoped, tag = 'internal scratch']
  %s0 = inlined_call_operand.vmem [shape: f32[2,48,64], index: 0, kind: input, shape index: {}]
  %s1 = inlined_call_operand.vmem [shape: bf16[8,64,8], index: 1, kind: input, shape index: {}]
  %s2 = inlined_call_operand.vmem [shape: bf16[8,64,8], index: 2, kind: input, shape index: {}]
  %s3 = inlined_call_operand.vmem [shape: bf16[8,64,8], index: 3, kind: input, shape index: {}]
  %s4 = inlined_call_operand.vmem [shape: bf16[8,8,64], index: 4, kind: input, shape index: {}]
  %s5 = inlined_call_operand.vmem [shape: f32[1,64], index: 5, kind: input, shape index: {}]
  %s6 = inlined_call_operand.hbm [shape: f32[2,40,64], index: 6, kind: output, shape index: {}]
  %s7 = sld [smem:[#allocation0]]
  $region57: #{tpu_custom_call.1} parent=0
    _
  %s9 = ssub.s32 1, %s7
  %s10 = scalar_select 0, %s9, %s7
  $region1: #{tpu_custom_call.1} parent=0
    #allocation2 [shape = 'u8[40960]{0}', space=vmem, size = 0xa000, scoped, tag = 'output window, operand 0']
    #allocation3 [shape = 's32[2]{0}', space=sflag, size = 0x8, scoped, tag = 'scoped memory for tpu_custom_call.1']
    %11 = vsyncpa [#allocation3], 0
    %s12 = scalar_lea.sflag [#allocation3], 1
    %13 = vsyncpa %s12, 0
    loop: start=0, step=1, limit=4
    $region2: #{tpu_custom_call.1} parent=1 // loop_pre_header
      _
    $region3: #{tpu_custom_call.1} parent=1 // loop_header
      %s15 = sphi 0, %s19
      %p16 = scmp.ge.s32.totalorder %s15, 4
      %s25 = sphi 0, %s27
      %s28 = sphi 0, %s25
      %s29 = sphi 0, %s28
      %s45 = sphi 0, %s29
      %s49 = sphi 0, %s49
      %s51 = sphi 0, %s49
      %s52 = sphi 0, %s51
      %s66 = sphi 0, %s52
      %s70 = sphi 0, %s70
      %s72 = sphi 0, %s70
      %s73 = sphi 0, %s72
      %s87 = sphi 0, %s73
      %s91 = sphi 0, %s91
      %s93 = sphi 0, %s91
      %s94 = sphi 0, %s93
      %s108 = sphi 0, %s94
      %s112 = sphi 0, %s112
      %s114 = sphi 0, %s112
      %s115 = sphi 0, %s114
      %s129 = sphi 0, %s115
      %s133 = sphi 0, %s133
      %s135 = sphi 0, %s133
      %s136 = sphi 0, %s135
      %s150 = sphi 0, %s136
      %s156 = sphi 0, %s158
      %s159 = sphi 0, %s156
      %s160 = sphi 0, %s159
      %s176 = sphi 0, %s160
    $region4: #{tpu_custom_call.1} parent=1 // loop_header_branch
      %18 = sbr.rel (%p16) target = $region8
    $region5: #{tpu_custom_call.1} parent=1 // loop_body
      %s20 = ssub.s32 %s15, 1
      %s21 = ssub.s32 %s15, 2
      %s22 = sadd.s32 %s15, 1
      %s23 = ssub.s32 %s15, %s22
      %p24 = scmp.eq.s32.totalorder %s23, 0
      %s26 = sadd.s32 %s25, 1
      %s27 = scalar_select %p24, %s25, %s26
      %p30 = pneg %p24
      %p31 = scmp.eq.s32.totalorder %s15, 1
      %p32 = por %p30, %p31
      %p33 = scmp.ne.s32.totalorder %s25, %s28
      %p34 = scmp.eq.s32.totalorder %s15, 0
      %p35 = por %p33, %p34
      %p36 = scmp.ne.s32.totalorder %s25, %s28
      %p37 = scmp.eq.s32.totalorder %s20, 1
      %p38 = por %p36, %p37
      %p39 = scmp.ne.s32.totalorder %s28, %s29
      %p40 = scmp.eq.s32.totalorder %s20, 0
      %p41 = por %p39, %p40
      %p42 = scmp.ne.s32.totalorder %s28, %s29
      %p43 = scmp.eq.s32.totalorder %s21, 1
      %p44 = por %p42, %p43
      %p46 = scmp.ne.s32.totalorder %s29, %s45
      %p47 = scmp.eq.s32.totalorder %s21, 0
      %p48 = por %p46, %p47
      %s50 = sadd.s32 %s49, 1
      %p53 = scmp.eq.s32.totalorder %s15, 1
      %p54 = scmp.ne.s32.totalorder %s49, %s51
      %p55 = scmp.eq.s32.totalorder %s15, 0
      %p56 = por %p54, %p55
      %p57 = scmp.ne.s32.totalorder %s49, %s51
      %p58 = scmp.eq.s32.totalorder %s20, 1
      %p59 = por %p57, %p58
      %p60 = scmp.ne.s32.totalorder %s51, %s52
      %p61 = scmp.eq.s32.totalorder %s20, 0
      %p62 = por %p60, %p61
      %p63 = scmp.ne.s32.totalorder %s51, %s52
      %p64 = scmp.eq.s32.totalorder %s21, 1
      %p65 = por %p63, %p64
      %p67 = scmp.ne.s32.totalorder %s52, %s66
      %p68 = scmp.eq.s32.totalorder %s21, 0
      %p69 = por %p67, %p68
      %s71 = sadd.s32 %s70, 1
      %p74 = scmp.eq.s32.totalorder %s15, 1
      %p75 = scmp.ne.s32.totalorder %s70, %s72
      %p76 = scmp.eq.s32.totalorder %s15, 0
      %p77 = por %p75, %p76
      %p78 = scmp.ne.s32.totalorder %s70, %s72
      %p79 = scmp.eq.s32.totalorder %s20, 1
      %p80 = por %p78, %p79
      %p81 = scmp.ne.s32.totalorder %s72, %s73
      %p82 = scmp.eq.s32.totalorder %s20, 0
      %p83 = por %p81, %p82
      %p84 = scmp.ne.s32.totalorder %s72, %s73
      %p85 = scmp.eq.s32.totalorder %s21, 1
      %p86 = por %p84, %p85
      %p88 = scmp.ne.s32.totalorder %s73, %s87
      %p89 = scmp.eq.s32.totalorder %s21, 0
      %p90 = por %p88, %p89
      %s92 = sadd.s32 %s91, 1
      %p95 = scmp.eq.s32.totalorder %s15, 1
      %p96 = scmp.ne.s32.totalorder %s91, %s93
      %p97 = scmp.eq.s32.totalorder %s15, 0
      %p98 = por %p96, %p97
      %p99 = scmp.ne.s32.totalorder %s91, %s93
      %p100 = scmp.eq.s32.totalorder %s20, 1
      %p101 = por %p99, %p100
      %p102 = scmp.ne.s32.totalorder %s93, %s94
      %p103 = scmp.eq.s32.totalorder %s20, 0
      %p104 = por %p102, %p103
      %p105 = scmp.ne.s32.totalorder %s93, %s94
      %p106 = scmp.eq.s32.totalorder %s21, 1
      %p107 = por %p105, %p106
      %p109 = scmp.ne.s32.totalorder %s94, %s108
      %p110 = scmp.eq.s32.totalorder %s21, 0
      %p111 = por %p109, %p110
      %s113 = sadd.s32 %s112, 1
      %p116 = scmp.eq.s32.totalorder %s15, 1
      %p117 = scmp.ne.s32.totalorder %s112, %s114
      %p118 = scmp.eq.s32.totalorder %s15, 0
      %p119 = por %p117, %p118
      %p120 = scmp.ne.s32.totalorder %s112, %s114
      %p121 = scmp.eq.s32.totalorder %s20, 1
      %p122 = por %p120, %p121
      %p123 = scmp.ne.s32.totalorder %s114, %s115
      %p124 = scmp.eq.s32.totalorder %s20, 0
      %p125 = por %p123, %p124
      %p126 = scmp.ne.s32.totalorder %s114, %s115
      %p127 = scmp.eq.s32.totalorder %s21, 1
      %p128 = por %p126, %p127
      %p130 = scmp.ne.s32.totalorder %s115, %s129
      %p131 = scmp.eq.s32.totalorder %s21, 0
      %p132 = por %p130, %p131
      %s134 = sadd.s32 %s133, 1
      %p137 = scmp.eq.s32.totalorder %s15, 1
      %p138 = scmp.ne.s32.totalorder %s133, %s135
      %p139 = scmp.eq.s32.totalorder %s15, 0
      %p140 = por %p138, %p139
      %p141 = scmp.ne.s32.totalorder %s133, %s135
      %p142 = scmp.eq.s32.totalorder %s20, 1
      %p143 = por %p141, %p142
      %p144 = scmp.ne.s32.totalorder %s135, %s136
      %p145 = scmp.eq.s32.totalorder %s20, 0
      %p146 = por %p144, %p145
      %p147 = scmp.ne.s32.totalorder %s135, %s136
      %p148 = scmp.eq.s32.totalorder %s21, 1
      %p149 = por %p147, %p148
      %p151 = scmp.ne.s32.totalorder %s136, %s150
      %p152 = scmp.eq.s32.totalorder %s21, 0
      %p153 = por %p151, %p152
      %s154 = ssub.s32 %s15, %s22
      %p155 = scmp.eq.s32.totalorder %s154, 0
      %s157 = sadd.s32 %s156, 1
      %s158 = scalar_select %p155, %s156, %s157
      %p161 = pneg %p155
      %p162 = scmp.eq.s32.totalorder %s15, 1
      %p163 = por %p161, %p162
      %p164 = scmp.ne.s32.totalorder %s156, %s159
      %p165 = scmp.eq.s32.totalorder %s15, 0
      %p166 = por %p164, %p165
      %p167 = scmp.ne.s32.totalorder %s156, %s159
      %p168 = scmp.eq.s32.totalorder %s20, 1
      %p169 = por %p167, %p168
      %p170 = scmp.ne.s32.totalorder %s159, %s160
      %p171 = scmp.eq.s32.totalorder %s20, 0
      %p172 = por %p170, %p171
      %p173 = scmp.ne.s32.totalorder %s159, %s160
      %p174 = scmp.eq.s32.totalorder %s21, 1
      %p175 = por %p173, %p174
      %p177 = scmp.ne.s32.totalorder %s160, %s176
      %p178 = scmp.eq.s32.totalorder %s21, 0
      %p179 = por %p177, %p178
      %p180 = scmp.le.s32.totalorder 1, %s15
      %p181 = scmp.lt.s32.totalorder %s15, 3
      %p182 = pnand %p180, %p181
      %p183 = pneg %p182
      // Predicated region
      $region9: #{tpu_custom_call.1} parent=5 // pred_check
        _
      $region10: #{tpu_custom_call.1} parent=5 // pred_check_branch
        %185 = sbr.rel (%p182) target = $region12
      $region11: #{tpu_custom_call.1} parent=5 // pred_region
        %s186 = ssub.s32 %s15, 1
        // Predicated region
        $region13: #{tpu_custom_call.1} parent=11 // pred_check
          %p187 = pneg %p62
        $region14: #{tpu_custom_call.1} parent=11 // pred_check_branch
          %189 = sbr.rel (%p187) target = $region16
        $region15: #{tpu_custom_call.1} parent=11 // pred_region
          _
        $region16: #{tpu_custom_call.1} parent=11 // pred_fallthru
          _
        // Predicated region
        $region17: #{tpu_custom_call.1} parent=11 // pred_check
          %p190 = pneg %p83
        $region18: #{tpu_custom_call.1} parent=11 // pred_check_branch
          %192 = sbr.rel (%p190) target = $region20
        $region19: #{tpu_custom_call.1} parent=11 // pred_region
          _
        $region20: #{tpu_custom_call.1} parent=11 // pred_fallthru
          _
        // Predicated region
        $region21: #{tpu_custom_call.1} parent=11 // pred_check
          %p193 = pneg %p104
        $region22: #{tpu_custom_call.1} parent=11 // pred_check_branch
          %195 = sbr.rel (%p193) target = $region24
        $region23: #{tpu_custom_call.1} parent=11 // pred_region
          _
        $region24: #{tpu_custom_call.1} parent=11 // pred_fallthru
          _
        // Predicated region
        $region25: #{tpu_custom_call.1} parent=11 // pred_check
          %p196 = pneg %p125
        $region26: #{tpu_custom_call.1} parent=11 // pred_check_branch
          %198 = sbr.rel (%p196) target = $region28
        $region27: #{tpu_custom_call.1} parent=11 // pred_region
          _
        $region28: #{tpu_custom_call.1} parent=11 // pred_fallthru
          _
        // Predicated region
        $region29: #{tpu_custom_call.1} parent=11 // pred_check
          %p199 = pneg %p146
        $region30: #{tpu_custom_call.1} parent=11 // pred_check_branch
          %201 = sbr.rel (%p199) target = $region32
        $region31: #{tpu_custom_call.1} parent=11 // pred_region
          _
        $region32: #{tpu_custom_call.1} parent=11 // pred_fallthru
          _
      $region12: #{tpu_custom_call.1} parent=5 // pred_fallthru
        _
      %p202 = scmp.lt.s32.totalorder %s15, 2
      // Predicated region
      $region33: #{tpu_custom_call.1} parent=5 // pred_check
        %p203 = pneg %p202
      $region34: #{tpu_custom_call.1} parent=5 // pred_check_branch
        %205 = sbr.rel (%p203) target = $region36
      $region35: #{tpu_custom_call.1} parent=5 // pred_region
        // Predicated region
        $region37: #{tpu_custom_call.1} parent=35 // pred_check
          %p206 = pneg %p35
        $region38: #{tpu_custom_call.1} parent=35 // pred_check_branch
          %208 = sbr.rel (%p206) target = $region40
        $region39: #{tpu_custom_call.1} parent=35 // pred_region
          %p209 = scmp.lt.s32.totalorder %s15, 1
          %s210 = scalar_select %p209, %s15, 1
          %s211 = smul.addr %s210, 6
          %s212 = smul.addr %s211, 8
          %s213 = scalar_lea.vmem %s0, %s212
        $region40: #{tpu_custom_call.1} parent=35 // pred_fallthru
          _
      $region36: #{tpu_custom_call.1} parent=5 // pred_fallthru
        _
      %p214 = scmp.le.s32.totalorder 1, %s15
      %p215 = scmp.lt.s32.totalorder %s15, 3
      %p216 = pnand %p214, %p215
      %p217 = pneg %p216
      // Predicated region
      $region41: #{tpu_custom_call.1} parent=5 // pred_check
        _
      $region42: #{tpu_custom_call.1} parent=5 // pred_check_branch
        %219 = sbr.rel (%p216) target = $region44
      $region43: #{tpu_custom_call.1} parent=5 // pred_region
        %s220 = ssub.s32 %s15, 1
        %p221 = scmp.lt.s32.totalorder %s20, 1
        %s222 = scalar_select %p221, %s20, 1
        %s223 = smul.addr %s222, 6
        %s224 = smul.addr %s223, 8
        %s225 = scalar_lea.vmem %s0, %s224
        %p226 = pneg %p41
        %p227 = pneg %p38
        %p228 = pneg %p62
        %p229 = pneg %p59
        %p230 = pneg %p83
        %p231 = pneg %p80
        %p232 = pneg %p104
        %p233 = pneg %p101
        %p234 = pneg %p125
        %p235 = pneg %p122
        %p236 = pneg %p146
        %p237 = pneg %p143
        %p238 = pneg %p172
        %p239 = pneg %p169
        %s240 = sand.u32 %s159, 1
        %s241 = scalar_lea.sflag [#allocation3], %s240
        %s242 = sand.u32 %s159, 1
        %s243 = smul.addr %s242, 40
        %s244 = scalar_lea.vmem [#allocation2], %s243
        %p245 = scmp.lt.s32.totalorder %s20, 1
        %s246 = scalar_select %p245, %s20, 1
        %s247 = smul.addr %s246, 6
        %s248 = smul.addr %s247, 8
        %s249 = scalar_lea.vmem %s0, %s248
        %v251 = vld [vmem:[%s249] sm:$0xff]
        %v252 = vld [vmem:[%s249 + $0x8] sm:$0xff]
        %v253 = vld [vmem:[%s249 + $0x10] sm:$0xff]
        %v254 = vld [vmem:[%s249 + $0x18] sm:$0xff]
        %v255 = vld [vmem:[%s249 + $0x20] sm:$0xff]
        %v256 = vld [vmem:[%s249 + $0x28] sm:$0xff]
        %v257 = vpack.c.bf16 %v251, %v251
        %v258 = vpack.c.bf16 %v252, %v252
        %v259 = vpack.c.bf16 %v253, %v253
        %v260 = vpack.c.bf16 %v254, %v254
        %v261 = vpack.c.bf16 %v255, %v255
        %v262 = vpack.c.bf16 %v256, %v256
        %v263 = vld [vmem:[%s1] sm:$0xf]
        %v264 = vld [vmem:[%s1 + $0x4] sm:$0xf]
        %v265 = vld [vmem:[%s1 + $0x8] sm:$0xf]
        %v266 = vld [vmem:[%s1 + $0xc] sm:$0xf]
        %v267 = vld [vmem:[%s1 + $0x10] sm:$0xf]
        %v268 = vld [vmem:[%s1 + $0x14] sm:$0xf]
        %v269 = vld [vmem:[%s1 + $0x18] sm:$0xf]
        %v270 = vld [vmem:[%s1 + $0x1c] sm:$0xf]
        %v277 = vunpack.c.l.b16 %v257
        %v278 = vunpack.c.l.b16 %v258
        %v279 = vunpack.c.l.b16 %v259
        %v280 = vunpack.c.l.b16 %v260
        %v281 = vunpack.c.l.b16 %v261
        %v282 = vunpack.c.l.b16 %v262
        %v283 = vpack.c.b16 %v278, %v277
        %v284 = vpack.c.b16 %v280, %v279
        %v285 = vpack.c.b16 %v282, %v281
        %v294 = vunpack.c.l.b16 %v263
        %v295 = vunpack.c.l.b16 %v264
        %v296 = vunpack.c.l.b16 %v265
        %v297 = vunpack.c.l.b16 %v266
        %v298 = vunpack.c.l.b16 %v267
        %v299 = vunpack.c.l.b16 %v268
        %v300 = vunpack.c.l.b16 %v269
        %v301 = vunpack.c.l.b16 %v270
        %v302 = vpack.c.b16 %v295, %v294
        %v303 = vpack.c.b16 %v297, %v296
        %v304 = vpack.c.b16 %v299, %v298
        %v305 = vpack.c.b16 %v301, %v300
        %vm310 = vcmask 523264
        %v312 = vsel %vm310, %v283, 0
        %v315 = vsel %vm310, %v284, 0
        %v318 = vsel %vm310, %v285, 0
        %320 = vmatpush.bf16.msra.mxu0 0
        %321 = vmatpush.bf16.msra.mxu0 0
        %322 = vmatpush.bf16.msra.mxu0 0
        %323 = vmatpush.bf16.msra.mxu0 0
        %324 = vmatpush.bf16.msra.mxu0 %v305
        %325 = vmatpush.bf16.msra.mxu0 %v304
        %326 = vmatpush.bf16.msra.mxu0 %v303
        %327 = vmatpush.bf16.msra.mxu0 %v302
        %328 = vmatmul.bf16.gmra.mxu0 %v312
        %v329 = vpop.f32.mrf.mxu0
        %v330 = vadd.f32 0.0, %v329
        %v331 = vpop.f32.mrf.mxu0
        %v332 = vadd.f32 0.0, %v331
        %333 = vmatmul.bf16.gmra.mxu0 %v315
        %v334 = vpop.f32.mrf.mxu0
        %v335 = vadd.f32 0.0, %v334
        %v336 = vpop.f32.mrf.mxu0
        %v337 = vadd.f32 0.0, %v336
        %338 = vmatmul.bf16.gmra.mxu0 %v318
        %v339 = vpop.f32.mrf.mxu0
        %v340 = vadd.f32 0.0, %v339
        %v341 = vpop.f32.mrf.mxu0
        %342 = vdwg.mxu0
        %v343 = vld [vmem:[%s2] sm:$0xf]
        %v344 = vld [vmem:[%s2 + $0x4] sm:$0xf]
        %v345 = vld [vmem:[%s2 + $0x8] sm:$0xf]
        %v346 = vld [vmem:[%s2 + $0xc] sm:$0xf]
        %v347 = vld [vmem:[%s2 + $0x10] sm:$0xf]
        %v348 = vld [vmem:[%s2 + $0x14] sm:$0xf]
        %v349 = vld [vmem:[%s2 + $0x18] sm:$0xf]
        %v350 = vld [vmem:[%s2 + $0x1c] sm:$0xf]
        %v359 = vunpack.c.l.b16 %v343
        %v360 = vunpack.c.l.b16 %v344
        %v361 = vunpack.c.l.b16 %v345
        %v362 = vunpack.c.l.b16 %v346
        %v363 = vunpack.c.l.b16 %v347
        %v364 = vunpack.c.l.b16 %v348
        %v365 = vunpack.c.l.b16 %v349
        %v366 = vunpack.c.l.b16 %v350
        %v367 = vpack.c.b16 %v360, %v359
        %v368 = vpack.c.b16 %v362, %v361
        %v369 = vpack.c.b16 %v364, %v363
        %v370 = vpack.c.b16 %v366, %v365
        %375 = vmatpush.bf16.msra.mxu0 0
        %376 = vmatpush.bf16.msra.mxu0 0
        %377 = vmatpush.bf16.msra.mxu0 0
        %378 = vmatpush.bf16.msra.mxu0 0
        %379 = vmatpush.bf16.msra.mxu0 %v370
        %380 = vmatpush.bf16.msra.mxu0 %v369
        %381 = vmatpush.bf16.msra.mxu0 %v368
        %382 = vmatpush.bf16.msra.mxu0 %v367
        %383 = vmatmul.bf16.gmra.mxu0 %v312
        %v384 = vpop.f32.mrf.mxu0
        %v385 = vadd.f32 0.0, %v384
        %v386 = vpop.f32.mrf.mxu0
        %v387 = vadd.f32 0.0, %v386
        %388 = vmatmul.bf16.gmra.mxu0 %v315
        %v389 = vpop.f32.mrf.mxu0
        %v390 = vadd.f32 0.0, %v389
        %v391 = vpop.f32.mrf.mxu0
        %v392 = vadd.f32 0.0, %v391
        %393 = vmatmul.bf16.gmra.mxu0 %v318
        %v394 = vpop.f32.mrf.mxu0
        %v395 = vadd.f32 0.0, %v394
        %v396 = vpop.f32.mrf.mxu0
        %v397 = vadd.f32 0.0, %v396
        %398 = vdwg.mxu0
        %v399 = vld [vmem:[%s3] sm:$0xf]
        %v400 = vld [vmem:[%s3 + $0x4] sm:$0xf]
        %v401 = vld [vmem:[%s3 + $0x8] sm:$0xf]
        %v402 = vld [vmem:[%s3 + $0xc] sm:$0xf]
        %v403 = vld [vmem:[%s3 + $0x10] sm:$0xf]
        %v404 = vld [vmem:[%s3 + $0x14] sm:$0xf]
        %v405 = vld [vmem:[%s3 + $0x18] sm:$0xf]
        %v406 = vld [vmem:[%s3 + $0x1c] sm:$0xf]
        %v415 = vunpack.c.l.b16 %v399
        %v416 = vunpack.c.l.b16 %v400
        %v417 = vunpack.c.l.b16 %v401
        %v418 = vunpack.c.l.b16 %v402
        %v419 = vunpack.c.l.b16 %v403
        %v420 = vunpack.c.l.b16 %v404
        %v421 = vunpack.c.l.b16 %v405
        %v422 = vunpack.c.l.b16 %v406
        %v423 = vpack.c.b16 %v416, %v415
        %v424 = vpack.c.b16 %v418, %v417
        %v425 = vpack.c.b16 %v420, %v419
        %v426 = vpack.c.b16 %v422, %v421
        %431 = vmatpush.bf16.msra.mxu0 0
        %432 = vmatpush.bf16.msra.mxu0 0
        %433 = vmatpush.bf16.msra.mxu0 0
        %434 = vmatpush.bf16.msra.mxu0 0
        %435 = vmatpush.bf16.msra.mxu0 %v426
        %436 = vmatpush.bf16.msra.mxu0 %v425
        %437 = vmatpush.bf16.msra.mxu0 %v424
        %438 = vmatpush.bf16.msra.mxu0 %v423
        %439 = vmatmul.bf16.gmra.mxu0 %v312
        %v440 = vpop.f32.mrf.mxu0
        %v441 = vadd.f32 0.0, %v440
        %v442 = vpop.f32.mrf.mxu0
        %v443 = vadd.f32 0.0, %v442
        %444 = vmatmul.bf16.gmra.mxu0 %v315
        %v445 = vpop.f32.mrf.mxu0
        %v446 = vadd.f32 0.0, %v445
        %v447 = vpop.f32.mrf.mxu0
        %v448 = vadd.f32 0.0, %v447
        %449 = vmatmul.bf16.gmra.mxu0 %v318
        %v450 = vpop.f32.mrf.mxu0
        %v451 = vadd.f32 0.0, %v450
        %v452 = vpop.f32.mrf.mxu0
        %v453 = vadd.f32 0.0, %v452
        %454 = vdwg.mxu0
        %v455 = vpack.c.bf16 %v330, %v330
        %v456 = vpack.c.bf16 %v332, %v332
        %v457 = vpack.c.bf16 %v335, %v335
        %v458 = vpack.c.bf16 %v337, %v337
        %v459 = vpack.c.bf16 %v340, %v340
        %v460 = vpack.c.bf16 %v385, %v385
        %v461 = vpack.c.bf16 %v387, %v387
        %v462 = vpack.c.bf16 %v390, %v390
        %v463 = vpack.c.bf16 %v392, %v392
        %v464 = vpack.c.bf16 %v395, %v395
        %v465 = vpack.c.bf16 %v397, %v397
        %v471 = vunpack.c.l.b16 %v455
        %v472 = vunpack.c.l.b16 %v456
        %v473 = vunpack.c.l.b16 %v457
        %v474 = vunpack.c.l.b16 %v458
        %v475 = vunpack.c.l.b16 %v459
        %v476 = vpack.c.b16 %v472, %v471
        %v477 = vpack.c.b16 %v474, %v473
        %v478 = vpack.c.b16 %v475, %v475
        %v485 = vunpack.c.l.b16 %v460
        %v486 = vunpack.c.l.b16 %v461
        %v487 = vunpack.c.l.b16 %v462
        %v488 = vunpack.c.l.b16 %v463
        %v489 = vunpack.c.l.b16 %v464
        %v490 = vunpack.c.l.b16 %v465
        %v491 = vpack.c.b16 %v486, %v485
        %v492 = vpack.c.b16 %v488, %v487
        %v493 = vpack.c.b16 %v490, %v489
        %vm494 = vcmask 64512
        %v496 = vsel %vm494, %v476, 0
        %v499 = vsel %vm494, %v477, 0
        %v502 = vsel %vm494, %v478, 0
        %v505 = vsel %vm494, %v491, 0
        %v508 = vsel %vm494, %v492, 0
        %v511 = vsel %vm494, %v493, 0
        %513 = vmatpush.bf16.xpose.msra.mxu0 0
        %514 = vmatpush.bf16.xpose.msra.mxu0 0
        %515 = vmatpush.bf16.xpose.msra.mxu0 0
        %516 = vmatpush.bf16.xpose.msra.mxu0 0
        %517 = vmatpush.bf16.xpose.msra.mxu0 0
        %518 = vmatpush.bf16.xpose.msra.mxu0 %v511
        %519 = vmatpush.bf16.xpose.msra.mxu0 %v508
        %520 = vmatpush.bf16.xpose.msra.mxu0 %v505
        %521 = vmatmul.bf16.gmra.mxu0 %v496
        %v522 = vpop.f32.mrf.mxu0
        %v523 = vadd.f32 0.0, %v522
        %v524 = vpop.f32.mrf.mxu0
        %v525 = vadd.f32 0.0, %v524
        %526 = vmatmul.bf16.gmra.mxu0 %v499
        %v527 = vpop.f32.mrf.mxu0
        %v528 = vadd.f32 0.0, %v527
        %v529 = vpop.f32.mrf.mxu0
        %v530 = vadd.f32 0.0, %v529
        %531 = vmatmul.bf16.gmra.mxu0 %v502
        %v532 = vpop.f32.mrf.mxu0
        %v533 = vadd.f32 0.0, %v532
        %v534 = vpop.f32.mrf.mxu0
        %535 = vdwg.mxu0
        %vm536 = vcmask 392192
        %v537 = vsel %vm536, %v523, -inf
        %538 = vmax.xlane.f32.xlu0 %v537
        %v539 = vpop.xlane.xlu0 %538
        %v540 = vsel %vm536, %v525, -inf
        %541 = vmax.xlane.f32.xlu0 %v540
        %v542 = vpop.xlane.xlu0 %541
        %v543 = vsel %vm536, %v528, -inf
        %544 = vmax.xlane.f32.xlu0 %v543
        %v545 = vpop.xlane.xlu0 %544
        %v546 = vsel %vm536, %v530, -inf
        %547 = vmax.xlane.f32.xlu0 %v546
        %v548 = vpop.xlane.xlu0 %547
        %v549 = vsel %vm536, %v533, -inf
        %550 = vmax.xlane.f32.xlu0 %v549
        %v551 = vpop.xlane.xlu0 %550
        %v552 = vsub.f32 %v523, %v539
        %v553 = vsub.f32 %v525, %v542
        %v554 = vsub.f32 %v528, %v545
        %v555 = vsub.f32 %v530, %v548
        %v556 = vsub.f32 %v533, %v551
        %v557 = vmul.f32 %v552, 1.442695
        %v558 = vpow.pop %v557
        %v559 = vmul.f32 %v553, 1.442695
        %v560 = vpow.pop %v559
        %v561 = vmul.f32 %v554, 1.442695
        %v562 = vpow.pop %v561
        %v563 = vmul.f32 %v555, 1.442695
        %v564 = vpow.pop %v563
        %v565 = vmul.f32 %v556, 1.442695
        %v566 = vpow.pop %v565
        %v567 = vsel %vm536, %v558, 0.0
        %568 = vadd.xlane.f32.xlu0 %v567
        %v569 = vpop.xlane.xlu0 %568
        %v570 = vsel %vm536, %v560, 0.0
        %571 = vadd.xlane.f32.xlu0 %v570
        %v572 = vpop.xlane.xlu0 %571
        %v573 = vsel %vm536, %v562, 0.0
        %574 = vadd.xlane.f32.xlu0 %v573
        %v575 = vpop.xlane.xlu0 %574
        %v576 = vsel %vm536, %v564, 0.0
        %577 = vadd.xlane.f32.xlu0 %v576
        %v578 = vpop.xlane.xlu0 %577
        %v579 = vsel %vm536, %v566, 0.0
        %580 = vadd.xlane.f32.xlu0 %v579
        %v581 = vpop.xlane.xlu0 %580
        %v582 = vrcp.pop %v569
        %v583 = vmul.f32 %v569, %v582
        %v584 = vsub.f32 1.0, %v583
        %v585 = vmul.f32 %v582, %v584
        %v586 = vadd.f32 %v582, %v585
        %vm587 = vweird.f32 %v569
        %vm588 = vweird.f32 %v582
        %vm589 = vmor %vm587, %vm588
        %v590 = vsel %vm589, %v582, %v586
        %v591 = vand.u32 2147483647, %v569
        %vm592 = vcmp.eq.f32.partialorder %v591, 8.507059e+37
        %v593 = vand.u32 %v569, 2147483648
        %v594 = vor.u32 1.1754944e-38, %v593
        %v595 = vsel %vm592, %v594, %v590
        %v596 = vmul.f32 %v558, %v595
        %v597 = vrcp.pop %v572
        %v598 = vmul.f32 %v572, %v597
        %v599 = vsub.f32 1.0, %v598
        %v600 = vmul.f32 %v597, %v599
        %v601 = vadd.f32 %v597, %v600
        %vm602 = vweird.f32 %v572
        %vm603 = vweird.f32 %v597
        %vm604 = vmor %vm602, %vm603
        %v605 = vsel %vm604, %v597, %v601
        %v606 = vand.u32 2147483647, %v572
        %vm607 = vcmp.eq.f32.partialorder %v606, 8.507059e+37
        %v608 = vand.u32 %v572, 2147483648
        %v609 = vor.u32 1.1754944e-38, %v608
        %v610 = vsel %vm607, %v609, %v605
        %v611 = vmul.f32 %v560, %v610
        %v612 = vrcp.pop %v575
        %v613 = vmul.f32 %v575, %v612
        %v614 = vsub.f32 1.0, %v613
        %v615 = vmul.f32 %v612, %v614
        %v616 = vadd.f32 %v612, %v615
        %vm617 = vweird.f32 %v575
        %vm618 = vweird.f32 %v612
        %vm619 = vmor %vm617, %vm618
        %v620 = vsel %vm619, %v612, %v616
        %v621 = vand.u32 2147483647, %v575
        %vm622 = vcmp.eq.f32.partialorder %v621, 8.507059e+37
        %v623 = vand.u32 %v575, 2147483648
        %v624 = vor.u32 1.1754944e-38, %v623
        %v625 = vsel %vm622, %v624, %v620
        %v626 = vmul.f32 %v562, %v625
        %v627 = vrcp.pop %v578
        %v628 = vmul.f32 %v578, %v627
        %v629 = vsub.f32 1.0, %v628
        %v630 = vmul.f32 %v627, %v629
        %v631 = vadd.f32 %v627, %v630
        %vm632 = vweird.f32 %v578
        %vm633 = vweird.f32 %v627
        %vm634 = vmor %vm632, %vm633
        %v635 = vsel %vm634, %v627, %v631
        %v636 = vand.u32 2147483647, %v578
        %vm637 = vcmp.eq.f32.partialorder %v636, 8.507059e+37
        %v638 = vand.u32 %v578, 2147483648
        %v639 = vor.u32 1.1754944e-38, %v638
        %v640 = vsel %vm637, %v639, %v635
        %v641 = vmul.f32 %v564, %v640
        %v642 = vrcp.pop %v581
        %v643 = vmul.f32 %v581, %v642
        %v644 = vsub.f32 1.0, %v643
        %v645 = vmul.f32 %v642, %v644
        %v646 = vadd.f32 %v642, %v645
        %vm647 = vweird.f32 %v581
        %vm648 = vweird.f32 %v642
        %vm649 = vmor %vm647, %vm648
        %v650 = vsel %vm649, %v642, %v646
        %v651 = vand.u32 2147483647, %v581
        %vm652 = vcmp.eq.f32.partialorder %v651, 8.507059e+37
        %v653 = vand.u32 %v581, 2147483648
        %v654 = vor.u32 1.1754944e-38, %v653
        %v655 = vsel %vm652, %v654, %v650
        %v656 = vmul.f32 %v566, %v655
        %v657 = vpack.c.bf16 %v596, %v596
        %v658 = vpack.c.bf16 %v611, %v611
        %v659 = vpack.c.bf16 %v626, %v626
        %v660 = vpack.c.bf16 %v641, %v641
        %v661 = vpack.c.bf16 %v656, %v656
        %v662 = vpack.c.bf16 %v441, %v441
        %v663 = vpack.c.bf16 %v443, %v443
        %v664 = vpack.c.bf16 %v446, %v446
        %v665 = vpack.c.bf16 %v448, %v448
        %v666 = vpack.c.bf16 %v451, %v451
        %v667 = vpack.c.bf16 %v453, %v453
        %v673 = vunpack.c.l.b16 %v657
        %v674 = vunpack.c.l.b16 %v658
        %v675 = vunpack.c.l.b16 %v659
        %v676 = vunpack.c.l.b16 %v660
        %v677 = vunpack.c.l.b16 %v661
        %v678 = vpack.c.b16 %v674, %v673
        %v679 = vpack.c.b16 %v676, %v675
        %v680 = vpack.c.b16 %v677, %v677
        %v687 = vunpack.c.l.b16 %v662
        %v688 = vunpack.c.l.b16 %v663
        %v689 = vunpack.c.l.b16 %v664
        %v690 = vunpack.c.l.b16 %v665
        %v691 = vunpack.c.l.b16 %v666
        %v692 = vunpack.c.l.b16 %v667
        %v693 = vpack.c.b16 %v688, %v687
        %v694 = vpack.c.b16 %v690, %v689
        %v695 = vpack.c.b16 %v692, %v691
        %v700 = vsel %vm536, %v678, 0
        %v703 = vsel %vm536, %v679, 0
        %v706 = vsel %vm536, %v680, 0
        %708 = vmatpush.bf16.msra.mxu0 0
        %709 = vmatpush.bf16.msra.mxu0 0
        %710 = vmatpush.bf16.msra.mxu0 0
        %711 = vmatpush.bf16.msra.mxu0 0
        %712 = vmatpush.bf16.msra.mxu0 0
        %713 = vmatpush.bf16.msra.mxu0 %v695
        %714 = vmatpush.bf16.msra.mxu0 %v694
        %715 = vmatpush.bf16.msra.mxu0 %v693
        %716 = vmatmul.bf16.gmra.mxu0 %v700
        %v717 = vpop.f32.mrf.mxu0
        %v718 = vadd.f32 0.0, %v717
        %v719 = vpop.f32.mrf.mxu0
        %v720 = vadd.f32 0.0, %v719
        %721 = vmatmul.bf16.gmra.mxu0 %v703
        %v722 = vpop.f32.mrf.mxu0
        %v723 = vadd.f32 0.0, %v722
        %v724 = vpop.f32.mrf.mxu0
        %v725 = vadd.f32 0.0, %v724
        %726 = vmatmul.bf16.gmra.mxu0 %v706
        %v727 = vpop.f32.mrf.mxu0
        %v728 = vadd.f32 0.0, %v727
        %v729 = vpop.f32.mrf.mxu0
        %730 = vdwg.mxu0
        %v731 = vld [vmem:[%s4] sm:$0xf]
        %v732 = vpack.c.bf16 %v718, %v718
        %v733 = vpack.c.bf16 %v720, %v720
        %v734 = vpack.c.bf16 %v723, %v723
        %v735 = vpack.c.bf16 %v725, %v725
        %v736 = vpack.c.bf16 %v728, %v728
        %s737 = scalar_lea.vmem %s1, 32
        %v738 = vld [vmem:[%s737] sm:$0xf]
        %v739 = vld [vmem:[%s737 + $0x4] sm:$0xf]
        %v740 = vld [vmem:[%s737 + $0x8] sm:$0xf]
        %v741 = vld [vmem:[%s737 + $0xc] sm:$0xf]
        %v742 = vld [vmem:[%s737 + $0x10] sm:$0xf]
        %v743 = vld [vmem:[%s737 + $0x14] sm:$0xf]
        %v744 = vld [vmem:[%s737 + $0x18] sm:$0xf]
        %v745 = vld [vmem:[%s737 + $0x1c] sm:$0xf]
        %v754 = vunpack.c.l.b16 %v738
        %v755 = vunpack.c.l.b16 %v739
        %v756 = vunpack.c.l.b16 %v740
        %v757 = vunpack.c.l.b16 %v741
        %v758 = vunpack.c.l.b16 %v742
        %v759 = vunpack.c.l.b16 %v743
        %v760 = vunpack.c.l.b16 %v744
        %v761 = vunpack.c.l.b16 %v745
        %v762 = vpack.c.b16 %v755, %v754
        %v763 = vpack.c.b16 %v757, %v756
        %v764 = vpack.c.b16 %v759, %v758
        %v765 = vpack.c.b16 %v761, %v760
        %770 = vmatpush.bf16.msra.mxu0 0
        %771 = vmatpush.bf16.msra.mxu0 0
        %772 = vmatpush.bf16.msra.mxu0 0
        %773 = vmatpush.bf16.msra.mxu0 0
        %774 = vmatpush.bf16.msra.mxu0 %v765
        %775 = vmatpush.bf16.msra.mxu0 %v764
        %776 = vmatpush.bf16.msra.mxu0 %v763
        %777 = vmatpush.bf16.msra.mxu0 %v762
        %778 = vmatmul.bf16.gmra.mxu0 %v312
        %v779 = vpop.f32.mrf.mxu0
        %v780 = vadd.f32 0.0, %v779
        %v781 = vpop.f32.mrf.mxu0
        %v782 = vadd.f32 0.0, %v781
        %783 = vmatmul.bf16.gmra.mxu0 %v315
        %v784 = vpop.f32.mrf.mxu0
        %v785 = vadd.f32 0.0, %v784
        %v786 = vpop.f32.mrf.mxu0
        %v787 = vadd.f32 0.0, %v786
        %788 = vmatmul.bf16.gmra.mxu0 %v318
        %v789 = vpop.f32.mrf.mxu0
        %v790 = vadd.f32 0.0, %v789
        %v791 = vpop.f32.mrf.mxu0
        %792 = vdwg.mxu0
        %s793 = scalar_lea.vmem %s2, 32
        %v794 = vld [vmem:[%s793] sm:$0xf]
        %v795 = vld [vmem:[%s793 + $0x4] sm:$0xf]
        %v796 = vld [vmem:[%s793 + $0x8] sm:$0xf]
        %v797 = vld [vmem:[%s793 + $0xc] sm:$0xf]
        %v798 = vld [vmem:[%s793 + $0x10] sm:$0xf]
        %v799 = vld [vmem:[%s793 + $0x14] sm:$0xf]
        %v800 = vld [vmem:[%s793 + $0x18] sm:$0xf]
        %v801 = vld [vmem:[%s793 + $0x1c] sm:$0xf]
        %v810 = vunpack.c.l.b16 %v794
        %v811 = vunpack.c.l.b16 %v795
        %v812 = vunpack.c.l.b16 %v796
        %v813 = vunpack.c.l.b16 %v797
        %v814 = vunpack.c.l.b16 %v798
        %v815 = vunpack.c.l.b16 %v799
        %v816 = vunpack.c.l.b16 %v800
        %v817 = vunpack.c.l.b16 %v801
        %v818 = vpack.c.b16 %v811, %v810
        %v819 = vpack.c.b16 %v813, %v812
        %v820 = vpack.c.b16 %v815, %v814
        %v821 = vpack.c.b16 %v817, %v816
        %826 = vmatpush.bf16.msra.mxu0 0
        %827 = vmatpush.bf16.msra.mxu0 0
        %828 = vmatpush.bf16.msra.mxu0 0
        %829 = vmatpush.bf16.msra.mxu0 0
        %830 = vmatpush.bf16.msra.mxu0 %v821
        %831 = vmatpush.bf16.msra.mxu0 %v820
        %832 = vmatpush.bf16.msra.mxu0 %v819
        %833 = vmatpush.bf16.msra.mxu0 %v818
        %834 = vmatmul.bf16.gmra.mxu0 %v312
        %v835 = vpop.f32.mrf.mxu0
        %v836 = vadd.f32 0.0, %v835
        %v837 = vpop.f32.mrf.mxu0
        %v838 = vadd.f32 0.0, %v837
        %839 = vmatmul.bf16.gmra.mxu0 %v315
        %v840 = vpop.f32.mrf.mxu0
        %v841 = vadd.f32 0.0, %v840
        %v842 = vpop.f32.mrf.mxu0
        %v843 = vadd.f32 0.0, %v842
        %844 = vmatmul.bf16.gmra.mxu0 %v318
        %v845 = vpop.f32.mrf.mxu0
        %v846 = vadd.f32 0.0, %v845
        %v847 = vpop.f32.mrf.mxu0
        %v848 = vadd.f32 0.0, %v847
        %849 = vdwg.mxu0
        %s850 = scalar_lea.vmem %s3, 32
        %v851 = vld [vmem:[%s850] sm:$0xf]
        %v852 = vld [vmem:[%s850 + $0x4] sm:$0xf]
        %v853 = vld [vmem:[%s850 + $0x8] sm:$0xf]
        %v854 = vld [vmem:[%s850 + $0xc] sm:$0xf]
        %v855 = vld [vmem:[%s850 + $0x10] sm:$0xf]
        %v856 = vld [vmem:[%s850 + $0x14] sm:$0xf]
        %v857 = vld [vmem:[%s850 + $0x18] sm:$0xf]
        %v858 = vld [vmem:[%s850 + $0x1c] sm:$0xf]
        %v867 = vunpack.c.l.b16 %v851
        %v868 = vunpack.c.l.b16 %v852
        %v869 = vunpack.c.l.b16 %v853
        %v870 = vunpack.c.l.b16 %v854
        %v871 = vunpack.c.l.b16 %v855
        %v872 = vunpack.c.l.b16 %v856
        %v873 = vunpack.c.l.b16 %v857
        %v874 = vunpack.c.l.b16 %v858
        %v875 = vpack.c.b16 %v868, %v867
        %v876 = vpack.c.b16 %v870, %v869
        %v877 = vpack.c.b16 %v872, %v871
        %v878 = vpack.c.b16 %v874, %v873
        %883 = vmatpush.bf16.msra.mxu0 0
        %884 = vmatpush.bf16.msra.mxu0 0
        %885 = vmatpush.bf16.msra.mxu0 0
        %886 = vmatpush.bf16.msra.mxu0 0
        %887 = vmatpush.bf16.msra.mxu0 %v878
        %888 = vmatpush.bf16.msra.mxu0 %v877
        %889 = vmatpush.bf16.msra.mxu0 %v876
        %890 = vmatpush.bf16.msra.mxu0 %v875
        %891 = vmatmul.bf16.gmra.mxu0 %v312
        %v892 = vpop.f32.mrf.mxu0
        %v893 = vadd.f32 0.0, %v892
        %v894 = vpop.f32.mrf.mxu0
        %v895 = vadd.f32 0.0, %v894
        %896 = vmatmul.bf16.gmra.mxu0 %v315
        %v897 = vpop.f32.mrf.mxu0
        %v898 = vadd.f32 0.0, %v897
        %v899 = vpop.f32.mrf.mxu0
        %v900 = vadd.f32 0.0, %v899
        %901 = vmatmul.bf16.gmra.mxu0 %v318
        %v902 = vpop.f32.mrf.mxu0
        %v903 = vadd.f32 0.0, %v902
        %v904 = vpop.f32.mrf.mxu0
        %v905 = vadd.f32 0.0, %v904
        %906 = vdwg.mxu0
        %v907 = vpack.c.bf16 %v780, %v780
        %v908 = vpack.c.bf16 %v782, %v782
        %v909 = vpack.c.bf16 %v785, %v785
        %v910 = vpack.c.bf16 %v787, %v787
        %v911 = vpack.c.bf16 %v790, %v790
        %v912 = vpack.c.bf16 %v836, %v836
        %v913 = vpack.c.bf16 %v838, %v838
        %v914 = vpack.c.bf16 %v841, %v841
        %v915 = vpack.c.bf16 %v843, %v843
        %v916 = vpack.c.bf16 %v846, %v846
        %v917 = vpack.c.bf16 %v848, %v848
        %v923 = vunpack.c.l.b16 %v907
        %v924 = vunpack.c.l.b16 %v908
        %v925 = vunpack.c.l.b16 %v909
        %v926 = vunpack.c.l.b16 %v910
        %v927 = vunpack.c.l.b16 %v911
        %v928 = vpack.c.b16 %v924, %v923
        %v929 = vpack.c.b16 %v926, %v925
        %v930 = vpack.c.b16 %v927, %v927
        %v937 = vunpack.c.l.b16 %v912
        %v938 = vunpack.c.l.b16 %v913
        %v939 = vunpack.c.l.b16 %v914
        %v940 = vunpack.c.l.b16 %v915
        %v941 = vunpack.c.l.b16 %v916
        %v942 = vunpack.c.l.b16 %v917
        %v943 = vpack.c.b16 %v938, %v937
        %v944 = vpack.c.b16 %v940, %v939
        %v945 = vpack.c.b16 %v942, %v941
        %v947 = vsel %vm494, %v928, 0
        %v950 = vsel %vm494, %v929, 0
        %v953 = vsel %vm494, %v930, 0
        %v956 = vsel %vm494, %v943, 0
        %v959 = vsel %vm494, %v944, 0
        %v962 = vsel %vm494, %v945, 0
        %964 = vmatpush.bf16.xpose.msra.mxu0 0
        %965 = vmatpush.bf16.xpose.msra.mxu0 0
        %966 = vmatpush.bf16.xpose.msra.mxu0 0
        %967 = vmatpush.bf16.xpose.msra.mxu0 0
        %968 = vmatpush.bf16.xpose.msra.mxu0 0
        %969 = vmatpush.bf16.xpose.msra.mxu0 %v962
        %970 = vmatpush.bf16.xpose.msra.mxu0 %v959
        %971 = vmatpush.bf16.xpose.msra.mxu0 %v956
        %972 = vmatmul.bf16.gmra.mxu0 %v947
        %v973 = vpop.f32.mrf.mxu0
        %v974 = vadd.f32 0.0, %v973
        %v975 = vpop.f32.mrf.mxu0
        %v976 = vadd.f32 0.0, %v975
        %977 = vmatmul.bf16.gmra.mxu0 %v950
        %v978 = vpop.f32.mrf.mxu0
        %v979 = vadd.f32 0.0, %v978
        %v980 = vpop.f32.mrf.mxu0
        %v981 = vadd.f32 0.0, %v980
        %982 = vmatmul.bf16.gmra.mxu0 %v953
        %v983 = vpop.f32.mrf.mxu0
        %v984 = vadd.f32 0.0, %v983
        %v985 = vpop.f32.mrf.mxu0
        %986 = vdwg.mxu0
        %v987 = vsel %vm536, %v974, -inf
        %988 = vmax.xlane.f32.xlu0 %v987
        %v989 = vpop.xlane.xlu0 %988
        %v990 = vsel %vm536, %v976, -inf
        %991 = vmax.xlane.f32.xlu0 %v990
        %v992 = vpop.xlane.xlu0 %991
        %v993 = vsel %vm536, %v979, -inf
        %994 = vmax.xlane.f32.xlu0 %v993
        %v995 = vpop.xlane.xlu0 %994
        %v996 = vsel %vm536, %v981, -inf
        %997 = vmax.xlane.f32.xlu0 %v996
        %v998 = vpop.xlane.xlu0 %997
        %v999 = vsel %vm536, %v984, -inf
        %1000 = vmax.xlane.f32.xlu0 %v999
        %v1001 = vpop.xlane.xlu0 %1000
        %v1002 = vsub.f32 %v974, %v989
        %v1003 = vsub.f32 %v976, %v992
        %v1004 = vsub.f32 %v979, %v995
        %v1005 = vsub.f32 %v981, %v998
        %v1006 = vsub.f32 %v984, %v1001
        %v1007 = vmul.f32 %v1002, 1.442695
        %v1008 = vpow.pop %v1007
        %v1009 = vmul.f32 %v1003, 1.442695
        %v1010 = vpow.pop %v1009
        %v1011 = vmul.f32 %v1004, 1.442695
        %v1012 = vpow.pop %v1011
        %v1013 = vmul.f32 %v1005, 1.442695
        %v1014 = vpow.pop %v1013
        %v1015 = vmul.f32 %v1006, 1.442695
        %v1016 = vpow.pop %v1015
        %v1017 = vsel %vm536, %v1008, 0.0
        %1018 = vadd.xlane.f32.xlu0 %v1017
        %v1019 = vpop.xlane.xlu0 %1018
        %v1020 = vsel %vm536, %v1010, 0.0
        %1021 = vadd.xlane.f32.xlu0 %v1020
        %v1022 = vpop.xlane.xlu0 %1021
        %v1023 = vsel %vm536, %v1012, 0.0
        %1024 = vadd.xlane.f32.xlu0 %v1023
        %v1025 = vpop.xlane.xlu0 %1024
        %v1026 = vsel %vm536, %v1014, 0.0
        %1027 = vadd.xlane.f32.xlu0 %v1026
        %v1028 = vpop.xlane.xlu0 %1027
        %v1029 = vsel %vm536, %v1016, 0.0
        %1030 = vadd.xlane.f32.xlu0 %v1029
        %v1031 = vpop.xlane.xlu0 %1030
        %v1032 = vrcp.pop %v1019
        %v1033 = vmul.f32 %v1019, %v1032
        %v1034 = vsub.f32 1.0, %v1033
        %v1035 = vmul.f32 %v1032, %v1034
        %v1036 = vadd.f32 %v1032, %v1035
        %vm1037 = vweird.f32 %v1019
        %vm1038 = vweird.f32 %v1032
        %vm1039 = vmor %vm1037, %vm1038
        %v1040 = vsel %vm1039, %v1032, %v1036
        %v1041 = vand.u32 2147483647, %v1019
        %vm1042 = vcmp.eq.f32.partialorder %v1041, 8.507059e+37
        %v1043 = vand.u32 %v1019, 2147483648
        %v1044 = vor.u32 1.1754944e-38, %v1043
        %v1045 = vsel %vm1042, %v1044, %v1040
        %v1046 = vmul.f32 %v1008, %v1045
        %v1047 = vrcp.pop %v1022
        %v1048 = vmul.f32 %v1022, %v1047
        %v1049 = vsub.f32 1.0, %v1048
        %v1050 = vmul.f32 %v1047, %v1049
        %v1051 = vadd.f32 %v1047, %v1050
        %vm1052 = vweird.f32 %v1022
        %vm1053 = vweird.f32 %v1047
        %vm1054 = vmor %vm1052, %vm1053
        %v1055 = vsel %vm1054, %v1047, %v1051
        %v1056 = vand.u32 2147483647, %v1022
        %vm1057 = vcmp.eq.f32.partialorder %v1056, 8.507059e+37
        %v1058 = vand.u32 %v1022, 2147483648
        %v1059 = vor.u32 1.1754944e-38, %v1058
        %v1060 = vsel %vm1057, %v1059, %v1055
        %v1061 = vmul.f32 %v1010, %v1060
        %v1062 = vrcp.pop %v1025
        %v1063 = vmul.f32 %v1025, %v1062
        %v1064 = vsub.f32 1.0, %v1063
        %v1065 = vmul.f32 %v1062, %v1064
        %v1066 = vadd.f32 %v1062, %v1065
        %vm1067 = vweird.f32 %v1025
        %vm1068 = vweird.f32 %v1062
        %vm1069 = vmor %vm1067, %vm1068
        %v1070 = vsel %vm1069, %v1062, %v1066
        %v1071 = vand.u32 2147483647, %v1025
        %vm1072 = vcmp.eq.f32.partialorder %v1071, 8.507059e+37
        %v1073 = vand.u32 %v1025, 2147483648
        %v1074 = vor.u32 1.1754944e-38, %v1073
        %v1075 = vsel %vm1072, %v1074, %v1070
        %v1076 = vmul.f32 %v1012, %v1075
        %v1077 = vrcp.pop %v1028
        %v1078 = vmul.f32 %v1028, %v1077
        %v1079 = vsub.f32 1.0, %v1078
        %v1080 = vmul.f32 %v1077, %v1079
        %v1081 = vadd.f32 %v1077, %v1080
        %vm1082 = vweird.f32 %v1028
        %vm1083 = vweird.f32 %v1077
        %vm1084 = vmor %vm1082, %vm1083
        %v1085 = vsel %vm1084, %v1077, %v1081
        %v1086 = vand.u32 2147483647, %v1028
        %vm1087 = vcmp.eq.f32.partialorder %v1086, 8.507059e+37
        %v1088 = vand.u32 %v1028, 2147483648
        %v1089 = vor.u32 1.1754944e-38, %v1088
        %v1090 = vsel %vm1087, %v1089, %v1085
        %v1091 = vmul.f32 %v1014, %v1090
        %v1092 = vrcp.pop %v1031
        %v1093 = vmul.f32 %v1031, %v1092
        %v1094 = vsub.f32 1.0, %v1093
        %v1095 = vmul.f32 %v1092, %v1094
        %v1096 = vadd.f32 %v1092, %v1095
        %vm1097 = vweird.f32 %v1031
        %vm1098 = vweird.f32 %v1092
        %vm1099 = vmor %vm1097, %vm1098
        %v1100 = vsel %vm1099, %v1092, %v1096
        %v1101 = vand.u32 2147483647, %v1031
        %vm1102 = vcmp.eq.f32.partialorder %v1101, 8.507059e+37
        %v1103 = vand.u32 %v1031, 2147483648
        %v1104 = vor.u32 1.1754944e-38, %v1103
        %v1105 = vsel %vm1102, %v1104, %v1100
        %v1106 = vmul.f32 %v1016, %v1105
        %v1107 = vpack.c.bf16 %v1046, %v1046
        %v1108 = vpack.c.bf16 %v1061, %v1061
        %v1109 = vpack.c.bf16 %v1076, %v1076
        %v1110 = vpack.c.bf16 %v1091, %v1091
        %v1111 = vpack.c.bf16 %v1106, %v1106
        %v1112 = vpack.c.bf16 %v893, %v893
        %v1113 = vpack.c.bf16 %v895, %v895
        %v1114 = vpack.c.bf16 %v898, %v898
        %v1115 = vpack.c.bf16 %v900, %v900
        %v1116 = vpack.c.bf16 %v903, %v903
        %v1117 = vpack.c.bf16 %v905, %v905
        %v1123 = vunpack.c.l.b16 %v1107
        %v1124 = vunpack.c.l.b16 %v1108
        %v1125 = vunpack.c.l.b16 %v1109
        %v1126 = vunpack.c.l.b16 %v1110
        %v1127 = vunpack.c.l.b16 %v1111
        %v1128 = vpack.c.b16 %v1124, %v1123
        %v1129 = vpack.c.b16 %v1126, %v1125
        %v1130 = vpack.c.b16 %v1127, %v1127
        %v1137 = vunpack.c.l.b16 %v1112
        %v1138 = vunpack.c.l.b16 %v1113
        %v1139 = vunpack.c.l.b16 %v1114
        %v1140 = vunpack.c.l.b16 %v1115
        %v1141 = vunpack.c.l.b16 %v1116
        %v1142 = vunpack.c.l.b16 %v1117
        %v1143 = vpack.c.b16 %v1138, %v1137
        %v1144 = vpack.c.b16 %v1140, %v1139
        %v1145 = vpack.c.b16 %v1142, %v1141
        %v1150 = vsel %vm536, %v1128, 0
        %v1153 = vsel %vm536, %v1129, 0
        %v1156 = vsel %vm536, %v1130, 0
        %1158 = vmatpush.bf16.msra.mxu0 0
        %1159 = vmatpush.bf16.msra.mxu0 0
        %1160 = vmatpush.bf16.msra.mxu0 0
        %1161 = vmatpush.bf16.msra.mxu0 0
        %1162 = vmatpush.bf16.msra.mxu0 0
        %1163 = vmatpush.bf16.msra.mxu0 %v1145
        %1164 = vmatpush.bf16.msra.mxu0 %v1144
        %1165 = vmatpush.bf16.msra.mxu0 %v1143
        %1166 = vmatmul.bf16.gmra.mxu0 %v1150
        %v1167 = vpop.f32.mrf.mxu0
        %v1168 = vadd.f32 0.0, %v1167
        %v1169 = vpop.f32.mrf.mxu0
        %v1170 = vadd.f32 0.0, %v1169
        %1171 = vmatmul.bf16.gmra.mxu0 %v1153
        %v1172 = vpop.f32.mrf.mxu0
        %v1173 = vadd.f32 0.0, %v1172
        %v1174 = vpop.f32.mrf.mxu0
        %v1175 = vadd.f32 0.0, %v1174
        %1176 = vmatmul.bf16.gmra.mxu0 %v1156
        %v1177 = vpop.f32.mrf.mxu0
        %v1178 = vadd.f32 0.0, %v1177
        %v1179 = vpop.f32.mrf.mxu0
        %1180 = vdwg.mxu0
        %s1181 = scalar_lea.vmem %s4, 4
        %v1182 = vld [vmem:[%s1181] sm:$0xf]
        %v1183 = vpack.c.bf16 %v1168, %v1168
        %v1184 = vpack.c.bf16 %v1170, %v1170
        %v1185 = vpack.c.bf16 %v1173, %v1173
        %v1186 = vpack.c.bf16 %v1175, %v1175
        %v1187 = vpack.c.bf16 %v1178, %v1178
        %v1193 = vunpack.c.l.b16 %v1183
        %v1194 = vunpack.c.l.b16 %v1184
        %v1195 = vunpack.c.l.b16 %v1185
        %v1196 = vunpack.c.l.b16 %v1186
        %v1197 = vunpack.c.l.b16 %v1187
        %v1198 = vpack.c.b16 %v1194, %v1193
        %v1199 = vpack.c.b16 %v1196, %v1195
        %v1200 = vpack.c.b16 %v1197, %v1197
        %v1202 = vsel %vm494, %v1198, 0
        %v1205 = vsel %vm494, %v1199, 0
        %v1208 = vsel %vm494, %v1200, 0
        %vm1210 = vcmask 1043456
        %v1212 = vsel %vm1210, %v1182, 0
        %1214 = vmatpush.bf16.msra.mxu0 0
        %1215 = vmatpush.bf16.msra.mxu0 0
        %1216 = vmatpush.bf16.msra.mxu0 0
        %1217 = vmatpush.bf16.msra.mxu0 0
        %1218 = vmatpush.bf16.msra.mxu0 0
        %1219 = vmatpush.bf16.msra.mxu0 0
        %1220 = vmatpush.bf16.msra.mxu0 0
        %1221 = vmatpush.bf16.msra.mxu0 %v1212
        %1222 = vmatmul.bf16.gmra.mxu0 %v1202
        %v1223 = vpop.f32.mrf.mxu0
        %v1224 = vadd.f32 0.0, %v1223
        %v1225 = vpop.f32.mrf.mxu0
        %v1226 = vadd.f32 0.0, %v1225
        %1227 = vmatmul.bf16.gmra.mxu0 %v1205
        %v1228 = vpop.f32.mrf.mxu0
        %v1229 = vadd.f32 0.0, %v1228
        %v1230 = vpop.f32.mrf.mxu0
        %v1231 = vadd.f32 0.0, %v1230
        %1232 = vmatmul.bf16.gmra.mxu0 %v1208
        %v1233 = vpop.f32.mrf.mxu0
        %v1234 = vadd.f32 0.0, %v1233
        %v1235 = vpop.f32.mrf.mxu0
        %1236 = vdwg.mxu0
        %v1242 = vunpack.c.l.b16 %v732
        %v1243 = vunpack.c.l.b16 %v733
        %v1244 = vunpack.c.l.b16 %v734
        %v1245 = vunpack.c.l.b16 %v735
        %v1246 = vunpack.c.l.b16 %v736
        %v1247 = vpack.c.b16 %v1243, %v1242
        %v1248 = vpack.c.b16 %v1245, %v1244
        %v1249 = vpack.c.b16 %v1246, %v1246
        %v1251 = vsel %vm494, %v1247, 0
        %v1254 = vsel %vm494, %v1248, 0
        %v1257 = vsel %vm494, %v1249, 0
        %v1260 = vsel %vm1210, %v731, 0
        %1262 = vmatpush.bf16.msra.mxu0 0
        %1263 = vmatpush.bf16.msra.mxu0 0
        %1264 = vmatpush.bf16.msra.mxu0 0
        %1265 = vmatpush.bf16.msra.mxu0 0
        %1266 = vmatpush.bf16.msra.mxu0 0
        %1267 = vmatpush.bf16.msra.mxu0 0
        %1268 = vmatpush.bf16.msra.mxu0 0
        %1269 = vmatpush.bf16.msra.mxu0 %v1260
        %1270 = vmatmul.bf16.gmra.mxu0 %v1251
        %v1271 = vpop.f32.mrf.mxu0
        %v1272 = vadd.f32 %v1224, %v1271
        %v1273 = vpop.f32.mrf.mxu0
        %v1274 = vadd.f32 %v1226, %v1273
        %1275 = vmatmul.bf16.gmra.mxu0 %v1254
        %v1276 = vpop.f32.mrf.mxu0
        %v1277 = vadd.f32 %v1229, %v1276
        %v1278 = vpop.f32.mrf.mxu0
        %v1279 = vadd.f32 %v1231, %v1278
        %1280 = vmatmul.bf16.gmra.mxu0 %v1257
        %v1281 = vpop.f32.mrf.mxu0
        %v1282 = vadd.f32 %v1234, %v1281
        %v1283 = vpop.f32.mrf.mxu0
        %1284 = vdwg.mxu0
        %s1285 = scalar_lea.vmem %s1, 64
        %v1286 = vld [vmem:[%s1285] sm:$0xf]
        %v1287 = vld [vmem:[%s1285 + $0x4] sm:$0xf]
        %v1288 = vld [vmem:[%s1285 + $0x8] sm:$0xf]
        %v1289 = vld [vmem:[%s1285 + $0xc] sm:$0xf]
        %v1290 = vld [vmem:[%s1285 + $0x10] sm:$0xf]
        %v1291 = vld [vmem:[%s1285 + $0x14] sm:$0xf]
        %v1292 = vld [vmem:[%s1285 + $0x18] sm:$0xf]
        %v1293 = vld [vmem:[%s1285 + $0x1c] sm:$0xf]
        %v1302 = vunpack.c.l.b16 %v1286
        %v1303 = vunpack.c.l.b16 %v1287
        %v1304 = vunpack.c.l.b16 %v1288
        %v1305 = vunpack.c.l.b16 %v1289
        %v1306 = vunpack.c.l.b16 %v1290
        %v1307 = vunpack.c.l.b16 %v1291
        %v1308 = vunpack.c.l.b16 %v1292
        %v1309 = vunpack.c.l.b16 %v1293
        %v1310 = vpack.c.b16 %v1303, %v1302
        %v1311 = vpack.c.b16 %v1305, %v1304
        %v1312 = vpack.c.b16 %v1307, %v1306
        %v1313 = vpack.c.b16 %v1309, %v1308
        %1318 = vmatpush.bf16.msra.mxu0 0
        %1319 = vmatpush.bf16.msra.mxu0 0
        %1320 = vmatpush.bf16.msra.mxu0 0
        %1321 = vmatpush.bf16.msra.mxu0 0
        %1322 = vmatpush.bf16.msra.mxu0 %v1313
        %1323 = vmatpush.bf16.msra.mxu0 %v1312
        %1324 = vmatpush.bf16.msra.mxu0 %v1311
        %1325 = vmatpush.bf16.msra.mxu0 %v1310
        %1326 = vmatmul.bf16.gmra.mxu0 %v312
        %v1327 = vpop.f32.mrf.mxu0
        %v1328 = vadd.f32 0.0, %v1327
        %v1329 = vpop.f32.mrf.mxu0
        %v1330 = vadd.f32 0.0, %v1329
        %1331 = vmatmul.bf16.gmra.mxu0 %v315
        %v1332 = vpop.f32.mrf.mxu0
        %v1333 = vadd.f32 0.0, %v1332
        %v1334 = vpop.f32.mrf.mxu0
        %v1335 = vadd.f32 0.0, %v1334
        %1336 = vmatmul.bf16.gmra.mxu0 %v318
        %v1337 = vpop.f32.mrf.mxu0
        %v1338 = vadd.f32 0.0, %v1337
        %v1339 = vpop.f32.mrf.mxu0
        %1340 = vdwg.mxu0
        %s1341 = scalar_lea.vmem %s2, 64
        %v1342 = vld [vmem:[%s1341] sm:$0xf]
        %v1343 = vld [vmem:[%s1341 + $0x4] sm:$0xf]
        %v1344 = vld [vmem:[%s1341 + $0x8] sm:$0xf]
        %v1345 = vld [vmem:[%s1341 + $0xc] sm:$0xf]
        %v1346 = vld [vmem:[%s1341 + $0x10] sm:$0xf]
        %v1347 = vld [vmem:[%s1341 + $0x14] sm:$0xf]
        %v1348 = vld [vmem:[%s1341 + $0x18] sm:$0xf]
        %v1349 = vld [vmem:[%s1341 + $0x1c] sm:$0xf]
        %v1358 = vunpack.c.l.b16 %v1342
        %v1359 = vunpack.c.l.b16 %v1343
        %v1360 = vunpack.c.l.b16 %v1344
        %v1361 = vunpack.c.l.b16 %v1345
        %v1362 = vunpack.c.l.b16 %v1346
        %v1363 = vunpack.c.l.b16 %v1347
        %v1364 = vunpack.c.l.b16 %v1348
        %v1365 = vunpack.c.l.b16 %v1349
        %v1366 = vpack.c.b16 %v1359, %v1358
        %v1367 = vpack.c.b16 %v1361, %v1360
        %v1368 = vpack.c.b16 %v1363, %v1362
        %v1369 = vpack.c.b16 %v1365, %v1364
        %1374 = vmatpush.bf16.msra.mxu0 0
        %1375 = vmatpush.bf16.msra.mxu0 0
        %1376 = vmatpush.bf16.msra.mxu0 0
        %1377 = vmatpush.bf16.msra.mxu0 0
        %1378 = vmatpush.bf16.msra.mxu0 %v1369
        %1379 = vmatpush.bf16.msra.mxu0 %v1368
        %1380 = vmatpush.bf16.msra.mxu0 %v1367
        %1381 = vmatpush.bf16.msra.mxu0 %v1366
        %1382 = vmatmul.bf16.gmra.mxu0 %v312
        %v1383 = vpop.f32.mrf.mxu0
        %v1384 = vadd.f32 0.0, %v1383
        %v1385 = vpop.f32.mrf.mxu0
        %v1386 = vadd.f32 0.0, %v1385
        %1387 = vmatmul.bf16.gmra.mxu0 %v315
        %v1388 = vpop.f32.mrf.mxu0
        %v1389 = vadd.f32 0.0, %v1388
        %v1390 = vpop.f32.mrf.mxu0
        %v1391 = vadd.f32 0.0, %v1390
        %1392 = vmatmul.bf16.gmra.mxu0 %v318
        %v1393 = vpop.f32.mrf.mxu0
        %v1394 = vadd.f32 0.0, %v1393
        %v1395 = vpop.f32.mrf.mxu0
        %v1396 = vadd.f32 0.0, %v1395
        %1397 = vdwg.mxu0
        %s1398 = scalar_lea.vmem %s3, 64
        %v1399 = vld [vmem:[%s1398] sm:$0xf]
        %v1400 = vld [vmem:[%s1398 + $0x4] sm:$0xf]
        %v1401 = vld [vmem:[%s1398 + $0x8] sm:$0xf]
        %v1402 = vld [vmem:[%s1398 + $0xc] sm:$0xf]
        %v1403 = vld [vmem:[%s1398 + $0x10] sm:$0xf]
        %v1404 = vld [vmem:[%s1398 + $0x14] sm:$0xf]
        %v1405 = vld [vmem:[%s1398 + $0x18] sm:$0xf]
        %v1406 = vld [vmem:[%s1398 + $0x1c] sm:$0xf]
        %v1415 = vunpack.c.l.b16 %v1399
        %v1416 = vunpack.c.l.b16 %v1400
        %v1417 = vunpack.c.l.b16 %v1401
        %v1418 = vunpack.c.l.b16 %v1402
        %v1419 = vunpack.c.l.b16 %v1403
        %v1420 = vunpack.c.l.b16 %v1404
        %v1421 = vunpack.c.l.b16 %v1405
        %v1422 = vunpack.c.l.b16 %v1406
        %v1423 = vpack.c.b16 %v1416, %v1415
        %v1424 = vpack.c.b16 %v1418, %v1417
        %v1425 = vpack.c.b16 %v1420, %v1419
        %v1426 = vpack.c.b16 %v1422, %v1421
        %1431 = vmatpush.bf16.msra.mxu0 0
        %1432 = vmatpush.bf16.msra.mxu0 0
        %1433 = vmatpush.bf16.msra.mxu0 0
        %1434 = vmatpush.bf16.msra.mxu0 0
        %1435 = vmatpush.bf16.msra.mxu0 %v1426
        %1436 = vmatpush.bf16.msra.mxu0 %v1425
        %1437 = vmatpush.bf16.msra.mxu0 %v1424
        %1438 = vmatpush.bf16.msra.mxu0 %v1423
        %1439 = vmatmul.bf16.gmra.mxu0 %v312
        %v1440 = vpop.f32.mrf.mxu0
        %v1441 = vadd.f32 0.0, %v1440
        %v1442 = vpop.f32.mrf.mxu0
        %v1443 = vadd.f32 0.0, %v1442
        %1444 = vmatmul.bf16.gmra.mxu0 %v315
        %v1445 = vpop.f32.mrf.mxu0
        %v1446 = vadd.f32 0.0, %v1445
        %v1447 = vpop.f32.mrf.mxu0
        %v1448 = vadd.f32 0.0, %v1447
        %1449 = vmatmul.bf16.gmra.mxu0 %v318
        %v1450 = vpop.f32.mrf.mxu0
        %v1451 = vadd.f32 0.0, %v1450
        %v1452 = vpop.f32.mrf.mxu0
        %v1453 = vadd.f32 0.0, %v1452
        %1454 = vdwg.mxu0
        %v1455 = vpack.c.bf16 %v1328, %v1328
        %v1456 = vpack.c.bf16 %v1330, %v1330
        %v1457 = vpack.c.bf16 %v1333, %v1333
        %v1458 = vpack.c.bf16 %v1335, %v1335
        %v1459 = vpack.c.bf16 %v1338, %v1338
        %v1460 = vpack.c.bf16 %v1384, %v1384
        %v1461 = vpack.c.bf16 %v1386, %v1386
        %v1462 = vpack.c.bf16 %v1389, %v1389
        %v1463 = vpack.c.bf16 %v1391, %v1391
        %v1464 = vpack.c.bf16 %v1394, %v1394
        %v1465 = vpack.c.bf16 %v1396, %v1396
        %v1471 = vunpack.c.l.b16 %v1455
        %v1472 = vunpack.c.l.b16 %v1456
        %v1473 = vunpack.c.l.b16 %v1457
        %v1474 = vunpack.c.l.b16 %v1458
        %v1475 = vunpack.c.l.b16 %v1459
        %v1476 = vpack.c.b16 %v1472, %v1471
        %v1477 = vpack.c.b16 %v1474, %v1473
        %v1478 = vpack.c.b16 %v1475, %v1475
        %v1485 = vunpack.c.l.b16 %v1460
        %v1486 = vunpack.c.l.b16 %v1461
        %v1487 = vunpack.c.l.b16 %v1462
        %v1488 = vunpack.c.l.b16 %v1463
        %v1489 = vunpack.c.l.b16 %v1464
        %v1490 = vunpack.c.l.b16 %v1465
        %v1491 = vpack.c.b16 %v1486, %v1485
        %v1492 = vpack.c.b16 %v1488, %v1487
        %v1493 = vpack.c.b16 %v1490, %v1489
        %v1495 = vsel %vm494, %v1476, 0
        %v1498 = vsel %vm494, %v1477, 0
        %v1501 = vsel %vm494, %v1478, 0
        %v1504 = vsel %vm494, %v1491, 0
        %v1507 = vsel %vm494, %v1492, 0
        %v1510 = vsel %vm494, %v1493, 0
        %1512 = vmatpush.bf16.xpose.msra.mxu0 0
        %1513 = vmatpush.bf16.xpose.msra.mxu0 0
        %1514 = vmatpush.bf16.xpose.msra.mxu0 0
        %1515 = vmatpush.bf16.xpose.msra.mxu0 0
        %1516 = vmatpush.bf16.xpose.msra.mxu0 0
        %1517 = vmatpush.bf16.xpose.msra.mxu0 %v1510
        %1518 = vmatpush.bf16.xpose.msra.mxu0 %v1507
        %1519 = vmatpush.bf16.xpose.msra.mxu0 %v1504
        %1520 = vmatmul.bf16.gmra.mxu0 %v1495
        %v1521 = vpop.f32.mrf.mxu0
        %v1522 = vadd.f32 0.0, %v1521
        %v1523 = vpop.f32.mrf.mxu0
        %v1524 = vadd.f32 0.0, %v1523
        %1525 = vmatmul.bf16.gmra.mxu0 %v1498
        %v1526 = vpop.f32.mrf.mxu0
        %v1527 = vadd.f32 0.0, %v1526
        %v1528 = vpop.f32.mrf.mxu0
        %v1529 = vadd.f32 0.0, %v1528
        %1530 = vmatmul.bf16.gmra.mxu0 %v1501
        %v1531 = vpop.f32.mrf.mxu0
        %v1532 = vadd.f32 0.0, %v1531
        %v1533 = vpop.f32.mrf.mxu0
        %1534 = vdwg.mxu0
        %v1535 = vsel %vm536, %v1522, -inf
        %1536 = vmax.xlane.f32.xlu0 %v1535
        %v1537 = vpop.xlane.xlu0 %1536
        %v1538 = vsel %vm536, %v1524, -inf
        %1539 = vmax.xlane.f32.xlu0 %v1538
        %v1540 = vpop.xlane.xlu0 %1539
        %v1541 = vsel %vm536, %v1527, -inf
        %1542 = vmax.xlane.f32.xlu0 %v1541
        %v1543 = vpop.xlane.xlu0 %1542
        %v1544 = vsel %vm536, %v1529, -inf
        %1545 = vmax.xlane.f32.xlu0 %v1544
        %v1546 = vpop.xlane.xlu0 %1545
        %v1547 = vsel %vm536, %v1532, -inf
        %1548 = vmax.xlane.f32.xlu0 %v1547
        %v1549 = vpop.xlane.xlu0 %1548
        %v1550 = vsub.f32 %v1522, %v1537
        %v1551 = vsub.f32 %v1524, %v1540
        %v1552 = vsub.f32 %v1527, %v1543
        %v1553 = vsub.f32 %v1529, %v1546
        %v1554 = vsub.f32 %v1532, %v1549
        %v1555 = vmul.f32 %v1550, 1.442695
        %v1556 = vpow.pop %v1555
        %v1557 = vmul.f32 %v1551, 1.442695
        %v1558 = vpow.pop %v1557
        %v1559 = vmul.f32 %v1552, 1.442695
        %v1560 = vpow.pop %v1559
        %v1561 = vmul.f32 %v1553, 1.442695
        %v1562 = vpow.pop %v1561
        %v1563 = vmul.f32 %v1554, 1.442695
        %v1564 = vpow.pop %v1563
        %v1565 = vsel %vm536, %v1556, 0.0
        %1566 = vadd.xlane.f32.xlu0 %v1565
        %v1567 = vpop.xlane.xlu0 %1566
        %v1568 = vsel %vm536, %v1558, 0.0
        %1569 = vadd.xlane.f32.xlu0 %v1568
        %v1570 = vpop.xlane.xlu0 %1569
        %v1571 = vsel %vm536, %v1560, 0.0
        %1572 = vadd.xlane.f32.xlu0 %v1571
        %v1573 = vpop.xlane.xlu0 %1572
        %v1574 = vsel %vm536, %v1562, 0.0
        %1575 = vadd.xlane.f32.xlu0 %v1574
        %v1576 = vpop.xlane.xlu0 %1575
        %v1577 = vsel %vm536, %v1564, 0.0
        %1578 = vadd.xlane.f32.xlu0 %v1577
        %v1579 = vpop.xlane.xlu0 %1578
        %v1580 = vrcp.pop %v1567
        %v1581 = vmul.f32 %v1567, %v1580
        %v1582 = vsub.f32 1.0, %v1581
        %v1583 = vmul.f32 %v1580, %v1582
        %v1584 = vadd.f32 %v1580, %v1583
        %vm1585 = vweird.f32 %v1567
        %vm1586 = vweird.f32 %v1580
        %vm1587 = vmor %vm1585, %vm1586
        %v1588 = vsel %vm1587, %v1580, %v1584
        %v1589 = vand.u32 2147483647, %v1567
        %vm1590 = vcmp.eq.f32.partialorder %v1589, 8.507059e+37
        %v1591 = vand.u32 %v1567, 2147483648
        %v1592 = vor.u32 1.1754944e-38, %v1591
        %v1593 = vsel %vm1590, %v1592, %v1588
        %v1594 = vmul.f32 %v1556, %v1593
        %v1595 = vrcp.pop %v1570
        %v1596 = vmul.f32 %v1570, %v1595
        %v1597 = vsub.f32 1.0, %v1596
        %v1598 = vmul.f32 %v1595, %v1597
        %v1599 = vadd.f32 %v1595, %v1598
        %vm1600 = vweird.f32 %v1570
        %vm1601 = vweird.f32 %v1595
        %vm1602 = vmor %vm1600, %vm1601
        %v1603 = vsel %vm1602, %v1595, %v1599
        %v1604 = vand.u32 2147483647, %v1570
        %vm1605 = vcmp.eq.f32.partialorder %v1604, 8.507059e+37
        %v1606 = vand.u32 %v1570, 2147483648
        %v1607 = vor.u32 1.1754944e-38, %v1606
        %v1608 = vsel %vm1605, %v1607, %v1603
        %v1609 = vmul.f32 %v1558, %v1608
        %v1610 = vrcp.pop %v1573
        %v1611 = vmul.f32 %v1573, %v1610
        %v1612 = vsub.f32 1.0, %v1611
        %v1613 = vmul.f32 %v1610, %v1612
        %v1614 = vadd.f32 %v1610, %v1613
        %vm1615 = vweird.f32 %v1573
        %vm1616 = vweird.f32 %v1610
        %vm1617 = vmor %vm1615, %vm1616
        %v1618 = vsel %vm1617, %v1610, %v1614
        %v1619 = vand.u32 2147483647, %v1573
        %vm1620 = vcmp.eq.f32.partialorder %v1619, 8.507059e+37
        %v1621 = vand.u32 %v1573, 2147483648
        %v1622 = vor.u32 1.1754944e-38, %v1621
        %v1623 = vsel %vm1620, %v1622, %v1618
        %v1624 = vmul.f32 %v1560, %v1623
        %v1625 = vrcp.pop %v1576
        %v1626 = vmul.f32 %v1576, %v1625
        %v1627 = vsub.f32 1.0, %v1626
        %v1628 = vmul.f32 %v1625, %v1627
        %v1629 = vadd.f32 %v1625, %v1628
        %vm1630 = vweird.f32 %v1576
        %vm1631 = vweird.f32 %v1625
        %vm1632 = vmor %vm1630, %vm1631
        %v1633 = vsel %vm1632, %v1625, %v1629
        %v1634 = vand.u32 2147483647, %v1576
        %vm1635 = vcmp.eq.f32.partialorder %v1634, 8.507059e+37
        %v1636 = vand.u32 %v1576, 2147483648
        %v1637 = vor.u32 1.1754944e-38, %v1636
        %v1638 = vsel %vm1635, %v1637, %v1633
        %v1639 = vmul.f32 %v1562, %v1638
        %v1640 = vrcp.pop %v1579
        %v1641 = vmul.f32 %v1579, %v1640
        %v1642 = vsub.f32 1.0, %v1641
        %v1643 = vmul.f32 %v1640, %v1642
        %v1644 = vadd.f32 %v1640, %v1643
        %vm1645 = vweird.f32 %v1579
        %vm1646 = vweird.f32 %v1640
        %vm1647 = vmor %vm1645, %vm1646
        %v1648 = vsel %vm1647, %v1640, %v1644
        %v1649 = vand.u32 2147483647, %v1579
        %vm1650 = vcmp.eq.f32.partialorder %v1649, 8.507059e+37
        %v1651 = vand.u32 %v1579, 2147483648
        %v1652 = vor.u32 1.1754944e-38, %v1651
        %v1653 = vsel %vm1650, %v1652, %v1648
        %v1654 = vmul.f32 %v1564, %v1653
        %v1655 = vpack.c.bf16 %v1594, %v1594
        %v1656 = vpack.c.bf16 %v1609, %v1609
        %v1657 = vpack.c.bf16 %v1624, %v1624
        %v1658 = vpack.c.bf16 %v1639, %v1639
        %v1659 = vpack.c.bf16 %v1654, %v1654
        %v1660 = vpack.c.bf16 %v1441, %v1441
        %v1661 = vpack.c.bf16 %v1443, %v1443
        %v1662 = vpack.c.bf16 %v1446, %v1446
        %v1663 = vpack.c.bf16 %v1448, %v1448
        %v1664 = vpack.c.bf16 %v1451, %v1451
        %v1665 = vpack.c.bf16 %v1453, %v1453
        %v1671 = vunpack.c.l.b16 %v1655
        %v1672 = vunpack.c.l.b16 %v1656
        %v1673 = vunpack.c.l.b16 %v1657
        %v1674 = vunpack.c.l.b16 %v1658
        %v1675 = vunpack.c.l.b16 %v1659
        %v1676 = vpack.c.b16 %v1672, %v1671
        %v1677 = vpack.c.b16 %v1674, %v1673
        %v1678 = vpack.c.b16 %v1675, %v1675
        %v1685 = vunpack.c.l.b16 %v1660
        %v1686 = vunpack.c.l.b16 %v1661
        %v1687 = vunpack.c.l.b16 %v1662
        %v1688 = vunpack.c.l.b16 %v1663
        %v1689 = vunpack.c.l.b16 %v1664
        %v1690 = vunpack.c.l.b16 %v1665
        %v1691 = vpack.c.b16 %v1686, %v1685
        %v1692 = vpack.c.b16 %v1688, %v1687
        %v1693 = vpack.c.b16 %v1690, %v1689
        %v1698 = vsel %vm536, %v1676, 0
        %v1701 = vsel %vm536, %v1677, 0
        %v1704 = vsel %vm536, %v1678, 0
        %1706 = vmatpush.bf16.msra.mxu0 0
        %1707 = vmatpush.bf16.msra.mxu0 0
        %1708 = vmatpush.bf16.msra.mxu0 0
        %1709 = vmatpush.bf16.msra.mxu0 0
        %1710 = vmatpush.bf16.msra.mxu0 0
        %1711 = vmatpush.bf16.msra.mxu0 %v1693
        %1712 = vmatpush.bf16.msra.mxu0 %v1692
        %1713 = vmatpush.bf16.msra.mxu0 %v1691
        %1714 = vmatmul.bf16.gmra.mxu0 %v1698
        %v1715 = vpop.f32.mrf.mxu0
        %v1716 = vadd.f32 0.0, %v1715
        %v1717 = vpop.f32.mrf.mxu0
        %v1718 = vadd.f32 0.0, %v1717
        %1719 = vmatmul.bf16.gmra.mxu0 %v1701
        %v1720 = vpop.f32.mrf.mxu0
        %v1721 = vadd.f32 0.0, %v1720
        %v1722 = vpop.f32.mrf.mxu0
        %v1723 = vadd.f32 0.0, %v1722
        %1724 = vmatmul.bf16.gmra.mxu0 %v1704
        %v1725 = vpop.f32.mrf.mxu0
        %v1726 = vadd.f32 0.0, %v1725
        %v1727 = vpop.f32.mrf.mxu0
        %1728 = vdwg.mxu0
        %s1729 = scalar_lea.vmem %s4, 8
        %v1730 = vld [vmem:[%s1729] sm:$0xf]
        %v1731 = vpack.c.bf16 %v1716, %v1716
        %v1732 = vpack.c.bf16 %v1718, %v1718
        %v1733 = vpack.c.bf16 %v1721, %v1721
        %v1734 = vpack.c.bf16 %v1723, %v1723
        %v1735 = vpack.c.bf16 %v1726, %v1726
        %v1741 = vunpack.c.l.b16 %v1731
        %v1742 = vunpack.c.l.b16 %v1732
        %v1743 = vunpack.c.l.b16 %v1733
        %v1744 = vunpack.c.l.b16 %v1734
        %v1745 = vunpack.c.l.b16 %v1735
        %v1746 = vpack.c.b16 %v1742, %v1741
        %v1747 = vpack.c.b16 %v1744, %v1743
        %v1748 = vpack.c.b16 %v1745, %v1745
        %v1750 = vsel %vm494, %v1746, 0
        %v1753 = vsel %vm494, %v1747, 0
        %v1756 = vsel %vm494, %v1748, 0
        %v1759 = vsel %vm1210, %v1730, 0
        %1761 = vmatpush.bf16.msra.mxu0 0
        %1762 = vmatpush.bf16.msra.mxu0 0
        %1763 = vmatpush.bf16.msra.mxu0 0
        %1764 = vmatpush.bf16.msra.mxu0 0
        %1765 = vmatpush.bf16.msra.mxu0 0
        %1766 = vmatpush.bf16.msra.mxu0 0
        %1767 = vmatpush.bf16.msra.mxu0 0
        %1768 = vmatpush.bf16.msra.mxu0 %v1759
        %1769 = vmatmul.bf16.gmra.mxu0 %v1750
        %v1770 = vpop.f32.mrf.mxu0
        %v1771 = vadd.f32 0.0, %v1770
        %v1772 = vpop.f32.mrf.mxu0
        %v1773 = vadd.f32 0.0, %v1772
        %1774 = vmatmul.bf16.gmra.mxu0 %v1753
        %v1775 = vpop.f32.mrf.mxu0
        %v1776 = vadd.f32 0.0, %v1775
        %v1777 = vpop.f32.mrf.mxu0
        %v1778 = vadd.f32 0.0, %v1777
        %1779 = vmatmul.bf16.gmra.mxu0 %v1756
        %v1780 = vpop.f32.mrf.mxu0
        %v1781 = vadd.f32 0.0, %v1780
        %v1782 = vpop.f32.mrf.mxu0
        %1783 = vdwg.mxu0
        %v1784 = vadd.f32 %v1272, %v1771
        %v1785 = vadd.f32 %v1274, %v1773
        %v1786 = vadd.f32 %v1277, %v1776
        %v1787 = vadd.f32 %v1279, %v1778
        %v1788 = vadd.f32 %v1282, %v1781
        %s1789 = scalar_lea.vmem %s1, 96
        %v1790 = vld [vmem:[%s1789] sm:$0xf]
        %v1791 = vld [vmem:[%s1789 + $0x4] sm:$0xf]
        %v1792 = vld [vmem:[%s1789 + $0x8] sm:$0xf]
        %v1793 = vld [vmem:[%s1789 + $0xc] sm:$0xf]
        %v1794 = vld [vmem:[%s1789 + $0x10] sm:$0xf]
        %v1795 = vld [vmem:[%s1789 + $0x14] sm:$0xf]
        %v1796 = vld [vmem:[%s1789 + $0x18] sm:$0xf]
        %v1797 = vld [vmem:[%s1789 + $0x1c] sm:$0xf]
        %v1806 = vunpack.c.l.b16 %v1790
        %v1807 = vunpack.c.l.b16 %v1791
        %v1808 = vunpack.c.l.b16 %v1792
        %v1809 = vunpack.c.l.b16 %v1793
        %v1810 = vunpack.c.l.b16 %v1794
        %v1811 = vunpack.c.l.b16 %v1795
        %v1812 = vunpack.c.l.b16 %v1796
        %v1813 = vunpack.c.l.b16 %v1797
        %v1814 = vpack.c.b16 %v1807, %v1806
        %v1815 = vpack.c.b16 %v1809, %v1808
        %v1816 = vpack.c.b16 %v1811, %v1810
        %v1817 = vpack.c.b16 %v1813, %v1812
        %1822 = vmatpush.bf16.msra.mxu0 0
        %1823 = vmatpush.bf16.msra.mxu0 0
        %1824 = vmatpush.bf16.msra.mxu0 0
        %1825 = vmatpush.bf16.msra.mxu0 0
        %1826 = vmatpush.bf16.msra.mxu0 %v1817
        %1827 = vmatpush.bf16.msra.mxu0 %v1816
        %1828 = vmatpush.bf16.msra.mxu0 %v1815
        %1829 = vmatpush.bf16.msra.mxu0 %v1814
        %1830 = vmatmul.bf16.gmra.mxu0 %v312
        %v1831 = vpop.f32.mrf.mxu0
        %v1832 = vadd.f32 0.0, %v1831
        %v1833 = vpop.f32.mrf.mxu0
        %v1834 = vadd.f32 0.0, %v1833
        %1835 = vmatmul.bf16.gmra.mxu0 %v315
        %v1836 = vpop.f32.mrf.mxu0
        %v1837 = vadd.f32 0.0, %v1836
        %v1838 = vpop.f32.mrf.mxu0
        %v1839 = vadd.f32 0.0, %v1838
        %1840 = vmatmul.bf16.gmra.mxu0 %v318
        %v1841 = vpop.f32.mrf.mxu0
        %v1842 = vadd.f32 0.0, %v1841
        %v1843 = vpop.f32.mrf.mxu0
        %1844 = vdwg.mxu0
        %s1845 = scalar_lea.vmem %s2, 96
        %v1846 = vld [vmem:[%s1845] sm:$0xf]
        %v1847 = vld [vmem:[%s1845 + $0x4] sm:$0xf]
        %v1848 = vld [vmem:[%s1845 + $0x8] sm:$0xf]
        %v1849 = vld [vmem:[%s1845 + $0xc] sm:$0xf]
        %v1850 = vld [vmem:[%s1845 + $0x10] sm:$0xf]
        %v1851 = vld [vmem:[%s1845 + $0x14] sm:$0xf]
        %v1852 = vld [vmem:[%s1845 + $0x18] sm:$0xf]
        %v1853 = vld [vmem:[%s1845 + $0x1c] sm:$0xf]
        %v1862 = vunpack.c.l.b16 %v1846
        %v1863 = vunpack.c.l.b16 %v1847
        %v1864 = vunpack.c.l.b16 %v1848
        %v1865 = vunpack.c.l.b16 %v1849
        %v1866 = vunpack.c.l.b16 %v1850
        %v1867 = vunpack.c.l.b16 %v1851
        %v1868 = vunpack.c.l.b16 %v1852
        %v1869 = vunpack.c.l.b16 %v1853
        %v1870 = vpack.c.b16 %v1863, %v1862
        %v1871 = vpack.c.b16 %v1865, %v1864
        %v1872 = vpack.c.b16 %v1867, %v1866
        %v1873 = vpack.c.b16 %v1869, %v1868
        %1878 = vmatpush.bf16.msra.mxu0 0
        %1879 = vmatpush.bf16.msra.mxu0 0
        %1880 = vmatpush.bf16.msra.mxu0 0
        %1881 = vmatpush.bf16.msra.mxu0 0
        %1882 = vmatpush.bf16.msra.mxu0 %v1873
        %1883 = vmatpush.bf16.msra.mxu0 %v1872
        %1884 = vmatpush.bf16.msra.mxu0 %v1871
        %1885 = vmatpush.bf16.msra.mxu0 %v1870
        %1886 = vmatmul.bf16.gmra.mxu0 %v312
        %v1887 = vpop.f32.mrf.mxu0
        %v1888 = vadd.f32 0.0, %v1887
        %v1889 = vpop.f32.mrf.mxu0
        %v1890 = vadd.f32 0.0, %v1889
        %1891 = vmatmul.bf16.gmra.mxu0 %v315
        %v1892 = vpop.f32.mrf.mxu0
        %v1893 = vadd.f32 0.0, %v1892
        %v1894 = vpop.f32.mrf.mxu0
        %v1895 = vadd.f32 0.0, %v1894
        %1896 = vmatmul.bf16.gmra.mxu0 %v318
        %v1897 = vpop.f32.mrf.mxu0
        %v1898 = vadd.f32 0.0, %v1897
        %v1899 = vpop.f32.mrf.mxu0
        %v1900 = vadd.f32 0.0, %v1899
        %1901 = vdwg.mxu0
        %s1902 = scalar_lea.vmem %s3, 96
        %v1903 = vld [vmem:[%s1902] sm:$0xf]
        %v1904 = vld [vmem:[%s1902 + $0x4] sm:$0xf]
        %v1905 = vld [vmem:[%s1902 + $0x8] sm:$0xf]
        %v1906 = vld [vmem:[%s1902 + $0xc] sm:$0xf]
        %v1907 = vld [vmem:[%s1902 + $0x10] sm:$0xf]
        %v1908 = vld [vmem:[%s1902 + $0x14] sm:$0xf]
        %v1909 = vld [vmem:[%s1902 + $0x18] sm:$0xf]
        %v1910 = vld [vmem:[%s1902 + $0x1c] sm:$0xf]
        %v1919 = vunpack.c.l.b16 %v1903
        %v1920 = vunpack.c.l.b16 %v1904
        %v1921 = vunpack.c.l.b16 %v1905
        %v1922 = vunpack.c.l.b16 %v1906
        %v1923 = vunpack.c.l.b16 %v1907
        %v1924 = vunpack.c.l.b16 %v1908
        %v1925 = vunpack.c.l.b16 %v1909
        %v1926 = vunpack.c.l.b16 %v1910
        %v1927 = vpack.c.b16 %v1920, %v1919
        %v1928 = vpack.c.b16 %v1922, %v1921
        %v1929 = vpack.c.b16 %v1924, %v1923
        %v1930 = vpack.c.b16 %v1926, %v1925
        %1935 = vmatpush.bf16.msra.mxu0 0
        %1936 = vmatpush.bf16.msra.mxu0 0
        %1937 = vmatpush.bf16.msra.mxu0 0
        %1938 = vmatpush.bf16.msra.mxu0 0
        %1939 = vmatpush.bf16.msra.mxu0 %v1930
        %1940 = vmatpush.bf16.msra.mxu0 %v1929
        %1941 = vmatpush.bf16.msra.mxu0 %v1928
        %1942 = vmatpush.bf16.msra.mxu0 %v1927
        %1943 = vmatmul.bf16.gmra.mxu0 %v312
        %v1944 = vpop.f32.mrf.mxu0
        %v1945 = vadd.f32 0.0, %v1944
        %v1946 = vpop.f32.mrf.mxu0
        %v1947 = vadd.f32 0.0, %v1946
        %1948 = vmatmul.bf16.gmra.mxu0 %v315
        %v1949 = vpop.f32.mrf.mxu0
        %v1950 = vadd.f32 0.0, %v1949
        %v1951 = vpop.f32.mrf.mxu0
        %v1952 = vadd.f32 0.0, %v1951
        %1953 = vmatmul.bf16.gmra.mxu0 %v318
        %v1954 = vpop.f32.mrf.mxu0
        %v1955 = vadd.f32 0.0, %v1954
        %v1956 = vpop.f32.mrf.mxu0
        %v1957 = vadd.f32 0.0, %v1956
        %1958 = vdwg.mxu0
        %v1959 = vpack.c.bf16 %v1832, %v1832
        %v1960 = vpack.c.bf16 %v1834, %v1834
        %v1961 = vpack.c.bf16 %v1837, %v1837
        %v1962 = vpack.c.bf16 %v1839, %v1839
        %v1963 = vpack.c.bf16 %v1842, %v1842
        %v1964 = vpack.c.bf16 %v1888, %v1888
        %v1965 = vpack.c.bf16 %v1890, %v1890
        %v1966 = vpack.c.bf16 %v1893, %v1893
        %v1967 = vpack.c.bf16 %v1895, %v1895
        %v1968 = vpack.c.bf16 %v1898, %v1898
        %v1969 = vpack.c.bf16 %v1900, %v1900
        %v1975 = vunpack.c.l.b16 %v1959
        %v1976 = vunpack.c.l.b16 %v1960
        %v1977 = vunpack.c.l.b16 %v1961
        %v1978 = vunpack.c.l.b16 %v1962
        %v1979 = vunpack.c.l.b16 %v1963
        %v1980 = vpack.c.b16 %v1976, %v1975
        %v1981 = vpack.c.b16 %v1978, %v1977
        %v1982 = vpack.c.b16 %v1979, %v1979
        %v1989 = vunpack.c.l.b16 %v1964
        %v1990 = vunpack.c.l.b16 %v1965
        %v1991 = vunpack.c.l.b16 %v1966
        %v1992 = vunpack.c.l.b16 %v1967
        %v1993 = vunpack.c.l.b16 %v1968
        %v1994 = vunpack.c.l.b16 %v1969
        %v1995 = vpack.c.b16 %v1990, %v1989
        %v1996 = vpack.c.b16 %v1992, %v1991
        %v1997 = vpack.c.b16 %v1994, %v1993
        %v1999 = vsel %vm494, %v1980, 0
        %v2002 = vsel %vm494, %v1981, 0
        %v2005 = vsel %vm494, %v1982, 0
        %v2008 = vsel %vm494, %v1995, 0
        %v2011 = vsel %vm494, %v1996, 0
        %v2014 = vsel %vm494, %v1997, 0
        %2016 = vmatpush.bf16.xpose.msra.mxu0 0
        %2017 = vmatpush.bf16.xpose.msra.mxu0 0
        %2018 = vmatpush.bf16.xpose.msra.mxu0 0
        %2019 = vmatpush.bf16.xpose.msra.mxu0 0
        %2020 = vmatpush.bf16.xpose.msra.mxu0 0
        %2021 = vmatpush.bf16.xpose.msra.mxu0 %v2014
        %2022 = vmatpush.bf16.xpose.msra.mxu0 %v2011
        %2023 = vmatpush.bf16.xpose.msra.mxu0 %v2008
        %2024 = vmatmul.bf16.gmra.mxu0 %v1999
        %v2025 = vpop.f32.mrf.mxu0
        %v2026 = vadd.f32 0.0, %v2025
        %v2027 = vpop.f32.mrf.mxu0
        %v2028 = vadd.f32 0.0, %v2027
        %2029 = vmatmul.bf16.gmra.mxu0 %v2002
        %v2030 = vpop.f32.mrf.mxu0
        %v2031 = vadd.f32 0.0, %v2030
        %v2032 = vpop.f32.mrf.mxu0
        %v2033 = vadd.f32 0.0, %v2032
        %2034 = vmatmul.bf16.gmra.mxu0 %v2005
        %v2035 = vpop.f32.mrf.mxu0
        %v2036 = vadd.f32 0.0, %v2035
        %v2037 = vpop.f32.mrf.mxu0
        %2038 = vdwg.mxu0
        %v2039 = vsel %vm536, %v2026, -inf
        %2040 = vmax.xlane.f32.xlu0 %v2039
        %v2041 = vpop.xlane.xlu0 %2040
        %v2042 = vsel %vm536, %v2028, -inf
        %2043 = vmax.xlane.f32.xlu0 %v2042
        %v2044 = vpop.xlane.xlu0 %2043
        %v2045 = vsel %vm536, %v2031, -inf
        %2046 = vmax.xlane.f32.xlu0 %v2045
        %v2047 = vpop.xlane.xlu0 %2046
        %v2048 = vsel %vm536, %v2033, -inf
        %2049 = vmax.xlane.f32.xlu0 %v2048
        %v2050 = vpop.xlane.xlu0 %2049
        %v2051 = vsel %vm536, %v2036, -inf
        %2052 = vmax.xlane.f32.xlu0 %v2051
        %v2053 = vpop.xlane.xlu0 %2052
        %v2054 = vsub.f32 %v2026, %v2041
        %v2055 = vsub.f32 %v2028, %v2044
        %v2056 = vsub.f32 %v2031, %v2047
        %v2057 = vsub.f32 %v2033, %v2050
        %v2058 = vsub.f32 %v2036, %v2053
        %v2059 = vmul.f32 %v2054, 1.442695
        %v2060 = vpow.pop %v2059
        %v2061 = vmul.f32 %v2055, 1.442695
        %v2062 = vpow.pop %v2061
        %v2063 = vmul.f32 %v2056, 1.442695
        %v2064 = vpow.pop %v2063
        %v2065 = vmul.f32 %v2057, 1.442695
        %v2066 = vpow.pop %v2065
        %v2067 = vmul.f32 %v2058, 1.442695
        %v2068 = vpow.pop %v2067
        %v2069 = vsel %vm536, %v2060, 0.0
        %2070 = vadd.xlane.f32.xlu0 %v2069
        %v2071 = vpop.xlane.xlu0 %2070
        %v2072 = vsel %vm536, %v2062, 0.0
        %2073 = vadd.xlane.f32.xlu0 %v2072
        %v2074 = vpop.xlane.xlu0 %2073
        %v2075 = vsel %vm536, %v2064, 0.0
        %2076 = vadd.xlane.f32.xlu0 %v2075
        %v2077 = vpop.xlane.xlu0 %2076
        %v2078 = vsel %vm536, %v2066, 0.0
        %2079 = vadd.xlane.f32.xlu0 %v2078
        %v2080 = vpop.xlane.xlu0 %2079
        %v2081 = vsel %vm536, %v2068, 0.0
        %2082 = vadd.xlane.f32.xlu0 %v2081
        %v2083 = vpop.xlane.xlu0 %2082
        %v2084 = vrcp.pop %v2071
        %v2085 = vmul.f32 %v2071, %v2084
        %v2086 = vsub.f32 1.0, %v2085
        %v2087 = vmul.f32 %v2084, %v2086
        %v2088 = vadd.f32 %v2084, %v2087
        %vm2089 = vweird.f32 %v2071
        %vm2090 = vweird.f32 %v2084
        %vm2091 = vmor %vm2089, %vm2090
        %v2092 = vsel %vm2091, %v2084, %v2088
        %v2093 = vand.u32 2147483647, %v2071
        %vm2094 = vcmp.eq.f32.partialorder %v2093, 8.507059e+37
        %v2095 = vand.u32 %v2071, 2147483648
        %v2096 = vor.u32 1.1754944e-38, %v2095
        %v2097 = vsel %vm2094, %v2096, %v2092
        %v2098 = vmul.f32 %v2060, %v2097
        %v2099 = vrcp.pop %v2074
        %v2100 = vmul.f32 %v2074, %v2099
        %v2101 = vsub.f32 1.0, %v2100
        %v2102 = vmul.f32 %v2099, %v2101
        %v2103 = vadd.f32 %v2099, %v2102
        %vm2104 = vweird.f32 %v2074
        %vm2105 = vweird.f32 %v2099
        %vm2106 = vmor %vm2104, %vm2105
        %v2107 = vsel %vm2106, %v2099, %v2103
        %v2108 = vand.u32 2147483647, %v2074
        %vm2109 = vcmp.eq.f32.partialorder %v2108, 8.507059e+37
        %v2110 = vand.u32 %v2074, 2147483648
        %v2111 = vor.u32 1.1754944e-38, %v2110
        %v2112 = vsel %vm2109, %v2111, %v2107
        %v2113 = vmul.f32 %v2062, %v2112
        %v2114 = vrcp.pop %v2077
        %v2115 = vmul.f32 %v2077, %v2114
        %v2116 = vsub.f32 1.0, %v2115
        %v2117 = vmul.f32 %v2114, %v2116
        %v2118 = vadd.f32 %v2114, %v2117
        %vm2119 = vweird.f32 %v2077
        %vm2120 = vweird.f32 %v2114
        %vm2121 = vmor %vm2119, %vm2120
        %v2122 = vsel %vm2121, %v2114, %v2118
        %v2123 = vand.u32 2147483647, %v2077
        %vm2124 = vcmp.eq.f32.partialorder %v2123, 8.507059e+37
        %v2125 = vand.u32 %v2077, 2147483648
        %v2126 = vor.u32 1.1754944e-38, %v2125
        %v2127 = vsel %vm2124, %v2126, %v2122
        %v2128 = vmul.f32 %v2064, %v2127
        %v2129 = vrcp.pop %v2080
        %v2130 = vmul.f32 %v2080, %v2129
        %v2131 = vsub.f32 1.0, %v2130
        %v2132 = vmul.f32 %v2129, %v2131
        %v2133 = vadd.f32 %v2129, %v2132
        %vm2134 = vweird.f32 %v2080
        %vm2135 = vweird.f32 %v2129
        %vm2136 = vmor %vm2134, %vm2135
        %v2137 = vsel %vm2136, %v2129, %v2133
        %v2138 = vand.u32 2147483647, %v2080
        %vm2139 = vcmp.eq.f32.partialorder %v2138, 8.507059e+37
        %v2140 = vand.u32 %v2080, 2147483648
        %v2141 = vor.u32 1.1754944e-38, %v2140
        %v2142 = vsel %vm2139, %v2141, %v2137
        %v2143 = vmul.f32 %v2066, %v2142
        %v2144 = vrcp.pop %v2083
        %v2145 = vmul.f32 %v2083, %v2144
        %v2146 = vsub.f32 1.0, %v2145
        %v2147 = vmul.f32 %v2144, %v2146
        %v2148 = vadd.f32 %v2144, %v2147
        %vm2149 = vweird.f32 %v2083
        %vm2150 = vweird.f32 %v2144
        %vm2151 = vmor %vm2149, %vm2150
        %v2152 = vsel %vm2151, %v2144, %v2148
        %v2153 = vand.u32 2147483647, %v2083
        %vm2154 = vcmp.eq.f32.partialorder %v2153, 8.507059e+37
        %v2155 = vand.u32 %v2083, 2147483648
        %v2156 = vor.u32 1.1754944e-38, %v2155
        %v2157 = vsel %vm2154, %v2156, %v2152
        %v2158 = vmul.f32 %v2068, %v2157
        %v2159 = vpack.c.bf16 %v2098, %v2098
        %v2160 = vpack.c.bf16 %v2113, %v2113
        %v2161 = vpack.c.bf16 %v2128, %v2128
        %v2162 = vpack.c.bf16 %v2143, %v2143
        %v2163 = vpack.c.bf16 %v2158, %v2158
        %v2164 = vpack.c.bf16 %v1945, %v1945
        %v2165 = vpack.c.bf16 %v1947, %v1947
        %v2166 = vpack.c.bf16 %v1950, %v1950
        %v2167 = vpack.c.bf16 %v1952, %v1952
        %v2168 = vpack.c.bf16 %v1955, %v1955
        %v2169 = vpack.c.bf16 %v1957, %v1957
        %v2175 = vunpack.c.l.b16 %v2159
        %v2176 = vunpack.c.l.b16 %v2160
        %v2177 = vunpack.c.l.b16 %v2161
        %v2178 = vunpack.c.l.b16 %v2162
        %v2179 = vunpack.c.l.b16 %v2163
        %v2180 = vpack.c.b16 %v2176, %v2175
        %v2181 = vpack.c.b16 %v2178, %v2177
        %v2182 = vpack.c.b16 %v2179, %v2179
        %v2189 = vunpack.c.l.b16 %v2164
        %v2190 = vunpack.c.l.b16 %v2165
        %v2191 = vunpack.c.l.b16 %v2166
        %v2192 = vunpack.c.l.b16 %v2167
        %v2193 = vunpack.c.l.b16 %v2168
        %v2194 = vunpack.c.l.b16 %v2169
        %v2195 = vpack.c.b16 %v2190, %v2189
        %v2196 = vpack.c.b16 %v2192, %v2191
        %v2197 = vpack.c.b16 %v2194, %v2193
        %v2202 = vsel %vm536, %v2180, 0
        %v2205 = vsel %vm536, %v2181, 0
        %v2208 = vsel %vm536, %v2182, 0
        %2210 = vmatpush.bf16.msra.mxu0 0
        %2211 = vmatpush.bf16.msra.mxu0 0
        %2212 = vmatpush.bf16.msra.mxu0 0
        %2213 = vmatpush.bf16.msra.mxu0 0
        %2214 = vmatpush.bf16.msra.mxu0 0
        %2215 = vmatpush.bf16.msra.mxu0 %v2197
        %2216 = vmatpush.bf16.msra.mxu0 %v2196
        %2217 = vmatpush.bf16.msra.mxu0 %v2195
        %2218 = vmatmul.bf16.gmra.mxu0 %v2202
        %v2219 = vpop.f32.mrf.mxu0
        %v2220 = vadd.f32 0.0, %v2219
        %v2221 = vpop.f32.mrf.mxu0
        %v2222 = vadd.f32 0.0, %v2221
        %2223 = vmatmul.bf16.gmra.mxu0 %v2205
        %v2224 = vpop.f32.mrf.mxu0
        %v2225 = vadd.f32 0.0, %v2224
        %v2226 = vpop.f32.mrf.mxu0
        %v2227 = vadd.f32 0.0, %v2226
        %2228 = vmatmul.bf16.gmra.mxu0 %v2208
        %v2229 = vpop.f32.mrf.mxu0
        %v2230 = vadd.f32 0.0, %v2229
        %v2231 = vpop.f32.mrf.mxu0
        %2232 = vdwg.mxu0
        %s2233 = scalar_lea.vmem %s4, 12
        %v2234 = vld [vmem:[%s2233] sm:$0xf]
        %v2235 = vpack.c.bf16 %v2220, %v2220
        %v2236 = vpack.c.bf16 %v2222, %v2222
        %v2237 = vpack.c.bf16 %v2225, %v2225
        %v2238 = vpack.c.bf16 %v2227, %v2227
        %v2239 = vpack.c.bf16 %v2230, %v2230
        %v2245 = vunpack.c.l.b16 %v2235
        %v2246 = vunpack.c.l.b16 %v2236
        %v2247 = vunpack.c.l.b16 %v2237
        %v2248 = vunpack.c.l.b16 %v2238
        %v2249 = vunpack.c.l.b16 %v2239
        %v2250 = vpack.c.b16 %v2246, %v2245
        %v2251 = vpack.c.b16 %v2248, %v2247
        %v2252 = vpack.c.b16 %v2249, %v2249
        %v2254 = vsel %vm494, %v2250, 0
        %v2257 = vsel %vm494, %v2251, 0
        %v2260 = vsel %vm494, %v2252, 0
        %v2263 = vsel %vm1210, %v2234, 0
        %2265 = vmatpush.bf16.msra.mxu0 0
        %2266 = vmatpush.bf16.msra.mxu0 0
        %2267 = vmatpush.bf16.msra.mxu0 0
        %2268 = vmatpush.bf16.msra.mxu0 0
        %2269 = vmatpush.bf16.msra.mxu0 0
        %2270 = vmatpush.bf16.msra.mxu0 0
        %2271 = vmatpush.bf16.msra.mxu0 0
        %2272 = vmatpush.bf16.msra.mxu0 %v2263
        %2273 = vmatmul.bf16.gmra.mxu0 %v2254
        %v2274 = vpop.f32.mrf.mxu0
        %v2275 = vadd.f32 0.0, %v2274
        %v2276 = vpop.f32.mrf.mxu0
        %v2277 = vadd.f32 0.0, %v2276
        %2278 = vmatmul.bf16.gmra.mxu0 %v2257
        %v2279 = vpop.f32.mrf.mxu0
        %v2280 = vadd.f32 0.0, %v2279
        %v2281 = vpop.f32.mrf.mxu0
        %v2282 = vadd.f32 0.0, %v2281
        %2283 = vmatmul.bf16.gmra.mxu0 %v2260
        %v2284 = vpop.f32.mrf.mxu0
        %v2285 = vadd.f32 0.0, %v2284
        %v2286 = vpop.f32.mrf.mxu0
        %2287 = vdwg.mxu0
        %v2288 = vadd.f32 %v1784, %v2275
        %v2289 = vadd.f32 %v1785, %v2277
        %v2290 = vadd.f32 %v1786, %v2280
        %v2291 = vadd.f32 %v1787, %v2282
        %v2292 = vadd.f32 %v1788, %v2285
        %s2293 = scalar_lea.vmem %s1, 128
        %v2294 = vld [vmem:[%s2293] sm:$0xf]
        %v2295 = vld [vmem:[%s2293 + $0x4] sm:$0xf]
        %v2296 = vld [vmem:[%s2293 + $0x8] sm:$0xf]
        %v2297 = vld [vmem:[%s2293 + $0xc] sm:$0xf]
        %v2298 = vld [vmem:[%s2293 + $0x10] sm:$0xf]
        %v2299 = vld [vmem:[%s2293 + $0x14] sm:$0xf]
        %v2300 = vld [vmem:[%s2293 + $0x18] sm:$0xf]
        %v2301 = vld [vmem:[%s2293 + $0x1c] sm:$0xf]
        %v2310 = vunpack.c.l.b16 %v2294
        %v2311 = vunpack.c.l.b16 %v2295
        %v2312 = vunpack.c.l.b16 %v2296
        %v2313 = vunpack.c.l.b16 %v2297
        %v2314 = vunpack.c.l.b16 %v2298
        %v2315 = vunpack.c.l.b16 %v2299
        %v2316 = vunpack.c.l.b16 %v2300
        %v2317 = vunpack.c.l.b16 %v2301
        %v2318 = vpack.c.b16 %v2311, %v2310
        %v2319 = vpack.c.b16 %v2313, %v2312
        %v2320 = vpack.c.b16 %v2315, %v2314
        %v2321 = vpack.c.b16 %v2317, %v2316
        %2326 = vmatpush.bf16.msra.mxu0 0
        %2327 = vmatpush.bf16.msra.mxu0 0
        %2328 = vmatpush.bf16.msra.mxu0 0
        %2329 = vmatpush.bf16.msra.mxu0 0
        %2330 = vmatpush.bf16.msra.mxu0 %v2321
        %2331 = vmatpush.bf16.msra.mxu0 %v2320
        %2332 = vmatpush.bf16.msra.mxu0 %v2319
        %2333 = vmatpush.bf16.msra.mxu0 %v2318
        %2334 = vmatmul.bf16.gmra.mxu0 %v312
        %v2335 = vpop.f32.mrf.mxu0
        %v2336 = vadd.f32 0.0, %v2335
        %v2337 = vpop.f32.mrf.mxu0
        %v2338 = vadd.f32 0.0, %v2337
        %2339 = vmatmul.bf16.gmra.mxu0 %v315
        %v2340 = vpop.f32.mrf.mxu0
        %v2341 = vadd.f32 0.0, %v2340
        %v2342 = vpop.f32.mrf.mxu0
        %v2343 = vadd.f32 0.0, %v2342
        %2344 = vmatmul.bf16.gmra.mxu0 %v318
        %v2345 = vpop.f32.mrf.mxu0
        %v2346 = vadd.f32 0.0, %v2345
        %v2347 = vpop.f32.mrf.mxu0
        %2348 = vdwg.mxu0
        %s2349 = scalar_lea.vmem %s2, 128
        %v2350 = vld [vmem:[%s2349] sm:$0xf]
        %v2351 = vld [vmem:[%s2349 + $0x4] sm:$0xf]
        %v2352 = vld [vmem:[%s2349 + $0x8] sm:$0xf]
        %v2353 = vld [vmem:[%s2349 + $0xc] sm:$0xf]
        %v2354 = vld [vmem:[%s2349 + $0x10] sm:$0xf]
        %v2355 = vld [vmem:[%s2349 + $0x14] sm:$0xf]
        %v2356 = vld [vmem:[%s2349 + $0x18] sm:$0xf]
        %v2357 = vld [vmem:[%s2349 + $0x1c] sm:$0xf]
        %v2366 = vunpack.c.l.b16 %v2350
        %v2367 = vunpack.c.l.b16 %v2351
        %v2368 = vunpack.c.l.b16 %v2352
        %v2369 = vunpack.c.l.b16 %v2353
        %v2370 = vunpack.c.l.b16 %v2354
        %v2371 = vunpack.c.l.b16 %v2355
        %v2372 = vunpack.c.l.b16 %v2356
        %v2373 = vunpack.c.l.b16 %v2357
        %v2374 = vpack.c.b16 %v2367, %v2366
        %v2375 = vpack.c.b16 %v2369, %v2368
        %v2376 = vpack.c.b16 %v2371, %v2370
        %v2377 = vpack.c.b16 %v2373, %v2372
        %2382 = vmatpush.bf16.msra.mxu0 0
        %2383 = vmatpush.bf16.msra.mxu0 0
        %2384 = vmatpush.bf16.msra.mxu0 0
        %2385 = vmatpush.bf16.msra.mxu0 0
        %2386 = vmatpush.bf16.msra.mxu0 %v2377
        %2387 = vmatpush.bf16.msra.mxu0 %v2376
        %2388 = vmatpush.bf16.msra.mxu0 %v2375
        %2389 = vmatpush.bf16.msra.mxu0 %v2374
        %2390 = vmatmul.bf16.gmra.mxu0 %v312
        %v2391 = vpop.f32.mrf.mxu0
        %v2392 = vadd.f32 0.0, %v2391
        %v2393 = vpop.f32.mrf.mxu0
        %v2394 = vadd.f32 0.0, %v2393
        %2395 = vmatmul.bf16.gmra.mxu0 %v315
        %v2396 = vpop.f32.mrf.mxu0
        %v2397 = vadd.f32 0.0, %v2396
        %v2398 = vpop.f32.mrf.mxu0
        %v2399 = vadd.f32 0.0, %v2398
        %2400 = vmatmul.bf16.gmra.mxu0 %v318
        %v2401 = vpop.f32.mrf.mxu0
        %v2402 = vadd.f32 0.0, %v2401
        %v2403 = vpop.f32.mrf.mxu0
        %v2404 = vadd.f32 0.0, %v2403
        %2405 = vdwg.mxu0
        %s2406 = scalar_lea.vmem %s3, 128
        %v2407 = vld [vmem:[%s2406] sm:$0xf]
        %v2408 = vld [vmem:[%s2406 + $0x4] sm:$0xf]
        %v2409 = vld [vmem:[%s2406 + $0x8] sm:$0xf]
        %v2410 = vld [vmem:[%s2406 + $0xc] sm:$0xf]
        %v2411 = vld [vmem:[%s2406 + $0x10] sm:$0xf]
        %v2412 = vld [vmem:[%s2406 + $0x14] sm:$0xf]
        %v2413 = vld [vmem:[%s2406 + $0x18] sm:$0xf]
        %v2414 = vld [vmem:[%s2406 + $0x1c] sm:$0xf]
        %v2423 = vunpack.c.l.b16 %v2407
        %v2424 = vunpack.c.l.b16 %v2408
        %v2425 = vunpack.c.l.b16 %v2409
        %v2426 = vunpack.c.l.b16 %v2410
        %v2427 = vunpack.c.l.b16 %v2411
        %v2428 = vunpack.c.l.b16 %v2412
        %v2429 = vunpack.c.l.b16 %v2413
        %v2430 = vunpack.c.l.b16 %v2414
        %v2431 = vpack.c.b16 %v2424, %v2423
        %v2432 = vpack.c.b16 %v2426, %v2425
        %v2433 = vpack.c.b16 %v2428, %v2427
        %v2434 = vpack.c.b16 %v2430, %v2429
        %2439 = vmatpush.bf16.msra.mxu0 0
        %2440 = vmatpush.bf16.msra.mxu0 0
        %2441 = vmatpush.bf16.msra.mxu0 0
        %2442 = vmatpush.bf16.msra.mxu0 0
        %2443 = vmatpush.bf16.msra.mxu0 %v2434
        %2444 = vmatpush.bf16.msra.mxu0 %v2433
        %2445 = vmatpush.bf16.msra.mxu0 %v2432
        %2446 = vmatpush.bf16.msra.mxu0 %v2431
        %2447 = vmatmul.bf16.gmra.mxu0 %v312
        %v2448 = vpop.f32.mrf.mxu0
        %v2449 = vadd.f32 0.0, %v2448
        %v2450 = vpop.f32.mrf.mxu0
        %v2451 = vadd.f32 0.0, %v2450
        %2452 = vmatmul.bf16.gmra.mxu0 %v315
        %v2453 = vpop.f32.mrf.mxu0
        %v2454 = vadd.f32 0.0, %v2453
        %v2455 = vpop.f32.mrf.mxu0
        %v2456 = vadd.f32 0.0, %v2455
        %2457 = vmatmul.bf16.gmra.mxu0 %v318
        %v2458 = vpop.f32.mrf.mxu0
        %v2459 = vadd.f32 0.0, %v2458
        %v2460 = vpop.f32.mrf.mxu0
        %v2461 = vadd.f32 0.0, %v2460
        %2462 = vdwg.mxu0
        %v2463 = vpack.c.bf16 %v2336, %v2336
        %v2464 = vpack.c.bf16 %v2338, %v2338
        %v2465 = vpack.c.bf16 %v2341, %v2341
        %v2466 = vpack.c.bf16 %v2343, %v2343
        %v2467 = vpack.c.bf16 %v2346, %v2346
        %v2468 = vpack.c.bf16 %v2392, %v2392
        %v2469 = vpack.c.bf16 %v2394, %v2394
        %v2470 = vpack.c.bf16 %v2397, %v2397
        %v2471 = vpack.c.bf16 %v2399, %v2399
        %v2472 = vpack.c.bf16 %v2402, %v2402
        %v2473 = vpack.c.bf16 %v2404, %v2404
        %v2479 = vunpack.c.l.b16 %v2463
        %v2480 = vunpack.c.l.b16 %v2464
        %v2481 = vunpack.c.l.b16 %v2465
        %v2482 = vunpack.c.l.b16 %v2466
        %v2483 = vunpack.c.l.b16 %v2467
        %v2484 = vpack.c.b16 %v2480, %v2479
        %v2485 = vpack.c.b16 %v2482, %v2481
        %v2486 = vpack.c.b16 %v2483, %v2483
        %v2493 = vunpack.c.l.b16 %v2468
        %v2494 = vunpack.c.l.b16 %v2469
        %v2495 = vunpack.c.l.b16 %v2470
        %v2496 = vunpack.c.l.b16 %v2471
        %v2497 = vunpack.c.l.b16 %v2472
        %v2498 = vunpack.c.l.b16 %v2473
        %v2499 = vpack.c.b16 %v2494, %v2493
        %v2500 = vpack.c.b16 %v2496, %v2495
        %v2501 = vpack.c.b16 %v2498, %v2497
        %v2503 = vsel %vm494, %v2484, 0
        %v2506 = vsel %vm494, %v2485, 0
        %v2509 = vsel %vm494, %v2486, 0
        %v2512 = vsel %vm494, %v2499, 0
        %v2515 = vsel %vm494, %v2500, 0
        %v2518 = vsel %vm494, %v2501, 0
        %2520 = vmatpush.bf16.xpose.msra.mxu0 0
        %2521 = vmatpush.bf16.xpose.msra.mxu0 0
        %2522 = vmatpush.bf16.xpose.msra.mxu0 0
        %2523 = vmatpush.bf16.xpose.msra.mxu0 0
        %2524 = vmatpush.bf16.xpose.msra.mxu0 0
        %2525 = vmatpush.bf16.xpose.msra.mxu0 %v2518
        %2526 = vmatpush.bf16.xpose.msra.mxu0 %v2515
        %2527 = vmatpush.bf16.xpose.msra.mxu0 %v2512
        %2528 = vmatmul.bf16.gmra.mxu0 %v2503
        %v2529 = vpop.f32.mrf.mxu0
        %v2530 = vadd.f32 0.0, %v2529
        %v2531 = vpop.f32.mrf.mxu0
        %v2532 = vadd.f32 0.0, %v2531
        %2533 = vmatmul.bf16.gmra.mxu0 %v2506
        %v2534 = vpop.f32.mrf.mxu0
        %v2535 = vadd.f32 0.0, %v2534
        %v2536 = vpop.f32.mrf.mxu0
        %v2537 = vadd.f32 0.0, %v2536
        %2538 = vmatmul.bf16.gmra.mxu0 %v2509
        %v2539 = vpop.f32.mrf.mxu0
        %v2540 = vadd.f32 0.0, %v2539
        %v2541 = vpop.f32.mrf.mxu0
        %2542 = vdwg.mxu0
        %v2543 = vsel %vm536, %v2530, -inf
        %2544 = vmax.xlane.f32.xlu0 %v2543
        %v2545 = vpop.xlane.xlu0 %2544
        %v2546 = vsel %vm536, %v2532, -inf
        %2547 = vmax.xlane.f32.xlu0 %v2546
        %v2548 = vpop.xlane.xlu0 %2547
        %v2549 = vsel %vm536, %v2535, -inf
        %2550 = vmax.xlane.f32.xlu0 %v2549
        %v2551 = vpop.xlane.xlu0 %2550
        %v2552 = vsel %vm536, %v2537, -inf
        %2553 = vmax.xlane.f32.xlu0 %v2552
        %v2554 = vpop.xlane.xlu0 %2553
        %v2555 = vsel %vm536, %v2540, -inf
        %2556 = vmax.xlane.f32.xlu0 %v2555
        %v2557 = vpop.xlane.xlu0 %2556
        %v2558 = vsub.f32 %v2530, %v2545
        %v2559 = vsub.f32 %v2532, %v2548
        %v2560 = vsub.f32 %v2535, %v2551
        %v2561 = vsub.f32 %v2537, %v2554
        %v2562 = vsub.f32 %v2540, %v2557
        %v2563 = vmul.f32 %v2558, 1.442695
        %v2564 = vpow.pop %v2563
        %v2565 = vmul.f32 %v2559, 1.442695
        %v2566 = vpow.pop %v2565
        %v2567 = vmul.f32 %v2560, 1.442695
        %v2568 = vpow.pop %v2567
        %v2569 = vmul.f32 %v2561, 1.442695
        %v2570 = vpow.pop %v2569
        %v2571 = vmul.f32 %v2562, 1.442695
        %v2572 = vpow.pop %v2571
        %v2573 = vsel %vm536, %v2564, 0.0
        %2574 = vadd.xlane.f32.xlu0 %v2573
        %v2575 = vpop.xlane.xlu0 %2574
        %v2576 = vsel %vm536, %v2566, 0.0
        %2577 = vadd.xlane.f32.xlu0 %v2576
        %v2578 = vpop.xlane.xlu0 %2577
        %v2579 = vsel %vm536, %v2568, 0.0
        %2580 = vadd.xlane.f32.xlu0 %v2579
        %v2581 = vpop.xlane.xlu0 %2580
        %v2582 = vsel %vm536, %v2570, 0.0
        %2583 = vadd.xlane.f32.xlu0 %v2582
        %v2584 = vpop.xlane.xlu0 %2583
        %v2585 = vsel %vm536, %v2572, 0.0
        %2586 = vadd.xlane.f32.xlu0 %v2585
        %v2587 = vpop.xlane.xlu0 %2586
        %v2588 = vrcp.pop %v2575
        %v2589 = vmul.f32 %v2575, %v2588
        %v2590 = vsub.f32 1.0, %v2589
        %v2591 = vmul.f32 %v2588, %v2590
        %v2592 = vadd.f32 %v2588, %v2591
        %vm2593 = vweird.f32 %v2575
        %vm2594 = vweird.f32 %v2588
        %vm2595 = vmor %vm2593, %vm2594
        %v2596 = vsel %vm2595, %v2588, %v2592
        %v2597 = vand.u32 2147483647, %v2575
        %vm2598 = vcmp.eq.f32.partialorder %v2597, 8.507059e+37
        %v2599 = vand.u32 %v2575, 2147483648
        %v2600 = vor.u32 1.1754944e-38, %v2599
        %v2601 = vsel %vm2598, %v2600, %v2596
        %v2602 = vmul.f32 %v2564, %v2601
        %v2603 = vrcp.pop %v2578
        %v2604 = vmul.f32 %v2578, %v2603
        %v2605 = vsub.f32 1.0, %v2604
        %v2606 = vmul.f32 %v2603, %v2605
        %v2607 = vadd.f32 %v2603, %v2606
        %vm2608 = vweird.f32 %v2578
        %vm2609 = vweird.f32 %v2603
        %vm2610 = vmor %vm2608, %vm2609
        %v2611 = vsel %vm2610, %v2603, %v2607
        %v2612 = vand.u32 2147483647, %v2578
        %vm2613 = vcmp.eq.f32.partialorder %v2612, 8.507059e+37
        %v2614 = vand.u32 %v2578, 2147483648
        %v2615 = vor.u32 1.1754944e-38, %v2614
        %v2616 = vsel %vm2613, %v2615, %v2611
        %v2617 = vmul.f32 %v2566, %v2616
        %v2618 = vrcp.pop %v2581
        %v2619 = vmul.f32 %v2581, %v2618
        %v2620 = vsub.f32 1.0, %v2619
        %v2621 = vmul.f32 %v2618, %v2620
        %v2622 = vadd.f32 %v2618, %v2621
        %vm2623 = vweird.f32 %v2581
        %vm2624 = vweird.f32 %v2618
        %vm2625 = vmor %vm2623, %vm2624
        %v2626 = vsel %vm2625, %v2618, %v2622
        %v2627 = vand.u32 2147483647, %v2581
        %vm2628 = vcmp.eq.f32.partialorder %v2627, 8.507059e+37
        %v2629 = vand.u32 %v2581, 2147483648
        %v2630 = vor.u32 1.1754944e-38, %v2629
        %v2631 = vsel %vm2628, %v2630, %v2626
        %v2632 = vmul.f32 %v2568, %v2631
        %v2633 = vrcp.pop %v2584
        %v2634 = vmul.f32 %v2584, %v2633
        %v2635 = vsub.f32 1.0, %v2634
        %v2636 = vmul.f32 %v2633, %v2635
        %v2637 = vadd.f32 %v2633, %v2636
        %vm2638 = vweird.f32 %v2584
        %vm2639 = vweird.f32 %v2633
        %vm2640 = vmor %vm2638, %vm2639
        %v2641 = vsel %vm2640, %v2633, %v2637
        %v2642 = vand.u32 2147483647, %v2584
        %vm2643 = vcmp.eq.f32.partialorder %v2642, 8.507059e+37
        %v2644 = vand.u32 %v2584, 2147483648
        %v2645 = vor.u32 1.1754944e-38, %v2644
        %v2646 = vsel %vm2643, %v2645, %v2641
        %v2647 = vmul.f32 %v2570, %v2646
        %v2648 = vrcp.pop %v2587
        %v2649 = vmul.f32 %v2587, %v2648
        %v2650 = vsub.f32 1.0, %v2649
        %v2651 = vmul.f32 %v2648, %v2650
        %v2652 = vadd.f32 %v2648, %v2651
        %vm2653 = vweird.f32 %v2587
        %vm2654 = vweird.f32 %v2648
        %vm2655 = vmor %vm2653, %vm2654
        %v2656 = vsel %vm2655, %v2648, %v2652
        %v2657 = vand.u32 2147483647, %v2587
        %vm2658 = vcmp.eq.f32.partialorder %v2657, 8.507059e+37
        %v2659 = vand.u32 %v2587, 2147483648
        %v2660 = vor.u32 1.1754944e-38, %v2659
        %v2661 = vsel %vm2658, %v2660, %v2656
        %v2662 = vmul.f32 %v2572, %v2661
        %v2663 = vpack.c.bf16 %v2602, %v2602
        %v2664 = vpack.c.bf16 %v2617, %v2617
        %v2665 = vpack.c.bf16 %v2632, %v2632
        %v2666 = vpack.c.bf16 %v2647, %v2647
        %v2667 = vpack.c.bf16 %v2662, %v2662
        %v2668 = vpack.c.bf16 %v2449, %v2449
        %v2669 = vpack.c.bf16 %v2451, %v2451
        %v2670 = vpack.c.bf16 %v2454, %v2454
        %v2671 = vpack.c.bf16 %v2456, %v2456
        %v2672 = vpack.c.bf16 %v2459, %v2459
        %v2673 = vpack.c.bf16 %v2461, %v2461
        %v2679 = vunpack.c.l.b16 %v2663
        %v2680 = vunpack.c.l.b16 %v2664
        %v2681 = vunpack.c.l.b16 %v2665
        %v2682 = vunpack.c.l.b16 %v2666
        %v2683 = vunpack.c.l.b16 %v2667
        %v2684 = vpack.c.b16 %v2680, %v2679
        %v2685 = vpack.c.b16 %v2682, %v2681
        %v2686 = vpack.c.b16 %v2683, %v2683
        %v2693 = vunpack.c.l.b16 %v2668
        %v2694 = vunpack.c.l.b16 %v2669
        %v2695 = vunpack.c.l.b16 %v2670
        %v2696 = vunpack.c.l.b16 %v2671
        %v2697 = vunpack.c.l.b16 %v2672
        %v2698 = vunpack.c.l.b16 %v2673
        %v2699 = vpack.c.b16 %v2694, %v2693
        %v2700 = vpack.c.b16 %v2696, %v2695
        %v2701 = vpack.c.b16 %v2698, %v2697
        %v2706 = vsel %vm536, %v2684, 0
        %v2709 = vsel %vm536, %v2685, 0
        %v2712 = vsel %vm536, %v2686, 0
        %2714 = vmatpush.bf16.msra.mxu0 0
        %2715 = vmatpush.bf16.msra.mxu0 0
        %2716 = vmatpush.bf16.msra.mxu0 0
        %2717 = vmatpush.bf16.msra.mxu0 0
        %2718 = vmatpush.bf16.msra.mxu0 0
        %2719 = vmatpush.bf16.msra.mxu0 %v2701
        %2720 = vmatpush.bf16.msra.mxu0 %v2700
        %2721 = vmatpush.bf16.msra.mxu0 %v2699
        %2722 = vmatmul.bf16.gmra.mxu0 %v2706
        %v2723 = vpop.f32.mrf.mxu0
        %v2724 = vadd.f32 0.0, %v2723
        %v2725 = vpop.f32.mrf.mxu0
        %v2726 = vadd.f32 0.0, %v2725
        %2727 = vmatmul.bf16.gmra.mxu0 %v2709
        %v2728 = vpop.f32.mrf.mxu0
        %v2729 = vadd.f32 0.0, %v2728
        %v2730 = vpop.f32.mrf.mxu0
        %v2731 = vadd.f32 0.0, %v2730
        %2732 = vmatmul.bf16.gmra.mxu0 %v2712
        %v2733 = vpop.f32.mrf.mxu0
        %v2734 = vadd.f32 0.0, %v2733
        %v2735 = vpop.f32.mrf.mxu0
        %2736 = vdwg.mxu0
        %s2737 = scalar_lea.vmem %s4, 16
        %v2738 = vld [vmem:[%s2737] sm:$0xf]
        %v2739 = vpack.c.bf16 %v2724, %v2724
        %v2740 = vpack.c.bf16 %v2726, %v2726
        %v2741 = vpack.c.bf16 %v2729, %v2729
        %v2742 = vpack.c.bf16 %v2731, %v2731
        %v2743 = vpack.c.bf16 %v2734, %v2734
        %v2749 = vunpack.c.l.b16 %v2739
        %v2750 = vunpack.c.l.b16 %v2740
        %v2751 = vunpack.c.l.b16 %v2741
        %v2752 = vunpack.c.l.b16 %v2742
        %v2753 = vunpack.c.l.b16 %v2743
        %v2754 = vpack.c.b16 %v2750, %v2749
        %v2755 = vpack.c.b16 %v2752, %v2751
        %v2756 = vpack.c.b16 %v2753, %v2753
        %v2758 = vsel %vm494, %v2754, 0
        %v2761 = vsel %vm494, %v2755, 0
        %v2764 = vsel %vm494, %v2756, 0
        %v2767 = vsel %vm1210, %v2738, 0
        %2769 = vmatpush.bf16.msra.mxu0 0
        %2770 = vmatpush.bf16.msra.mxu0 0
        %2771 = vmatpush.bf16.msra.mxu0 0
        %2772 = vmatpush.bf16.msra.mxu0 0
        %2773 = vmatpush.bf16.msra.mxu0 0
        %2774 = vmatpush.bf16.msra.mxu0 0
        %2775 = vmatpush.bf16.msra.mxu0 0
        %2776 = vmatpush.bf16.msra.mxu0 %v2767
        %2777 = vmatmul.bf16.gmra.mxu0 %v2758
        %v2778 = vpop.f32.mrf.mxu0
        %v2779 = vadd.f32 0.0, %v2778
        %v2780 = vpop.f32.mrf.mxu0
        %v2781 = vadd.f32 0.0, %v2780
        %2782 = vmatmul.bf16.gmra.mxu0 %v2761
        %v2783 = vpop.f32.mrf.mxu0
        %v2784 = vadd.f32 0.0, %v2783
        %v2785 = vpop.f32.mrf.mxu0
        %v2786 = vadd.f32 0.0, %v2785
        %2787 = vmatmul.bf16.gmra.mxu0 %v2764
        %v2788 = vpop.f32.mrf.mxu0
        %v2789 = vadd.f32 0.0, %v2788
        %v2790 = vpop.f32.mrf.mxu0
        %2791 = vdwg.mxu0
        %v2792 = vadd.f32 %v2288, %v2779
        %v2793 = vadd.f32 %v2289, %v2781
        %v2794 = vadd.f32 %v2290, %v2784
        %v2795 = vadd.f32 %v2291, %v2786
        %v2796 = vadd.f32 %v2292, %v2789
        %s2797 = scalar_lea.vmem %s1, 160
        %v2798 = vld [vmem:[%s2797] sm:$0xf]
        %v2799 = vld [vmem:[%s2797 + $0x4] sm:$0xf]
        %v2800 = vld [vmem:[%s2797 + $0x8] sm:$0xf]
        %v2801 = vld [vmem:[%s2797 + $0xc] sm:$0xf]
        %v2802 = vld [vmem:[%s2797 + $0x10] sm:$0xf]
        %v2803 = vld [vmem:[%s2797 + $0x14] sm:$0xf]
        %v2804 = vld [vmem:[%s2797 + $0x18] sm:$0xf]
        %v2805 = vld [vmem:[%s2797 + $0x1c] sm:$0xf]
        %v2814 = vunpack.c.l.b16 %v2798
        %v2815 = vunpack.c.l.b16 %v2799
        %v2816 = vunpack.c.l.b16 %v2800
        %v2817 = vunpack.c.l.b16 %v2801
        %v2818 = vunpack.c.l.b16 %v2802
        %v2819 = vunpack.c.l.b16 %v2803
        %v2820 = vunpack.c.l.b16 %v2804
        %v2821 = vunpack.c.l.b16 %v2805
        %v2822 = vpack.c.b16 %v2815, %v2814
        %v2823 = vpack.c.b16 %v2817, %v2816
        %v2824 = vpack.c.b16 %v2819, %v2818
        %v2825 = vpack.c.b16 %v2821, %v2820
        %2830 = vmatpush.bf16.msra.mxu0 0
        %2831 = vmatpush.bf16.msra.mxu0 0
        %2832 = vmatpush.bf16.msra.mxu0 0
        %2833 = vmatpush.bf16.msra.mxu0 0
        %2834 = vmatpush.bf16.msra.mxu0 %v2825
        %2835 = vmatpush.bf16.msra.mxu0 %v2824
        %2836 = vmatpush.bf16.msra.mxu0 %v2823
        %2837 = vmatpush.bf16.msra.mxu0 %v2822
        %2838 = vmatmul.bf16.gmra.mxu0 %v312
        %v2839 = vpop.f32.mrf.mxu0
        %v2840 = vadd.f32 0.0, %v2839
        %v2841 = vpop.f32.mrf.mxu0
        %v2842 = vadd.f32 0.0, %v2841
        %2843 = vmatmul.bf16.gmra.mxu0 %v315
        %v2844 = vpop.f32.mrf.mxu0
        %v2845 = vadd.f32 0.0, %v2844
        %v2846 = vpop.f32.mrf.mxu0
        %v2847 = vadd.f32 0.0, %v2846
        %2848 = vmatmul.bf16.gmra.mxu0 %v318
        %v2849 = vpop.f32.mrf.mxu0
        %v2850 = vadd.f32 0.0, %v2849
        %v2851 = vpop.f32.mrf.mxu0
        %2852 = vdwg.mxu0
        %s2853 = scalar_lea.vmem %s2, 160
        %v2854 = vld [vmem:[%s2853] sm:$0xf]
        %v2855 = vld [vmem:[%s2853 + $0x4] sm:$0xf]
        %v2856 = vld [vmem:[%s2853 + $0x8] sm:$0xf]
        %v2857 = vld [vmem:[%s2853 + $0xc] sm:$0xf]
        %v2858 = vld [vmem:[%s2853 + $0x10] sm:$0xf]
        %v2859 = vld [vmem:[%s2853 + $0x14] sm:$0xf]
        %v2860 = vld [vmem:[%s2853 + $0x18] sm:$0xf]
        %v2861 = vld [vmem:[%s2853 + $0x1c] sm:$0xf]
        %v2870 = vunpack.c.l.b16 %v2854
        %v2871 = vunpack.c.l.b16 %v2855
        %v2872 = vunpack.c.l.b16 %v2856
        %v2873 = vunpack.c.l.b16 %v2857
        %v2874 = vunpack.c.l.b16 %v2858
        %v2875 = vunpack.c.l.b16 %v2859
        %v2876 = vunpack.c.l.b16 %v2860
        %v2877 = vunpack.c.l.b16 %v2861
        %v2878 = vpack.c.b16 %v2871, %v2870
        %v2879 = vpack.c.b16 %v2873, %v2872
        %v2880 = vpack.c.b16 %v2875, %v2874
        %v2881 = vpack.c.b16 %v2877, %v2876
        %2886 = vmatpush.bf16.msra.mxu0 0
        %2887 = vmatpush.bf16.msra.mxu0 0
        %2888 = vmatpush.bf16.msra.mxu0 0
        %2889 = vmatpush.bf16.msra.mxu0 0
        %2890 = vmatpush.bf16.msra.mxu0 %v2881
        %2891 = vmatpush.bf16.msra.mxu0 %v2880
        %2892 = vmatpush.bf16.msra.mxu0 %v2879
        %2893 = vmatpush.bf16.msra.mxu0 %v2878
        %2894 = vmatmul.bf16.gmra.mxu0 %v312
        %v2895 = vpop.f32.mrf.mxu0
        %v2896 = vadd.f32 0.0, %v2895
        %v2897 = vpop.f32.mrf.mxu0
        %v2898 = vadd.f32 0.0, %v2897
        %2899 = vmatmul.bf16.gmra.mxu0 %v315
        %v2900 = vpop.f32.mrf.mxu0
        %v2901 = vadd.f32 0.0, %v2900
        %v2902 = vpop.f32.mrf.mxu0
        %v2903 = vadd.f32 0.0, %v2902
        %2904 = vmatmul.bf16.gmra.mxu0 %v318
        %v2905 = vpop.f32.mrf.mxu0
        %v2906 = vadd.f32 0.0, %v2905
        %v2907 = vpop.f32.mrf.mxu0
        %v2908 = vadd.f32 0.0, %v2907
        %2909 = vdwg.mxu0
        %s2910 = scalar_lea.vmem %s3, 160
        %v2911 = vld [vmem:[%s2910] sm:$0xf]
        %v2912 = vld [vmem:[%s2910 + $0x4] sm:$0xf]
        %v2913 = vld [vmem:[%s2910 + $0x8] sm:$0xf]
        %v2914 = vld [vmem:[%s2910 + $0xc] sm:$0xf]
        %v2915 = vld [vmem:[%s2910 + $0x10] sm:$0xf]
        %v2916 = vld [vmem:[%s2910 + $0x14] sm:$0xf]
        %v2917 = vld [vmem:[%s2910 + $0x18] sm:$0xf]
        %v2918 = vld [vmem:[%s2910 + $0x1c] sm:$0xf]
        %v2927 = vunpack.c.l.b16 %v2911
        %v2928 = vunpack.c.l.b16 %v2912
        %v2929 = vunpack.c.l.b16 %v2913
        %v2930 = vunpack.c.l.b16 %v2914
        %v2931 = vunpack.c.l.b16 %v2915
        %v2932 = vunpack.c.l.b16 %v2916
        %v2933 = vunpack.c.l.b16 %v2917
        %v2934 = vunpack.c.l.b16 %v2918
        %v2935 = vpack.c.b16 %v2928, %v2927
        %v2936 = vpack.c.b16 %v2930, %v2929
        %v2937 = vpack.c.b16 %v2932, %v2931
        %v2938 = vpack.c.b16 %v2934, %v2933
        %2943 = vmatpush.bf16.msra.mxu0 0
        %2944 = vmatpush.bf16.msra.mxu0 0
        %2945 = vmatpush.bf16.msra.mxu0 0
        %2946 = vmatpush.bf16.msra.mxu0 0
        %2947 = vmatpush.bf16.msra.mxu0 %v2938
        %2948 = vmatpush.bf16.msra.mxu0 %v2937
        %2949 = vmatpush.bf16.msra.mxu0 %v2936
        %2950 = vmatpush.bf16.msra.mxu0 %v2935
        %2951 = vmatmul.bf16.gmra.mxu0 %v312
        %v2952 = vpop.f32.mrf.mxu0
        %v2953 = vadd.f32 0.0, %v2952
        %v2954 = vpop.f32.mrf.mxu0
        %v2955 = vadd.f32 0.0, %v2954
        %2956 = vmatmul.bf16.gmra.mxu0 %v315
        %v2957 = vpop.f32.mrf.mxu0
        %v2958 = vadd.f32 0.0, %v2957
        %v2959 = vpop.f32.mrf.mxu0
        %v2960 = vadd.f32 0.0, %v2959
        %2961 = vmatmul.bf16.gmra.mxu0 %v318
        %v2962 = vpop.f32.mrf.mxu0
        %v2963 = vadd.f32 0.0, %v2962
        %v2964 = vpop.f32.mrf.mxu0
        %v2965 = vadd.f32 0.0, %v2964
        %2966 = vdwg.mxu0
        %v2967 = vpack.c.bf16 %v2840, %v2840
        %v2968 = vpack.c.bf16 %v2842, %v2842
        %v2969 = vpack.c.bf16 %v2845, %v2845
        %v2970 = vpack.c.bf16 %v2847, %v2847
        %v2971 = vpack.c.bf16 %v2850, %v2850
        %v2972 = vpack.c.bf16 %v2896, %v2896
        %v2973 = vpack.c.bf16 %v2898, %v2898
        %v2974 = vpack.c.bf16 %v2901, %v2901
        %v2975 = vpack.c.bf16 %v2903, %v2903
        %v2976 = vpack.c.bf16 %v2906, %v2906
        %v2977 = vpack.c.bf16 %v2908, %v2908
        %v2983 = vunpack.c.l.b16 %v2967
        %v2984 = vunpack.c.l.b16 %v2968
        %v2985 = vunpack.c.l.b16 %v2969
        %v2986 = vunpack.c.l.b16 %v2970
        %v2987 = vunpack.c.l.b16 %v2971
        %v2988 = vpack.c.b16 %v2984, %v2983
        %v2989 = vpack.c.b16 %v2986, %v2985
        %v2990 = vpack.c.b16 %v2987, %v2987
        %v2997 = vunpack.c.l.b16 %v2972
        %v2998 = vunpack.c.l.b16 %v2973
        %v2999 = vunpack.c.l.b16 %v2974
        %v3000 = vunpack.c.l.b16 %v2975
        %v3001 = vunpack.c.l.b16 %v2976
        %v3002 = vunpack.c.l.b16 %v2977
        %v3003 = vpack.c.b16 %v2998, %v2997
        %v3004 = vpack.c.b16 %v3000, %v2999
        %v3005 = vpack.c.b16 %v3002, %v3001
        %v3007 = vsel %vm494, %v2988, 0
        %v3010 = vsel %vm494, %v2989, 0
        %v3013 = vsel %vm494, %v2990, 0
        %v3016 = vsel %vm494, %v3003, 0
        %v3019 = vsel %vm494, %v3004, 0
        %v3022 = vsel %vm494, %v3005, 0
        %3024 = vmatpush.bf16.xpose.msra.mxu0 0
        %3025 = vmatpush.bf16.xpose.msra.mxu0 0
        %3026 = vmatpush.bf16.xpose.msra.mxu0 0
        %3027 = vmatpush.bf16.xpose.msra.mxu0 0
        %3028 = vmatpush.bf16.xpose.msra.mxu0 0
        %3029 = vmatpush.bf16.xpose.msra.mxu0 %v3022
        %3030 = vmatpush.bf16.xpose.msra.mxu0 %v3019
        %3031 = vmatpush.bf16.xpose.msra.mxu0 %v3016
        %3032 = vmatmul.bf16.gmra.mxu0 %v3007
        %v3033 = vpop.f32.mrf.mxu0
        %v3034 = vadd.f32 0.0, %v3033
        %v3035 = vpop.f32.mrf.mxu0
        %v3036 = vadd.f32 0.0, %v3035
        %3037 = vmatmul.bf16.gmra.mxu0 %v3010
        %v3038 = vpop.f32.mrf.mxu0
        %v3039 = vadd.f32 0.0, %v3038
        %v3040 = vpop.f32.mrf.mxu0
        %v3041 = vadd.f32 0.0, %v3040
        %3042 = vmatmul.bf16.gmra.mxu0 %v3013
        %v3043 = vpop.f32.mrf.mxu0
        %v3044 = vadd.f32 0.0, %v3043
        %v3045 = vpop.f32.mrf.mxu0
        %3046 = vdwg.mxu0
        %v3047 = vsel %vm536, %v3034, -inf
        %3048 = vmax.xlane.f32.xlu0 %v3047
        %v3049 = vpop.xlane.xlu0 %3048
        %v3050 = vsel %vm536, %v3036, -inf
        %3051 = vmax.xlane.f32.xlu0 %v3050
        %v3052 = vpop.xlane.xlu0 %3051
        %v3053 = vsel %vm536, %v3039, -inf
        %3054 = vmax.xlane.f32.xlu0 %v3053
        %v3055 = vpop.xlane.xlu0 %3054
        %v3056 = vsel %vm536, %v3041, -inf
        %3057 = vmax.xlane.f32.xlu0 %v3056
        %v3058 = vpop.xlane.xlu0 %3057
        %v3059 = vsel %vm536, %v3044, -inf
        %3060 = vmax.xlane.f32.xlu0 %v3059
        %v3061 = vpop.xlane.xlu0 %3060
        %v3062 = vsub.f32 %v3034, %v3049
        %v3063 = vsub.f32 %v3036, %v3052
        %v3064 = vsub.f32 %v3039, %v3055
        %v3065 = vsub.f32 %v3041, %v3058
        %v3066 = vsub.f32 %v3044, %v3061
        %v3067 = vmul.f32 %v3062, 1.442695
        %v3068 = vpow.pop %v3067
        %v3069 = vmul.f32 %v3063, 1.442695
        %v3070 = vpow.pop %v3069
        %v3071 = vmul.f32 %v3064, 1.442695
        %v3072 = vpow.pop %v3071
        %v3073 = vmul.f32 %v3065, 1.442695
        %v3074 = vpow.pop %v3073
        %v3075 = vmul.f32 %v3066, 1.442695
        %v3076 = vpow.pop %v3075
        %v3077 = vsel %vm536, %v3068, 0.0
        %3078 = vadd.xlane.f32.xlu0 %v3077
        %v3079 = vpop.xlane.xlu0 %3078
        %v3080 = vsel %vm536, %v3070, 0.0
        %3081 = vadd.xlane.f32.xlu0 %v3080
        %v3082 = vpop.xlane.xlu0 %3081
        %v3083 = vsel %vm536, %v3072, 0.0
        %3084 = vadd.xlane.f32.xlu0 %v3083
        %v3085 = vpop.xlane.xlu0 %3084
        %v3086 = vsel %vm536, %v3074, 0.0
        %3087 = vadd.xlane.f32.xlu0 %v3086
        %v3088 = vpop.xlane.xlu0 %3087
        %v3089 = vsel %vm536, %v3076, 0.0
        %3090 = vadd.xlane.f32.xlu0 %v3089
        %v3091 = vpop.xlane.xlu0 %3090
        %v3092 = vrcp.pop %v3079
        %v3093 = vmul.f32 %v3079, %v3092
        %v3094 = vsub.f32 1.0, %v3093
        %v3095 = vmul.f32 %v3092, %v3094
        %v3096 = vadd.f32 %v3092, %v3095
        %vm3097 = vweird.f32 %v3079
        %vm3098 = vweird.f32 %v3092
        %vm3099 = vmor %vm3097, %vm3098
        %v3100 = vsel %vm3099, %v3092, %v3096
        %v3101 = vand.u32 2147483647, %v3079
        %vm3102 = vcmp.eq.f32.partialorder %v3101, 8.507059e+37
        %v3103 = vand.u32 %v3079, 2147483648
        %v3104 = vor.u32 1.1754944e-38, %v3103
        %v3105 = vsel %vm3102, %v3104, %v3100
        %v3106 = vmul.f32 %v3068, %v3105
        %v3107 = vrcp.pop %v3082
        %v3108 = vmul.f32 %v3082, %v3107
        %v3109 = vsub.f32 1.0, %v3108
        %v3110 = vmul.f32 %v3107, %v3109
        %v3111 = vadd.f32 %v3107, %v3110
        %vm3112 = vweird.f32 %v3082
        %vm3113 = vweird.f32 %v3107
        %vm3114 = vmor %vm3112, %vm3113
        %v3115 = vsel %vm3114, %v3107, %v3111
        %v3116 = vand.u32 2147483647, %v3082
        %vm3117 = vcmp.eq.f32.partialorder %v3116, 8.507059e+37
        %v3118 = vand.u32 %v3082, 2147483648
        %v3119 = vor.u32 1.1754944e-38, %v3118
        %v3120 = vsel %vm3117, %v3119, %v3115
        %v3121 = vmul.f32 %v3070, %v3120
        %v3122 = vrcp.pop %v3085
        %v3123 = vmul.f32 %v3085, %v3122
        %v3124 = vsub.f32 1.0, %v3123
        %v3125 = vmul.f32 %v3122, %v3124
        %v3126 = vadd.f32 %v3122, %v3125
        %vm3127 = vweird.f32 %v3085
        %vm3128 = vweird.f32 %v3122
        %vm3129 = vmor %vm3127, %vm3128
        %v3130 = vsel %vm3129, %v3122, %v3126
        %v3131 = vand.u32 2147483647, %v3085
        %vm3132 = vcmp.eq.f32.partialorder %v3131, 8.507059e+37
        %v3133 = vand.u32 %v3085, 2147483648
        %v3134 = vor.u32 1.1754944e-38, %v3133
        %v3135 = vsel %vm3132, %v3134, %v3130
        %v3136 = vmul.f32 %v3072, %v3135
        %v3137 = vrcp.pop %v3088
        %v3138 = vmul.f32 %v3088, %v3137
        %v3139 = vsub.f32 1.0, %v3138
        %v3140 = vmul.f32 %v3137, %v3139
        %v3141 = vadd.f32 %v3137, %v3140
        %vm3142 = vweird.f32 %v3088
        %vm3143 = vweird.f32 %v3137
        %vm3144 = vmor %vm3142, %vm3143
        %v3145 = vsel %vm3144, %v3137, %v3141
        %v3146 = vand.u32 2147483647, %v3088
        %vm3147 = vcmp.eq.f32.partialorder %v3146, 8.507059e+37
        %v3148 = vand.u32 %v3088, 2147483648
        %v3149 = vor.u32 1.1754944e-38, %v3148
        %v3150 = vsel %vm3147, %v3149, %v3145
        %v3151 = vmul.f32 %v3074, %v3150
        %v3152 = vrcp.pop %v3091
        %v3153 = vmul.f32 %v3091, %v3152
        %v3154 = vsub.f32 1.0, %v3153
        %v3155 = vmul.f32 %v3152, %v3154
        %v3156 = vadd.f32 %v3152, %v3155
        %vm3157 = vweird.f32 %v3091
        %vm3158 = vweird.f32 %v3152
        %vm3159 = vmor %vm3157, %vm3158
        %v3160 = vsel %vm3159, %v3152, %v3156
        %v3161 = vand.u32 2147483647, %v3091
        %vm3162 = vcmp.eq.f32.partialorder %v3161, 8.507059e+37
        %v3163 = vand.u32 %v3091, 2147483648
        %v3164 = vor.u32 1.1754944e-38, %v3163
        %v3165 = vsel %vm3162, %v3164, %v3160
        %v3166 = vmul.f32 %v3076, %v3165
        %v3167 = vpack.c.bf16 %v3106, %v3106
        %v3168 = vpack.c.bf16 %v3121, %v3121
        %v3169 = vpack.c.bf16 %v3136, %v3136
        %v3170 = vpack.c.bf16 %v3151, %v3151
        %v3171 = vpack.c.bf16 %v3166, %v3166
        %v3172 = vpack.c.bf16 %v2953, %v2953
        %v3173 = vpack.c.bf16 %v2955, %v2955
        %v3174 = vpack.c.bf16 %v2958, %v2958
        %v3175 = vpack.c.bf16 %v2960, %v2960
        %v3176 = vpack.c.bf16 %v2963, %v2963
        %v3177 = vpack.c.bf16 %v2965, %v2965
        %v3183 = vunpack.c.l.b16 %v3167
        %v3184 = vunpack.c.l.b16 %v3168
        %v3185 = vunpack.c.l.b16 %v3169
        %v3186 = vunpack.c.l.b16 %v3170
        %v3187 = vunpack.c.l.b16 %v3171
        %v3188 = vpack.c.b16 %v3184, %v3183
        %v3189 = vpack.c.b16 %v3186, %v3185
        %v3190 = vpack.c.b16 %v3187, %v3187
        %v3197 = vunpack.c.l.b16 %v3172
        %v3198 = vunpack.c.l.b16 %v3173
        %v3199 = vunpack.c.l.b16 %v3174
        %v3200 = vunpack.c.l.b16 %v3175
        %v3201 = vunpack.c.l.b16 %v3176
        %v3202 = vunpack.c.l.b16 %v3177
        %v3203 = vpack.c.b16 %v3198, %v3197
        %v3204 = vpack.c.b16 %v3200, %v3199
        %v3205 = vpack.c.b16 %v3202, %v3201
        %v3210 = vsel %vm536, %v3188, 0
        %v3213 = vsel %vm536, %v3189, 0
        %v3216 = vsel %vm536, %v3190, 0
        %3218 = vmatpush.bf16.msra.mxu0 0
        %3219 = vmatpush.bf16.msra.mxu0 0
        %3220 = vmatpush.bf16.msra.mxu0 0
        %3221 = vmatpush.bf16.msra.mxu0 0
        %3222 = vmatpush.bf16.msra.mxu0 0
        %3223 = vmatpush.bf16.msra.mxu0 %v3205
        %3224 = vmatpush.bf16.msra.mxu0 %v3204
        %3225 = vmatpush.bf16.msra.mxu0 %v3203
        %3226 = vmatmul.bf16.gmra.mxu0 %v3210
        %v3227 = vpop.f32.mrf.mxu0
        %v3228 = vadd.f32 0.0, %v3227
        %v3229 = vpop.f32.mrf.mxu0
        %v3230 = vadd.f32 0.0, %v3229
        %3231 = vmatmul.bf16.gmra.mxu0 %v3213
        %v3232 = vpop.f32.mrf.mxu0
        %v3233 = vadd.f32 0.0, %v3232
        %v3234 = vpop.f32.mrf.mxu0
        %v3235 = vadd.f32 0.0, %v3234
        %3236 = vmatmul.bf16.gmra.mxu0 %v3216
        %v3237 = vpop.f32.mrf.mxu0
        %v3238 = vadd.f32 0.0, %v3237
        %v3239 = vpop.f32.mrf.mxu0
        %3240 = vdwg.mxu0
        %s3241 = scalar_lea.vmem %s4, 20
        %v3242 = vld [vmem:[%s3241] sm:$0xf]
        %v3243 = vpack.c.bf16 %v3228, %v3228
        %v3244 = vpack.c.bf16 %v3230, %v3230
        %v3245 = vpack.c.bf16 %v3233, %v3233
        %v3246 = vpack.c.bf16 %v3235, %v3235
        %v3247 = vpack.c.bf16 %v3238, %v3238
        %v3253 = vunpack.c.l.b16 %v3243
        %v3254 = vunpack.c.l.b16 %v3244
        %v3255 = vunpack.c.l.b16 %v3245
        %v3256 = vunpack.c.l.b16 %v3246
        %v3257 = vunpack.c.l.b16 %v3247
        %v3258 = vpack.c.b16 %v3254, %v3253
        %v3259 = vpack.c.b16 %v3256, %v3255
        %v3260 = vpack.c.b16 %v3257, %v3257
        %v3262 = vsel %vm494, %v3258, 0
        %v3265 = vsel %vm494, %v3259, 0
        %v3268 = vsel %vm494, %v3260, 0
        %v3271 = vsel %vm1210, %v3242, 0
        %3273 = vmatpush.bf16.msra.mxu0 0
        %3274 = vmatpush.bf16.msra.mxu0 0
        %3275 = vmatpush.bf16.msra.mxu0 0
        %3276 = vmatpush.bf16.msra.mxu0 0
        %3277 = vmatpush.bf16.msra.mxu0 0
        %3278 = vmatpush.bf16.msra.mxu0 0
        %3279 = vmatpush.bf16.msra.mxu0 0
        %3280 = vmatpush.bf16.msra.mxu0 %v3271
        %3281 = vmatmul.bf16.gmra.mxu0 %v3262
        %v3282 = vpop.f32.mrf.mxu0
        %v3283 = vadd.f32 0.0, %v3282
        %v3284 = vpop.f32.mrf.mxu0
        %v3285 = vadd.f32 0.0, %v3284
        %3286 = vmatmul.bf16.gmra.mxu0 %v3265
        %v3287 = vpop.f32.mrf.mxu0
        %v3288 = vadd.f32 0.0, %v3287
        %v3289 = vpop.f32.mrf.mxu0
        %v3290 = vadd.f32 0.0, %v3289
        %3291 = vmatmul.bf16.gmra.mxu0 %v3268
        %v3292 = vpop.f32.mrf.mxu0
        %v3293 = vadd.f32 0.0, %v3292
        %v3294 = vpop.f32.mrf.mxu0
        %3295 = vdwg.mxu0
        %v3296 = vadd.f32 %v2792, %v3283
        %v3297 = vadd.f32 %v2793, %v3285
        %v3298 = vadd.f32 %v2794, %v3288
        %v3299 = vadd.f32 %v2795, %v3290
        %v3300 = vadd.f32 %v2796, %v3293
        %s3301 = scalar_lea.vmem %s1, 192
        %v3302 = vld [vmem:[%s3301] sm:$0xf]
        %v3303 = vld [vmem:[%s3301 + $0x4] sm:$0xf]
        %v3304 = vld [vmem:[%s3301 + $0x8] sm:$0xf]
        %v3305 = vld [vmem:[%s3301 + $0xc] sm:$0xf]
        %v3306 = vld [vmem:[%s3301 + $0x10] sm:$0xf]
        %v3307 = vld [vmem:[%s3301 + $0x14] sm:$0xf]
        %v3308 = vld [vmem:[%s3301 + $0x18] sm:$0xf]
        %v3309 = vld [vmem:[%s3301 + $0x1c] sm:$0xf]
        %v3318 = vunpack.c.l.b16 %v3302
        %v3319 = vunpack.c.l.b16 %v3303
        %v3320 = vunpack.c.l.b16 %v3304
        %v3321 = vunpack.c.l.b16 %v3305
        %v3322 = vunpack.c.l.b16 %v3306
        %v3323 = vunpack.c.l.b16 %v3307
        %v3324 = vunpack.c.l.b16 %v3308
        %v3325 = vunpack.c.l.b16 %v3309
        %v3326 = vpack.c.b16 %v3319, %v3318
        %v3327 = vpack.c.b16 %v3321, %v3320
        %v3328 = vpack.c.b16 %v3323, %v3322
        %v3329 = vpack.c.b16 %v3325, %v3324
        %3334 = vmatpush.bf16.msra.mxu0 0
        %3335 = vmatpush.bf16.msra.mxu0 0
        %3336 = vmatpush.bf16.msra.mxu0 0
        %3337 = vmatpush.bf16.msra.mxu0 0
        %3338 = vmatpush.bf16.msra.mxu0 %v3329
        %3339 = vmatpush.bf16.msra.mxu0 %v3328
        %3340 = vmatpush.bf16.msra.mxu0 %v3327
        %3341 = vmatpush.bf16.msra.mxu0 %v3326
        %3342 = vmatmul.bf16.gmra.mxu0 %v312
        %v3343 = vpop.f32.mrf.mxu0
        %v3344 = vadd.f32 0.0, %v3343
        %v3345 = vpop.f32.mrf.mxu0
        %v3346 = vadd.f32 0.0, %v3345
        %3347 = vmatmul.bf16.gmra.mxu0 %v315
        %v3348 = vpop.f32.mrf.mxu0
        %v3349 = vadd.f32 0.0, %v3348
        %v3350 = vpop.f32.mrf.mxu0
        %v3351 = vadd.f32 0.0, %v3350
        %3352 = vmatmul.bf16.gmra.mxu0 %v318
        %v3353 = vpop.f32.mrf.mxu0
        %v3354 = vadd.f32 0.0, %v3353
        %v3355 = vpop.f32.mrf.mxu0
        %3356 = vdwg.mxu0
        %s3357 = scalar_lea.vmem %s2, 192
        %v3358 = vld [vmem:[%s3357] sm:$0xf]
        %v3359 = vld [vmem:[%s3357 + $0x4] sm:$0xf]
        %v3360 = vld [vmem:[%s3357 + $0x8] sm:$0xf]
        %v3361 = vld [vmem:[%s3357 + $0xc] sm:$0xf]
        %v3362 = vld [vmem:[%s3357 + $0x10] sm:$0xf]
        %v3363 = vld [vmem:[%s3357 + $0x14] sm:$0xf]
        %v3364 = vld [vmem:[%s3357 + $0x18] sm:$0xf]
        %v3365 = vld [vmem:[%s3357 + $0x1c] sm:$0xf]
        %v3374 = vunpack.c.l.b16 %v3358
        %v3375 = vunpack.c.l.b16 %v3359
        %v3376 = vunpack.c.l.b16 %v3360
        %v3377 = vunpack.c.l.b16 %v3361
        %v3378 = vunpack.c.l.b16 %v3362
        %v3379 = vunpack.c.l.b16 %v3363
        %v3380 = vunpack.c.l.b16 %v3364
        %v3381 = vunpack.c.l.b16 %v3365
        %v3382 = vpack.c.b16 %v3375, %v3374
        %v3383 = vpack.c.b16 %v3377, %v3376
        %v3384 = vpack.c.b16 %v3379, %v3378
        %v3385 = vpack.c.b16 %v3381, %v3380
        %3390 = vmatpush.bf16.msra.mxu0 0
        %3391 = vmatpush.bf16.msra.mxu0 0
        %3392 = vmatpush.bf16.msra.mxu0 0
        %3393 = vmatpush.bf16.msra.mxu0 0
        %3394 = vmatpush.bf16.msra.mxu0 %v3385
        %3395 = vmatpush.bf16.msra.mxu0 %v3384
        %3396 = vmatpush.bf16.msra.mxu0 %v3383
        %3397 = vmatpush.bf16.msra.mxu0 %v3382
        %3398 = vmatmul.bf16.gmra.mxu0 %v312
        %v3399 = vpop.f32.mrf.mxu0
        %v3400 = vadd.f32 0.0, %v3399
        %v3401 = vpop.f32.mrf.mxu0
        %v3402 = vadd.f32 0.0, %v3401
        %3403 = vmatmul.bf16.gmra.mxu0 %v315
        %v3404 = vpop.f32.mrf.mxu0
        %v3405 = vadd.f32 0.0, %v3404
        %v3406 = vpop.f32.mrf.mxu0
        %v3407 = vadd.f32 0.0, %v3406
        %3408 = vmatmul.bf16.gmra.mxu0 %v318
        %v3409 = vpop.f32.mrf.mxu0
        %v3410 = vadd.f32 0.0, %v3409
        %v3411 = vpop.f32.mrf.mxu0
        %v3412 = vadd.f32 0.0, %v3411
        %3413 = vdwg.mxu0
        %s3414 = scalar_lea.vmem %s3, 192
        %v3415 = vld [vmem:[%s3414] sm:$0xf]
        %v3416 = vld [vmem:[%s3414 + $0x4] sm:$0xf]
        %v3417 = vld [vmem:[%s3414 + $0x8] sm:$0xf]
        %v3418 = vld [vmem:[%s3414 + $0xc] sm:$0xf]
        %v3419 = vld [vmem:[%s3414 + $0x10] sm:$0xf]
        %v3420 = vld [vmem:[%s3414 + $0x14] sm:$0xf]
        %v3421 = vld [vmem:[%s3414 + $0x18] sm:$0xf]
        %v3422 = vld [vmem:[%s3414 + $0x1c] sm:$0xf]
        %v3431 = vunpack.c.l.b16 %v3415
        %v3432 = vunpack.c.l.b16 %v3416
        %v3433 = vunpack.c.l.b16 %v3417
        %v3434 = vunpack.c.l.b16 %v3418
        %v3435 = vunpack.c.l.b16 %v3419
        %v3436 = vunpack.c.l.b16 %v3420
        %v3437 = vunpack.c.l.b16 %v3421
        %v3438 = vunpack.c.l.b16 %v3422
        %v3439 = vpack.c.b16 %v3432, %v3431
        %v3440 = vpack.c.b16 %v3434, %v3433
        %v3441 = vpack.c.b16 %v3436, %v3435
        %v3442 = vpack.c.b16 %v3438, %v3437
        %3447 = vmatpush.bf16.msra.mxu0 0
        %3448 = vmatpush.bf16.msra.mxu0 0
        %3449 = vmatpush.bf16.msra.mxu0 0
        %3450 = vmatpush.bf16.msra.mxu0 0
        %3451 = vmatpush.bf16.msra.mxu0 %v3442
        %3452 = vmatpush.bf16.msra.mxu0 %v3441
        %3453 = vmatpush.bf16.msra.mxu0 %v3440
        %3454 = vmatpush.bf16.msra.mxu0 %v3439
        %3455 = vmatmul.bf16.gmra.mxu0 %v312
        %v3456 = vpop.f32.mrf.mxu0
        %v3457 = vadd.f32 0.0, %v3456
        %v3458 = vpop.f32.mrf.mxu0
        %v3459 = vadd.f32 0.0, %v3458
        %3460 = vmatmul.bf16.gmra.mxu0 %v315
        %v3461 = vpop.f32.mrf.mxu0
        %v3462 = vadd.f32 0.0, %v3461
        %v3463 = vpop.f32.mrf.mxu0
        %v3464 = vadd.f32 0.0, %v3463
        %3465 = vmatmul.bf16.gmra.mxu0 %v318
        %v3466 = vpop.f32.mrf.mxu0
        %v3467 = vadd.f32 0.0, %v3466
        %v3468 = vpop.f32.mrf.mxu0
        %v3469 = vadd.f32 0.0, %v3468
        %3470 = vdwg.mxu0
        %v3471 = vpack.c.bf16 %v3344, %v3344
        %v3472 = vpack.c.bf16 %v3346, %v3346
        %v3473 = vpack.c.bf16 %v3349, %v3349
        %v3474 = vpack.c.bf16 %v3351, %v3351
        %v3475 = vpack.c.bf16 %v3354, %v3354
        %v3476 = vpack.c.bf16 %v3400, %v3400
        %v3477 = vpack.c.bf16 %v3402, %v3402
        %v3478 = vpack.c.bf16 %v3405, %v3405
        %v3479 = vpack.c.bf16 %v3407, %v3407
        %v3480 = vpack.c.bf16 %v3410, %v3410
        %v3481 = vpack.c.bf16 %v3412, %v3412
        %v3487 = vunpack.c.l.b16 %v3471
        %v3488 = vunpack.c.l.b16 %v3472
        %v3489 = vunpack.c.l.b16 %v3473
        %v3490 = vunpack.c.l.b16 %v3474
        %v3491 = vunpack.c.l.b16 %v3475
        %v3492 = vpack.c.b16 %v3488, %v3487
        %v3493 = vpack.c.b16 %v3490, %v3489
        %v3494 = vpack.c.b16 %v3491, %v3491
        %v3501 = vunpack.c.l.b16 %v3476
        %v3502 = vunpack.c.l.b16 %v3477
        %v3503 = vunpack.c.l.b16 %v3478
        %v3504 = vunpack.c.l.b16 %v3479
        %v3505 = vunpack.c.l.b16 %v3480
        %v3506 = vunpack.c.l.b16 %v3481
        %v3507 = vpack.c.b16 %v3502, %v3501
        %v3508 = vpack.c.b16 %v3504, %v3503
        %v3509 = vpack.c.b16 %v3506, %v3505
        %v3511 = vsel %vm494, %v3492, 0
        %v3514 = vsel %vm494, %v3493, 0
        %v3517 = vsel %vm494, %v3494, 0
        %v3520 = vsel %vm494, %v3507, 0
        %v3523 = vsel %vm494, %v3508, 0
        %v3526 = vsel %vm494, %v3509, 0
        %3528 = vmatpush.bf16.xpose.msra.mxu0 0
        %3529 = vmatpush.bf16.xpose.msra.mxu0 0
        %3530 = vmatpush.bf16.xpose.msra.mxu0 0
        %3531 = vmatpush.bf16.xpose.msra.mxu0 0
        %3532 = vmatpush.bf16.xpose.msra.mxu0 0
        %3533 = vmatpush.bf16.xpose.msra.mxu0 %v3526
        %3534 = vmatpush.bf16.xpose.msra.mxu0 %v3523
        %3535 = vmatpush.bf16.xpose.msra.mxu0 %v3520
        %3536 = vmatmul.bf16.gmra.mxu0 %v3511
        %v3537 = vpop.f32.mrf.mxu0
        %v3538 = vadd.f32 0.0, %v3537
        %v3539 = vpop.f32.mrf.mxu0
        %v3540 = vadd.f32 0.0, %v3539
        %3541 = vmatmul.bf16.gmra.mxu0 %v3514
        %v3542 = vpop.f32.mrf.mxu0
        %v3543 = vadd.f32 0.0, %v3542
        %v3544 = vpop.f32.mrf.mxu0
        %v3545 = vadd.f32 0.0, %v3544
        %3546 = vmatmul.bf16.gmra.mxu0 %v3517
        %v3547 = vpop.f32.mrf.mxu0
        %v3548 = vadd.f32 0.0, %v3547
        %v3549 = vpop.f32.mrf.mxu0
        %3550 = vdwg.mxu0
        %v3551 = vsel %vm536, %v3538, -inf
        %3552 = vmax.xlane.f32.xlu0 %v3551
        %v3553 = vpop.xlane.xlu0 %3552
        %v3554 = vsel %vm536, %v3540, -inf
        %3555 = vmax.xlane.f32.xlu0 %v3554
        %v3556 = vpop.xlane.xlu0 %3555
        %v3557 = vsel %vm536, %v3543, -inf
        %3558 = vmax.xlane.f32.xlu0 %v3557
        %v3559 = vpop.xlane.xlu0 %3558
        %v3560 = vsel %vm536, %v3545, -inf
        %3561 = vmax.xlane.f32.xlu0 %v3560
        %v3562 = vpop.xlane.xlu0 %3561
        %v3563 = vsel %vm536, %v3548, -inf
        %3564 = vmax.xlane.f32.xlu0 %v3563
        %v3565 = vpop.xlane.xlu0 %3564
        %v3566 = vsub.f32 %v3538, %v3553
        %v3567 = vsub.f32 %v3540, %v3556
        %v3568 = vsub.f32 %v3543, %v3559
        %v3569 = vsub.f32 %v3545, %v3562
        %v3570 = vsub.f32 %v3548, %v3565
        %v3571 = vmul.f32 %v3566, 1.442695
        %v3572 = vpow.pop %v3571
        %v3573 = vmul.f32 %v3567, 1.442695
        %v3574 = vpow.pop %v3573
        %v3575 = vmul.f32 %v3568, 1.442695
        %v3576 = vpow.pop %v3575
        %v3577 = vmul.f32 %v3569, 1.442695
        %v3578 = vpow.pop %v3577
        %v3579 = vmul.f32 %v3570, 1.442695
        %v3580 = vpow.pop %v3579
        %v3581 = vsel %vm536, %v3572, 0.0
        %3582 = vadd.xlane.f32.xlu0 %v3581
        %v3583 = vpop.xlane.xlu0 %3582
        %v3584 = vsel %vm536, %v3574, 0.0
        %3585 = vadd.xlane.f32.xlu0 %v3584
        %v3586 = vpop.xlane.xlu0 %3585
        %v3587 = vsel %vm536, %v3576, 0.0
        %3588 = vadd.xlane.f32.xlu0 %v3587
        %v3589 = vpop.xlane.xlu0 %3588
        %v3590 = vsel %vm536, %v3578, 0.0
        %3591 = vadd.xlane.f32.xlu0 %v3590
        %v3592 = vpop.xlane.xlu0 %3591
        %v3593 = vsel %vm536, %v3580, 0.0
        %3594 = vadd.xlane.f32.xlu0 %v3593
        %v3595 = vpop.xlane.xlu0 %3594
        %v3596 = vrcp.pop %v3583
        %v3597 = vmul.f32 %v3583, %v3596
        %v3598 = vsub.f32 1.0, %v3597
        %v3599 = vmul.f32 %v3596, %v3598
        %v3600 = vadd.f32 %v3596, %v3599
        %vm3601 = vweird.f32 %v3583
        %vm3602 = vweird.f32 %v3596
        %vm3603 = vmor %vm3601, %vm3602
        %v3604 = vsel %vm3603, %v3596, %v3600
        %v3605 = vand.u32 2147483647, %v3583
        %vm3606 = vcmp.eq.f32.partialorder %v3605, 8.507059e+37
        %v3607 = vand.u32 %v3583, 2147483648
        %v3608 = vor.u32 1.1754944e-38, %v3607
        %v3609 = vsel %vm3606, %v3608, %v3604
        %v3610 = vmul.f32 %v3572, %v3609
        %v3611 = vrcp.pop %v3586
        %v3612 = vmul.f32 %v3586, %v3611
        %v3613 = vsub.f32 1.0, %v3612
        %v3614 = vmul.f32 %v3611, %v3613
        %v3615 = vadd.f32 %v3611, %v3614
        %vm3616 = vweird.f32 %v3586
        %vm3617 = vweird.f32 %v3611
        %vm3618 = vmor %vm3616, %vm3617
        %v3619 = vsel %vm3618, %v3611, %v3615
        %v3620 = vand.u32 2147483647, %v3586
        %vm3621 = vcmp.eq.f32.partialorder %v3620, 8.507059e+37
        %v3622 = vand.u32 %v3586, 2147483648
        %v3623 = vor.u32 1.1754944e-38, %v3622
        %v3624 = vsel %vm3621, %v3623, %v3619
        %v3625 = vmul.f32 %v3574, %v3624
        %v3626 = vrcp.pop %v3589
        %v3627 = vmul.f32 %v3589, %v3626
        %v3628 = vsub.f32 1.0, %v3627
        %v3629 = vmul.f32 %v3626, %v3628
        %v3630 = vadd.f32 %v3626, %v3629
        %vm3631 = vweird.f32 %v3589
        %vm3632 = vweird.f32 %v3626
        %vm3633 = vmor %vm3631, %vm3632
        %v3634 = vsel %vm3633, %v3626, %v3630
        %v3635 = vand.u32 2147483647, %v3589
        %vm3636 = vcmp.eq.f32.partialorder %v3635, 8.507059e+37
        %v3637 = vand.u32 %v3589, 2147483648
        %v3638 = vor.u32 1.1754944e-38, %v3637
        %v3639 = vsel %vm3636, %v3638, %v3634
        %v3640 = vmul.f32 %v3576, %v3639
        %v3641 = vrcp.pop %v3592
        %v3642 = vmul.f32 %v3592, %v3641
        %v3643 = vsub.f32 1.0, %v3642
        %v3644 = vmul.f32 %v3641, %v3643
        %v3645 = vadd.f32 %v3641, %v3644
        %vm3646 = vweird.f32 %v3592
        %vm3647 = vweird.f32 %v3641
        %vm3648 = vmor %vm3646, %vm3647
        %v3649 = vsel %vm3648, %v3641, %v3645
        %v3650 = vand.u32 2147483647, %v3592
        %vm3651 = vcmp.eq.f32.partialorder %v3650, 8.507059e+37
        %v3652 = vand.u32 %v3592, 2147483648
        %v3653 = vor.u32 1.1754944e-38, %v3652
        %v3654 = vsel %vm3651, %v3653, %v3649
        %v3655 = vmul.f32 %v3578, %v3654
        %v3656 = vrcp.pop %v3595
        %v3657 = vmul.f32 %v3595, %v3656
        %v3658 = vsub.f32 1.0, %v3657
        %v3659 = vmul.f32 %v3656, %v3658
        %v3660 = vadd.f32 %v3656, %v3659
        %vm3661 = vweird.f32 %v3595
        %vm3662 = vweird.f32 %v3656
        %vm3663 = vmor %vm3661, %vm3662
        %v3664 = vsel %vm3663, %v3656, %v3660
        %v3665 = vand.u32 2147483647, %v3595
        %vm3666 = vcmp.eq.f32.partialorder %v3665, 8.507059e+37
        %v3667 = vand.u32 %v3595, 2147483648
        %v3668 = vor.u32 1.1754944e-38, %v3667
        %v3669 = vsel %vm3666, %v3668, %v3664
        %v3670 = vmul.f32 %v3580, %v3669
        %v3671 = vpack.c.bf16 %v3610, %v3610
        %v3672 = vpack.c.bf16 %v3625, %v3625
        %v3673 = vpack.c.bf16 %v3640, %v3640
        %v3674 = vpack.c.bf16 %v3655, %v3655
        %v3675 = vpack.c.bf16 %v3670, %v3670
        %v3676 = vpack.c.bf16 %v3457, %v3457
        %v3677 = vpack.c.bf16 %v3459, %v3459
        %v3678 = vpack.c.bf16 %v3462, %v3462
        %v3679 = vpack.c.bf16 %v3464, %v3464
        %v3680 = vpack.c.bf16 %v3467, %v3467
        %v3681 = vpack.c.bf16 %v3469, %v3469
        %v3687 = vunpack.c.l.b16 %v3671
        %v3688 = vunpack.c.l.b16 %v3672
        %v3689 = vunpack.c.l.b16 %v3673
        %v3690 = vunpack.c.l.b16 %v3674
        %v3691 = vunpack.c.l.b16 %v3675
        %v3692 = vpack.c.b16 %v3688, %v3687
        %v3693 = vpack.c.b16 %v3690, %v3689
        %v3694 = vpack.c.b16 %v3691, %v3691
        %v3701 = vunpack.c.l.b16 %v3676
        %v3702 = vunpack.c.l.b16 %v3677
        %v3703 = vunpack.c.l.b16 %v3678
        %v3704 = vunpack.c.l.b16 %v3679
        %v3705 = vunpack.c.l.b16 %v3680
        %v3706 = vunpack.c.l.b16 %v3681
        %v3707 = vpack.c.b16 %v3702, %v3701
        %v3708 = vpack.c.b16 %v3704, %v3703
        %v3709 = vpack.c.b16 %v3706, %v3705
        %v3714 = vsel %vm536, %v3692, 0
        %v3717 = vsel %vm536, %v3693, 0
        %v3720 = vsel %vm536, %v3694, 0
        %3722 = vmatpush.bf16.msra.mxu0 0
        %3723 = vmatpush.bf16.msra.mxu0 0
        %3724 = vmatpush.bf16.msra.mxu0 0
        %3725 = vmatpush.bf16.msra.mxu0 0
        %3726 = vmatpush.bf16.msra.mxu0 0
        %3727 = vmatpush.bf16.msra.mxu0 %v3709
        %3728 = vmatpush.bf16.msra.mxu0 %v3708
        %3729 = vmatpush.bf16.msra.mxu0 %v3707
        %3730 = vmatmul.bf16.gmra.mxu0 %v3714
        %v3731 = vpop.f32.mrf.mxu0
        %v3732 = vadd.f32 0.0, %v3731
        %v3733 = vpop.f32.mrf.mxu0
        %v3734 = vadd.f32 0.0, %v3733
        %3735 = vmatmul.bf16.gmra.mxu0 %v3717
        %v3736 = vpop.f32.mrf.mxu0
        %v3737 = vadd.f32 0.0, %v3736
        %v3738 = vpop.f32.mrf.mxu0
        %v3739 = vadd.f32 0.0, %v3738
        %3740 = vmatmul.bf16.gmra.mxu0 %v3720
        %v3741 = vpop.f32.mrf.mxu0
        %v3742 = vadd.f32 0.0, %v3741
        %v3743 = vpop.f32.mrf.mxu0
        %3744 = vdwg.mxu0
        %s3745 = scalar_lea.vmem %s4, 24
        %v3746 = vld [vmem:[%s3745] sm:$0xf]
        %v3747 = vpack.c.bf16 %v3732, %v3732
        %v3748 = vpack.c.bf16 %v3734, %v3734
        %v3749 = vpack.c.bf16 %v3737, %v3737
        %v3750 = vpack.c.bf16 %v3739, %v3739
        %v3751 = vpack.c.bf16 %v3742, %v3742
        %v3757 = vunpack.c.l.b16 %v3747
        %v3758 = vunpack.c.l.b16 %v3748
        %v3759 = vunpack.c.l.b16 %v3749
        %v3760 = vunpack.c.l.b16 %v3750
        %v3761 = vunpack.c.l.b16 %v3751
        %v3762 = vpack.c.b16 %v3758, %v3757
        %v3763 = vpack.c.b16 %v3760, %v3759
        %v3764 = vpack.c.b16 %v3761, %v3761
        %v3766 = vsel %vm494, %v3762, 0
        %v3769 = vsel %vm494, %v3763, 0
        %v3772 = vsel %vm494, %v3764, 0
        %v3775 = vsel %vm1210, %v3746, 0
        %3777 = vmatpush.bf16.msra.mxu0 0
        %3778 = vmatpush.bf16.msra.mxu0 0
        %3779 = vmatpush.bf16.msra.mxu0 0
        %3780 = vmatpush.bf16.msra.mxu0 0
        %3781 = vmatpush.bf16.msra.mxu0 0
        %3782 = vmatpush.bf16.msra.mxu0 0
        %3783 = vmatpush.bf16.msra.mxu0 0
        %3784 = vmatpush.bf16.msra.mxu0 %v3775
        %3785 = vmatmul.bf16.gmra.mxu0 %v3766
        %v3786 = vpop.f32.mrf.mxu0
        %v3787 = vadd.f32 0.0, %v3786
        %v3788 = vpop.f32.mrf.mxu0
        %v3789 = vadd.f32 0.0, %v3788
        %3790 = vmatmul.bf16.gmra.mxu0 %v3769
        %v3791 = vpop.f32.mrf.mxu0
        %v3792 = vadd.f32 0.0, %v3791
        %v3793 = vpop.f32.mrf.mxu0
        %v3794 = vadd.f32 0.0, %v3793
        %3795 = vmatmul.bf16.gmra.mxu0 %v3772
        %v3796 = vpop.f32.mrf.mxu0
        %v3797 = vadd.f32 0.0, %v3796
        %v3798 = vpop.f32.mrf.mxu0
        %3799 = vdwg.mxu0
        %v3800 = vadd.f32 %v3296, %v3787
        %v3801 = vadd.f32 %v3297, %v3789
        %v3802 = vadd.f32 %v3298, %v3792
        %v3803 = vadd.f32 %v3299, %v3794
        %v3804 = vadd.f32 %v3300, %v3797
        %s3805 = scalar_lea.vmem %s1, 224
        %v3806 = vld [vmem:[%s3805] sm:$0xf]
        %v3807 = vld [vmem:[%s3805 + $0x4] sm:$0xf]
        %v3808 = vld [vmem:[%s3805 + $0x8] sm:$0xf]
        %v3809 = vld [vmem:[%s3805 + $0xc] sm:$0xf]
        %v3810 = vld [vmem:[%s3805 + $0x10] sm:$0xf]
        %v3811 = vld [vmem:[%s3805 + $0x14] sm:$0xf]
        %v3812 = vld [vmem:[%s3805 + $0x18] sm:$0xf]
        %v3813 = vld [vmem:[%s3805 + $0x1c] sm:$0xf]
        %v3822 = vunpack.c.l.b16 %v3806
        %v3823 = vunpack.c.l.b16 %v3807
        %v3824 = vunpack.c.l.b16 %v3808
        %v3825 = vunpack.c.l.b16 %v3809
        %v3826 = vunpack.c.l.b16 %v3810
        %v3827 = vunpack.c.l.b16 %v3811
        %v3828 = vunpack.c.l.b16 %v3812
        %v3829 = vunpack.c.l.b16 %v3813
        %v3830 = vpack.c.b16 %v3823, %v3822
        %v3831 = vpack.c.b16 %v3825, %v3824
        %v3832 = vpack.c.b16 %v3827, %v3826
        %v3833 = vpack.c.b16 %v3829, %v3828
        %3838 = vmatpush.bf16.msra.mxu0 0
        %3839 = vmatpush.bf16.msra.mxu0 0
        %3840 = vmatpush.bf16.msra.mxu0 0
        %3841 = vmatpush.bf16.msra.mxu0 0
        %3842 = vmatpush.bf16.msra.mxu0 %v3833
        %3843 = vmatpush.bf16.msra.mxu0 %v3832
        %3844 = vmatpush.bf16.msra.mxu0 %v3831
        %3845 = vmatpush.bf16.msra.mxu0 %v3830
        %3846 = vmatmul.bf16.gmra.mxu0 %v312
        %v3847 = vpop.f32.mrf.mxu0
        %v3848 = vadd.f32 0.0, %v3847
        %v3849 = vpop.f32.mrf.mxu0
        %v3850 = vadd.f32 0.0, %v3849
        %3851 = vmatmul.bf16.gmra.mxu0 %v315
        %v3852 = vpop.f32.mrf.mxu0
        %v3853 = vadd.f32 0.0, %v3852
        %v3854 = vpop.f32.mrf.mxu0
        %v3855 = vadd.f32 0.0, %v3854
        %3856 = vmatmul.bf16.gmra.mxu0 %v318
        %v3857 = vpop.f32.mrf.mxu0
        %v3858 = vadd.f32 0.0, %v3857
        %v3859 = vpop.f32.mrf.mxu0
        %3860 = vdwg.mxu0
        %s3861 = scalar_lea.vmem %s2, 224
        %v3862 = vld [vmem:[%s3861] sm:$0xf]
        %v3863 = vld [vmem:[%s3861 + $0x4] sm:$0xf]
        %v3864 = vld [vmem:[%s3861 + $0x8] sm:$0xf]
        %v3865 = vld [vmem:[%s3861 + $0xc] sm:$0xf]
        %v3866 = vld [vmem:[%s3861 + $0x10] sm:$0xf]
        %v3867 = vld [vmem:[%s3861 + $0x14] sm:$0xf]
        %v3868 = vld [vmem:[%s3861 + $0x18] sm:$0xf]
        %v3869 = vld [vmem:[%s3861 + $0x1c] sm:$0xf]
        %v3878 = vunpack.c.l.b16 %v3862
        %v3879 = vunpack.c.l.b16 %v3863
        %v3880 = vunpack.c.l.b16 %v3864
        %v3881 = vunpack.c.l.b16 %v3865
        %v3882 = vunpack.c.l.b16 %v3866
        %v3883 = vunpack.c.l.b16 %v3867
        %v3884 = vunpack.c.l.b16 %v3868
        %v3885 = vunpack.c.l.b16 %v3869
        %v3886 = vpack.c.b16 %v3879, %v3878
        %v3887 = vpack.c.b16 %v3881, %v3880
        %v3888 = vpack.c.b16 %v3883, %v3882
        %v3889 = vpack.c.b16 %v3885, %v3884
        %3894 = vmatpush.bf16.msra.mxu0 0
        %3895 = vmatpush.bf16.msra.mxu0 0
        %3896 = vmatpush.bf16.msra.mxu0 0
        %3897 = vmatpush.bf16.msra.mxu0 0
        %3898 = vmatpush.bf16.msra.mxu0 %v3889
        %3899 = vmatpush.bf16.msra.mxu0 %v3888
        %3900 = vmatpush.bf16.msra.mxu0 %v3887
        %3901 = vmatpush.bf16.msra.mxu0 %v3886
        %3902 = vmatmul.bf16.gmra.mxu0 %v312
        %v3903 = vpop.f32.mrf.mxu0
        %v3904 = vadd.f32 0.0, %v3903
        %v3905 = vpop.f32.mrf.mxu0
        %v3906 = vadd.f32 0.0, %v3905
        %3907 = vmatmul.bf16.gmra.mxu0 %v315
        %v3908 = vpop.f32.mrf.mxu0
        %v3909 = vadd.f32 0.0, %v3908
        %v3910 = vpop.f32.mrf.mxu0
        %v3911 = vadd.f32 0.0, %v3910
        %3912 = vmatmul.bf16.gmra.mxu0 %v318
        %v3913 = vpop.f32.mrf.mxu0
        %v3914 = vadd.f32 0.0, %v3913
        %v3915 = vpop.f32.mrf.mxu0
        %v3916 = vadd.f32 0.0, %v3915
        %3917 = vdwg.mxu0
        %s3918 = scalar_lea.vmem %s3, 224
        %v3919 = vld [vmem:[%s3918] sm:$0xf]
        %v3920 = vld [vmem:[%s3918 + $0x4] sm:$0xf]
        %v3921 = vld [vmem:[%s3918 + $0x8] sm:$0xf]
        %v3922 = vld [vmem:[%s3918 + $0xc] sm:$0xf]
        %v3923 = vld [vmem:[%s3918 + $0x10] sm:$0xf]
        %v3924 = vld [vmem:[%s3918 + $0x14] sm:$0xf]
        %v3925 = vld [vmem:[%s3918 + $0x18] sm:$0xf]
        %v3926 = vld [vmem:[%s3918 + $0x1c] sm:$0xf]
        %v3935 = vunpack.c.l.b16 %v3919
        %v3936 = vunpack.c.l.b16 %v3920
        %v3937 = vunpack.c.l.b16 %v3921
        %v3938 = vunpack.c.l.b16 %v3922
        %v3939 = vunpack.c.l.b16 %v3923
        %v3940 = vunpack.c.l.b16 %v3924
        %v3941 = vunpack.c.l.b16 %v3925
        %v3942 = vunpack.c.l.b16 %v3926
        %v3943 = vpack.c.b16 %v3936, %v3935
        %v3944 = vpack.c.b16 %v3938, %v3937
        %v3945 = vpack.c.b16 %v3940, %v3939
        %v3946 = vpack.c.b16 %v3942, %v3941
        %3951 = vmatpush.bf16.msra.mxu0 0
        %3952 = vmatpush.bf16.msra.mxu0 0
        %3953 = vmatpush.bf16.msra.mxu0 0
        %3954 = vmatpush.bf16.msra.mxu0 0
        %3955 = vmatpush.bf16.msra.mxu0 %v3946
        %3956 = vmatpush.bf16.msra.mxu0 %v3945
        %3957 = vmatpush.bf16.msra.mxu0 %v3944
        %3958 = vmatpush.bf16.msra.mxu0 %v3943
        %3959 = vmatmul.bf16.gmra.mxu0 %v312
        %v3960 = vpop.f32.mrf.mxu0
        %v3961 = vadd.f32 0.0, %v3960
        %v3962 = vpop.f32.mrf.mxu0
        %v3963 = vadd.f32 0.0, %v3962
        %3964 = vmatmul.bf16.gmra.mxu0 %v315
        %v3965 = vpop.f32.mrf.mxu0
        %v3966 = vadd.f32 0.0, %v3965
        %v3967 = vpop.f32.mrf.mxu0
        %v3968 = vadd.f32 0.0, %v3967
        %3969 = vmatmul.bf16.gmra.mxu0 %v318
        %v3970 = vpop.f32.mrf.mxu0
        %v3971 = vadd.f32 0.0, %v3970
        %v3972 = vpop.f32.mrf.mxu0
        %v3973 = vadd.f32 0.0, %v3972
        %3974 = vdwg.mxu0
        %v3975 = vpack.c.bf16 %v3848, %v3848
        %v3976 = vpack.c.bf16 %v3850, %v3850
        %v3977 = vpack.c.bf16 %v3853, %v3853
        %v3978 = vpack.c.bf16 %v3855, %v3855
        %v3979 = vpack.c.bf16 %v3858, %v3858
        %v3980 = vpack.c.bf16 %v3904, %v3904
        %v3981 = vpack.c.bf16 %v3906, %v3906
        %v3982 = vpack.c.bf16 %v3909, %v3909
        %v3983 = vpack.c.bf16 %v3911, %v3911
        %v3984 = vpack.c.bf16 %v3914, %v3914
        %v3985 = vpack.c.bf16 %v3916, %v3916
        %v3991 = vunpack.c.l.b16 %v3975
        %v3992 = vunpack.c.l.b16 %v3976
        %v3993 = vunpack.c.l.b16 %v3977
        %v3994 = vunpack.c.l.b16 %v3978
        %v3995 = vunpack.c.l.b16 %v3979
        %v3996 = vpack.c.b16 %v3992, %v3991
        %v3997 = vpack.c.b16 %v3994, %v3993
        %v3998 = vpack.c.b16 %v3995, %v3995
        %v4005 = vunpack.c.l.b16 %v3980
        %v4006 = vunpack.c.l.b16 %v3981
        %v4007 = vunpack.c.l.b16 %v3982
        %v4008 = vunpack.c.l.b16 %v3983
        %v4009 = vunpack.c.l.b16 %v3984
        %v4010 = vunpack.c.l.b16 %v3985
        %v4011 = vpack.c.b16 %v4006, %v4005
        %v4012 = vpack.c.b16 %v4008, %v4007
        %v4013 = vpack.c.b16 %v4010, %v4009
        %v4015 = vsel %vm494, %v3996, 0
        %v4018 = vsel %vm494, %v3997, 0
        %v4021 = vsel %vm494, %v3998, 0
        %v4024 = vsel %vm494, %v4011, 0
        %v4027 = vsel %vm494, %v4012, 0
        %v4030 = vsel %vm494, %v4013, 0
        %4032 = vmatpush.bf16.xpose.msra.mxu0 0
        %4033 = vmatpush.bf16.xpose.msra.mxu0 0
        %4034 = vmatpush.bf16.xpose.msra.mxu0 0
        %4035 = vmatpush.bf16.xpose.msra.mxu0 0
        %4036 = vmatpush.bf16.xpose.msra.mxu0 0
        %4037 = vmatpush.bf16.xpose.msra.mxu0 %v4030
        %4038 = vmatpush.bf16.xpose.msra.mxu0 %v4027
        %4039 = vmatpush.bf16.xpose.msra.mxu0 %v4024
        %4040 = vmatmul.bf16.gmra.mxu0 %v4015
        %v4041 = vpop.f32.mrf.mxu0
        %v4042 = vadd.f32 0.0, %v4041
        %v4043 = vpop.f32.mrf.mxu0
        %v4044 = vadd.f32 0.0, %v4043
        %4045 = vmatmul.bf16.gmra.mxu0 %v4018
        %v4046 = vpop.f32.mrf.mxu0
        %v4047 = vadd.f32 0.0, %v4046
        %v4048 = vpop.f32.mrf.mxu0
        %v4049 = vadd.f32 0.0, %v4048
        %4050 = vmatmul.bf16.gmra.mxu0 %v4021
        %v4051 = vpop.f32.mrf.mxu0
        %v4052 = vadd.f32 0.0, %v4051
        %v4053 = vpop.f32.mrf.mxu0
        %4054 = vdwg.mxu0
        %v4055 = vsel %vm536, %v4042, -inf
        %4056 = vmax.xlane.f32.xlu0 %v4055
        %v4057 = vpop.xlane.xlu0 %4056
        %v4058 = vsel %vm536, %v4044, -inf
        %4059 = vmax.xlane.f32.xlu0 %v4058
        %v4060 = vpop.xlane.xlu0 %4059
        %v4061 = vsel %vm536, %v4047, -inf
        %4062 = vmax.xlane.f32.xlu0 %v4061
        %v4063 = vpop.xlane.xlu0 %4062
        %v4064 = vsel %vm536, %v4049, -inf
        %4065 = vmax.xlane.f32.xlu0 %v4064
        %v4066 = vpop.xlane.xlu0 %4065
        %v4067 = vsel %vm536, %v4052, -inf
        %4068 = vmax.xlane.f32.xlu0 %v4067
        %v4069 = vpop.xlane.xlu0 %4068
        %v4070 = vsub.f32 %v4042, %v4057
        %v4071 = vsub.f32 %v4044, %v4060
        %v4072 = vsub.f32 %v4047, %v4063
        %v4073 = vsub.f32 %v4049, %v4066
        %v4074 = vsub.f32 %v4052, %v4069
        %v4075 = vmul.f32 %v4070, 1.442695
        %v4076 = vpow.pop %v4075
        %v4077 = vmul.f32 %v4071, 1.442695
        %v4078 = vpow.pop %v4077
        %v4079 = vmul.f32 %v4072, 1.442695
        %v4080 = vpow.pop %v4079
        %v4081 = vmul.f32 %v4073, 1.442695
        %v4082 = vpow.pop %v4081
        %v4083 = vmul.f32 %v4074, 1.442695
        %v4084 = vpow.pop %v4083
        %v4085 = vsel %vm536, %v4076, 0.0
        %4086 = vadd.xlane.f32.xlu0 %v4085
        %v4087 = vpop.xlane.xlu0 %4086
        %v4088 = vsel %vm536, %v4078, 0.0
        %4089 = vadd.xlane.f32.xlu0 %v4088
        %v4090 = vpop.xlane.xlu0 %4089
        %v4091 = vsel %vm536, %v4080, 0.0
        %4092 = vadd.xlane.f32.xlu0 %v4091
        %v4093 = vpop.xlane.xlu0 %4092
        %v4094 = vsel %vm536, %v4082, 0.0
        %4095 = vadd.xlane.f32.xlu0 %v4094
        %v4096 = vpop.xlane.xlu0 %4095
        %v4097 = vsel %vm536, %v4084, 0.0
        %4098 = vadd.xlane.f32.xlu0 %v4097
        %v4099 = vpop.xlane.xlu0 %4098
        %v4100 = vrcp.pop %v4087
        %v4101 = vmul.f32 %v4087, %v4100
        %v4102 = vsub.f32 1.0, %v4101
        %v4103 = vmul.f32 %v4100, %v4102
        %v4104 = vadd.f32 %v4100, %v4103
        %vm4105 = vweird.f32 %v4087
        %vm4106 = vweird.f32 %v4100
        %vm4107 = vmor %vm4105, %vm4106
        %v4108 = vsel %vm4107, %v4100, %v4104
        %v4109 = vand.u32 2147483647, %v4087
        %vm4110 = vcmp.eq.f32.partialorder %v4109, 8.507059e+37
        %v4111 = vand.u32 %v4087, 2147483648
        %v4112 = vor.u32 1.1754944e-38, %v4111
        %v4113 = vsel %vm4110, %v4112, %v4108
        %v4114 = vmul.f32 %v4076, %v4113
        %v4115 = vrcp.pop %v4090
        %v4116 = vmul.f32 %v4090, %v4115
        %v4117 = vsub.f32 1.0, %v4116
        %v4118 = vmul.f32 %v4115, %v4117
        %v4119 = vadd.f32 %v4115, %v4118
        %vm4120 = vweird.f32 %v4090
        %vm4121 = vweird.f32 %v4115
        %vm4122 = vmor %vm4120, %vm4121
        %v4123 = vsel %vm4122, %v4115, %v4119
        %v4124 = vand.u32 2147483647, %v4090
        %vm4125 = vcmp.eq.f32.partialorder %v4124, 8.507059e+37
        %v4126 = vand.u32 %v4090, 2147483648
        %v4127 = vor.u32 1.1754944e-38, %v4126
        %v4128 = vsel %vm4125, %v4127, %v4123
        %v4129 = vmul.f32 %v4078, %v4128
        %v4130 = vrcp.pop %v4093
        %v4131 = vmul.f32 %v4093, %v4130
        %v4132 = vsub.f32 1.0, %v4131
        %v4133 = vmul.f32 %v4130, %v4132
        %v4134 = vadd.f32 %v4130, %v4133
        %vm4135 = vweird.f32 %v4093
        %vm4136 = vweird.f32 %v4130
        %vm4137 = vmor %vm4135, %vm4136
        %v4138 = vsel %vm4137, %v4130, %v4134
        %v4139 = vand.u32 2147483647, %v4093
        %vm4140 = vcmp.eq.f32.partialorder %v4139, 8.507059e+37
        %v4141 = vand.u32 %v4093, 2147483648
        %v4142 = vor.u32 1.1754944e-38, %v4141
        %v4143 = vsel %vm4140, %v4142, %v4138
        %v4144 = vmul.f32 %v4080, %v4143
        %v4145 = vrcp.pop %v4096
        %v4146 = vmul.f32 %v4096, %v4145
        %v4147 = vsub.f32 1.0, %v4146
        %v4148 = vmul.f32 %v4145, %v4147
        %v4149 = vadd.f32 %v4145, %v4148
        %vm4150 = vweird.f32 %v4096
        %vm4151 = vweird.f32 %v4145
        %vm4152 = vmor %vm4150, %vm4151
        %v4153 = vsel %vm4152, %v4145, %v4149
        %v4154 = vand.u32 2147483647, %v4096
        %vm4155 = vcmp.eq.f32.partialorder %v4154, 8.507059e+37
        %v4156 = vand.u32 %v4096, 2147483648
        %v4157 = vor.u32 1.1754944e-38, %v4156
        %v4158 = vsel %vm4155, %v4157, %v4153
        %v4159 = vmul.f32 %v4082, %v4158
        %v4160 = vrcp.pop %v4099
        %v4161 = vmul.f32 %v4099, %v4160
        %v4162 = vsub.f32 1.0, %v4161
        %v4163 = vmul.f32 %v4160, %v4162
        %v4164 = vadd.f32 %v4160, %v4163
        %vm4165 = vweird.f32 %v4099
        %vm4166 = vweird.f32 %v4160
        %vm4167 = vmor %vm4165, %vm4166
        %v4168 = vsel %vm4167, %v4160, %v4164
        %v4169 = vand.u32 2147483647, %v4099
        %vm4170 = vcmp.eq.f32.partialorder %v4169, 8.507059e+37
        %v4171 = vand.u32 %v4099, 2147483648
        %v4172 = vor.u32 1.1754944e-38, %v4171
        %v4173 = vsel %vm4170, %v4172, %v4168
        %v4174 = vmul.f32 %v4084, %v4173
        %v4175 = vpack.c.bf16 %v4114, %v4114
        %v4176 = vpack.c.bf16 %v4129, %v4129
        %v4177 = vpack.c.bf16 %v4144, %v4144
        %v4178 = vpack.c.bf16 %v4159, %v4159
        %v4179 = vpack.c.bf16 %v4174, %v4174
        %v4180 = vpack.c.bf16 %v3961, %v3961
        %v4181 = vpack.c.bf16 %v3963, %v3963
        %v4182 = vpack.c.bf16 %v3966, %v3966
        %v4183 = vpack.c.bf16 %v3968, %v3968
        %v4184 = vpack.c.bf16 %v3971, %v3971
        %v4185 = vpack.c.bf16 %v3973, %v3973
        %v4191 = vunpack.c.l.b16 %v4175
        %v4192 = vunpack.c.l.b16 %v4176
        %v4193 = vunpack.c.l.b16 %v4177
        %v4194 = vunpack.c.l.b16 %v4178
        %v4195 = vunpack.c.l.b16 %v4179
        %v4196 = vpack.c.b16 %v4192, %v4191
        %v4197 = vpack.c.b16 %v4194, %v4193
        %v4198 = vpack.c.b16 %v4195, %v4195
        %v4205 = vunpack.c.l.b16 %v4180
        %v4206 = vunpack.c.l.b16 %v4181
        %v4207 = vunpack.c.l.b16 %v4182
        %v4208 = vunpack.c.l.b16 %v4183
        %v4209 = vunpack.c.l.b16 %v4184
        %v4210 = vunpack.c.l.b16 %v4185
        %v4211 = vpack.c.b16 %v4206, %v4205
        %v4212 = vpack.c.b16 %v4208, %v4207
        %v4213 = vpack.c.b16 %v4210, %v4209
        %v4218 = vsel %vm536, %v4196, 0
        %v4221 = vsel %vm536, %v4197, 0
        %v4224 = vsel %vm536, %v4198, 0
        %4226 = vmatpush.bf16.msra.mxu0 0
        %4227 = vmatpush.bf16.msra.mxu0 0
        %4228 = vmatpush.bf16.msra.mxu0 0
        %4229 = vmatpush.bf16.msra.mxu0 0
        %4230 = vmatpush.bf16.msra.mxu0 0
        %4231 = vmatpush.bf16.msra.mxu0 %v4213
        %4232 = vmatpush.bf16.msra.mxu0 %v4212
        %4233 = vmatpush.bf16.msra.mxu0 %v4211
        %4234 = vmatmul.bf16.gmra.mxu0 %v4218
        %v4235 = vpop.f32.mrf.mxu0
        %v4236 = vadd.f32 0.0, %v4235
        %v4237 = vpop.f32.mrf.mxu0
        %v4238 = vadd.f32 0.0, %v4237
        %4239 = vmatmul.bf16.gmra.mxu0 %v4221
        %v4240 = vpop.f32.mrf.mxu0
        %v4241 = vadd.f32 0.0, %v4240
        %v4242 = vpop.f32.mrf.mxu0
        %v4243 = vadd.f32 0.0, %v4242
        %4244 = vmatmul.bf16.gmra.mxu0 %v4224
        %v4245 = vpop.f32.mrf.mxu0
        %v4246 = vadd.f32 0.0, %v4245
        %v4247 = vpop.f32.mrf.mxu0
        %4248 = vdwg.mxu0
        %s4249 = scalar_lea.vmem %s4, 28
        %v4250 = vld [vmem:[%s4249] sm:$0xf]
        %v4251 = vpack.c.bf16 %v4236, %v4236
        %v4252 = vpack.c.bf16 %v4238, %v4238
        %v4253 = vpack.c.bf16 %v4241, %v4241
        %v4254 = vpack.c.bf16 %v4243, %v4243
        %v4255 = vpack.c.bf16 %v4246, %v4246
        %v4261 = vunpack.c.l.b16 %v4251
        %v4262 = vunpack.c.l.b16 %v4252
        %v4263 = vunpack.c.l.b16 %v4253
        %v4264 = vunpack.c.l.b16 %v4254
        %v4265 = vunpack.c.l.b16 %v4255
        %v4266 = vpack.c.b16 %v4262, %v4261
        %v4267 = vpack.c.b16 %v4264, %v4263
        %v4268 = vpack.c.b16 %v4265, %v4265
        %v4270 = vsel %vm494, %v4266, 0
        %v4273 = vsel %vm494, %v4267, 0
        %v4276 = vsel %vm494, %v4268, 0
        %v4279 = vsel %vm1210, %v4250, 0
        %4281 = vmatpush.bf16.msra.mxu0 0
        %4282 = vmatpush.bf16.msra.mxu0 0
        %4283 = vmatpush.bf16.msra.mxu0 0
        %4284 = vmatpush.bf16.msra.mxu0 0
        %4285 = vmatpush.bf16.msra.mxu0 0
        %4286 = vmatpush.bf16.msra.mxu0 0
        %4287 = vmatpush.bf16.msra.mxu0 0
        %4288 = vmatpush.bf16.msra.mxu0 %v4279
        %4289 = vmatmul.bf16.gmra.mxu0 %v4270
        %v4290 = vpop.f32.mrf.mxu0
        %v4291 = vadd.f32 0.0, %v4290
        %v4292 = vpop.f32.mrf.mxu0
        %v4293 = vadd.f32 0.0, %v4292
        %4294 = vmatmul.bf16.gmra.mxu0 %v4273
        %v4295 = vpop.f32.mrf.mxu0
        %v4296 = vadd.f32 0.0, %v4295
        %v4297 = vpop.f32.mrf.mxu0
        %v4298 = vadd.f32 0.0, %v4297
        %4299 = vmatmul.bf16.gmra.mxu0 %v4276
        %v4300 = vpop.f32.mrf.mxu0
        %v4301 = vadd.f32 0.0, %v4300
        %v4302 = vpop.f32.mrf.mxu0
        %4303 = vdwg.mxu0
        %v4304 = vadd.f32 %v3800, %v4291
        %v4305 = vadd.f32 %v3801, %v4293
        %v4306 = vadd.f32 %v3802, %v4296
        %v4307 = vadd.f32 %v3803, %v4298
        %v4308 = vadd.f32 %v3804, %v4301
        %v4309 = vld [vmem:[%s5] sm:$0x1]
        %v4311 = vperm.slane %v4309, 0
        %v4313 = vadd.f32 %v4304, %v4311
        %v4314 = vadd.f32 %v4305, %v4311
        %v4315 = vadd.f32 %v4306, %v4311
        %v4316 = vadd.f32 %v4307, %v4311
        %v4317 = vadd.f32 %v4308, %v4311
        %4318 = vst.msk [vmem:[%s244] sm:$0xff] %vm310, %v4313
        %4319 = vst.msk [vmem:[%s244 + $0x8] sm:$0xff] %vm310, %v4314
        %4320 = vst.msk [vmem:[%s244 + $0x10] sm:$0xff] %vm310, %v4315
        %4321 = vst.msk [vmem:[%s244 + $0x18] sm:$0xff] %vm310, %v4316
        %4322 = vst.msk [vmem:[%s244 + $0x20] sm:$0xff] %vm310, %v4317
        %s4323 = sand.u32 %s159, 1
        %s4324 = scalar_lea.sflag [#allocation3], %s4323
        %s4325 = sand.u32 %s159, 1
        %s4326 = smul.addr %s4325, 40
        %s4327 = scalar_lea.vmem [#allocation2], %s4326
        // Predicated region
        $region45: #{tpu_custom_call.1} parent=43 // pred_check
          %p4328 = pneg %p169
        $region46: #{tpu_custom_call.1} parent=43 // pred_check_branch
          %4330 = sbr.rel (%p4328) target = $region48
        $region47: #{tpu_custom_call.1} parent=43 // pred_region
          %4332 = vsyncadd %s4324, 0
          %s4333 = smul.addr %s20, 5
          %s4334 = smul.addr %s4333, 8
          %s4335 = scalar_lea.hbm %s6, %s4334
          %s4336 = sshll.u32 %s4327, 4
          %s4337 = int_to_ptr.vmem [resolvable:$true] %s4336
          %s4338 = sshll.u32 %s4335, 4
          %s4339 = int_to_ptr.hbm [resolvable:$true] %s4338
          %4344 = dma.vmem_to_hbm [thread:$0]  %s4337, 640, %s4339, %s4324, 128, 128, 8
        $region48: #{tpu_custom_call.1} parent=43 // pred_fallthru
          _
      $region44: #{tpu_custom_call.1} parent=5 // pred_fallthru
        _
      %p4345 = scmp.le.s32.totalorder 2, %s15
      // Predicated region
      $region49: #{tpu_custom_call.1} parent=5 // pred_check
        %p4346 = pneg %p4345
      $region50: #{tpu_custom_call.1} parent=5 // pred_check_branch
        %4348 = sbr.rel (%p4346) target = $region52
      $region51: #{tpu_custom_call.1} parent=5 // pred_region
        %s4349 = ssub.s32 %s15, 2
        // Predicated region
        $region53: #{tpu_custom_call.1} parent=51 // pred_check
          %p4350 = pneg %p175
        $region54: #{tpu_custom_call.1} parent=51 // pred_check_branch
          %4352 = sbr.rel (%p4350) target = $region56
        $region55: #{tpu_custom_call.1} parent=51 // pred_region
          %s4353 = sand.u32 %s160, 1
          %s4354 = scalar_lea.sflag [#allocation3], %s4353
          %s4355 = sand.u32 %s160, 1
          %s4356 = smul.addr %s4355, 40
          %s4357 = scalar_lea.vmem [#allocation2], %s4356
          %4359 = dma.done %s4354, 640
        $region56: #{tpu_custom_call.1} parent=51 // pred_fallthru
          _
      $region52: #{tpu_custom_call.1} parent=5 // pred_fallthru
        _
    $region6: #{tpu_custom_call.1} parent=1 // loop_footer
      %s19 = sadd.s32 1, %s15
    $region7: #{tpu_custom_call.1} parent=1 // loop_footer_branch
      %14 = sbr.rel target = $region3
    $region8: #{tpu_custom_call.1} parent=1 // loop_exit
      _
    %4360 = vsyncpa [#allocation3], 1
    %s4361 = scalar_lea.sflag [#allocation3], 1
    %4362 = vsyncpa %s4361, 1

</llo_original>
